<compile_context>
chip_gen: v5e
topology: v5e:2x2
jax: 0.10.0
libtpu: 0.0.40
codegen_flags: <defaults>
</compile_context>

<pallas_src>
import functools

import jax
import jax.numpy as jnp
import numpy as np
from jax.experimental import pallas as pl
from jax.experimental.pallas import tpu as pltpu


def _round_up(x, m):
    return ((x + m - 1) // m) * m


def _vmem_limit_bytes():
    # ~3/4 of physical VMEM (96 MiB on v5e/v6e, 48 MiB on v7x), capped at 100 MiB.
    try:
        cap = pltpu.get_tpu_info().vmem_capacity_bytes
    except Exception:
        cap = 64 * 1024 * 1024
    return int(min(100 * 1024 * 1024, cap * 3 // 4))


def _double_conv_kernel(x_ref, m_ref, w1_ref, s1_ref, b1_ref,
                        w2_ref, s2_ref, b2_ref, o_ref, acc_ref, y1_ref, *, wp):
    """One (batch, row-tile) step of the fused DoubleConv.

    All activations use a flat row-major layout with padded row stride `wp`, so
    every 3x3 tap is a plain sublane-offset slice (offset ky*wp + kx): no
    per-tap reshape/relayout copies and the matmul M dim spans the whole tile.

      x_ref  : (1, 1, LIN, CI)  bf16  flat padded input tile (1 zero elem front)
      m_ref  : (1, L1, 1)       f32   validity mask for the conv1 output
                                      (zeros at conv2's zero-pad halo positions)
      w*_ref : (9, K, CO)       bf16  3x3 taps flattened on the leading axis
      s*/b*  : (1, CO)          f32   folded BatchNorm scale / bias
      o_ref  : (1, 1, L2, CO)   f32   flat conv2 output tile (junk pad columns
                                      sliced off by the wrapper)
      acc_ref: (L1, CO)         f32   shared MXU accumulator (both convs)
      y1_ref : (LS, CO)         bf16  staged intermediate (never leaves VMEM)
    """
    l1 = acc_ref.shape[0]           # (th+2)*wp   conv1 output rows (flat)
    l2 = o_ref.shape[2]             # th*wp       conv2 output rows (flat)
    co = o_ref.shape[3]
    ls = y1_ref.shape[0]

    # ---------------- conv1 (3x3, pad=1): 9 MXU matmuls ----------------
    for t in range(9):
        ky, kx = divmod(t, 3)
        off = ky * wp + kx
        patch = x_ref[0, 0, pl.ds(off, l1), :]                     # (L1, CI) bf16
        prod = jnp.dot(patch, w1_ref[t], preferred_element_type=jnp.float32)
        if t == 0:
            acc_ref[...] = prod
        else:
            acc_ref[...] += prod

    # Folded BN1 + ReLU in f32, zero conv2's halo positions, stage as bf16.
    # Dropout(0.5) is identity in eval mode.
    y1 = jnp.maximum(acc_ref[...] * s1_ref[...] + b1_ref[...], 0.0) * m_ref[0]
    y1_ref[pl.ds(0, l1), :] = y1.astype(y1_ref.dtype)
    # Deterministic zeros in the slack rows reached by the wrap-around tap reads.
    y1_ref[pl.ds(l1, ls - l1), :] = jnp.zeros((ls - l1, co), y1_ref.dtype)

    # ---------------- conv2 (3x3, pad=1): 9 MXU matmuls ----------------
    for t in range(9):
        ky, kx = divmod(t, 3)
        off = ky * wp + kx
        patch = y1_ref[pl.ds(off, l2), :]                          # (L2, CO) bf16
        prod = jnp.dot(patch, w2_ref[t], preferred_element_type=jnp.float32)
        if t == 0:
            acc_ref[pl.ds(0, l2), :] = prod
        else:
            acc_ref[pl.ds(0, l2), :] += prod

    # Folded BN2 + ReLU; Dropout(0.5) identity in eval mode.
    y2 = jnp.maximum(acc_ref[pl.ds(0, l2), :] * s2_ref[...] + b2_ref[...], 0.0)
    o_ref[0, 0, :, :] = y2.astype(o_ref.dtype)


def double_conv_forward(x_nchw, params, *, row_tile=None,
                        compute_dtype=jnp.bfloat16, interpret=False):
    """DoubleConv eval-mode forward. Input/output are NCHW (PyTorch layout)."""
    n, cin, h, w = x_nchw.shape
    cout = params["w1"].shape[-1]
    ci = _round_up(cin, 128)
    co = _round_up(cout, 128)
    # TODO(synk): for tiny channel counts (9*Cin <= 128) an im2col packing of the
    #             3x3 taps into K would cut conv1 MXU work ~9x.
    # TODO(synk): on v6e/v7x, tile/pad channels to 256 (256-wide MXU) when the
    #             real channel count is >= 256.

    th = min(h, 32) if row_tile is None else max(1, min(int(row_tile), h))
    n_tiles = pl.cdiv(h, th)
    h_pad = n_tiles * th
    wp = w + 2                       # padded row stride (1-col halo each side)
    l1 = (th + 2) * wp               # conv1 output rows per tile (flat)
    l2 = th * wp                     # conv2 output rows per tile (flat)
    ls = _round_up(l1 + 8, 8)        # intermediate scratch rows (+ slack)
    lin_core = (th + 4) * wp         # input rows per tile (flat)
    lin = _round_up(lin_core + 2, 8)

    # NCHW -> NHWC; bf16 activations/weights (f32 accumulation in-kernel).
    # TODO(synk): in a full UNet keep NHWC end-to-end to drop these transposes.
    x = jnp.transpose(x_nchw, (0, 2, 3, 1)).astype(compute_dtype)
    # 2-row / 1-col spatial halo for the two stacked 3x3 convs + lane pad to 128.
    x_p = jnp.pad(x, ((0, 0), (2, h_pad - h + 2), (1, 1), (0, ci - cin)))
    # Overlapping row tiles (4 halo rows each), flattened to (rows*wp, CI) with
    # one leading zero element so every tap offset ky*wp+kx is non-negative.
    win = jnp.arange(n_tiles)[:, None] * th + jnp.arange(th + 4)[None, :]
    x_t = x_p[:, win].reshape(n, n_tiles, lin_core, ci)
    x_t = jnp.pad(x_t, ((0, 0), (0, 0), (1, lin - lin_core - 1), (0, 0)))

    # Per-tile validity mask for the conv1 output: zeros exactly where conv2's
    # zero-padding lives (padded cols 0 / w+1, rows outside [0, h)).
    ry = jnp.arange(th + 2)
    g_row = jnp.arange(n_tiles)[:, None] * th - 1 + ry[None, :]     # (n_tiles, th+2)
    row_ok = (g_row >= 0) & (g_row < h)
    pcol = jnp.arange(wp)
    col_ok = (pcol >= 1) & (pcol <= w)
    mask = (row_ok[:, :, None] & col_ok[None, None, :]).reshape(n_tiles, l1, 1)
    mask = mask.astype(jnp.float32)

    # Weights as 9 flattened taps (bf16); folded BN scale/bias stay f32.
    w1 = jnp.pad(params["w1"].astype(compute_dtype),
                 ((0, 0), (0, 0), (0, ci - cin), (0, co - cout))).reshape(9, ci, co)
    w2 = jnp.pad(params["w2"].astype(compute_dtype),
                 ((0, 0), (0, 0), (0, co - cout), (0, co - cout))).reshape(9, co, co)
    s1 = jnp.pad(params["scale1"].astype(jnp.float32), (0, co - cout)).reshape(1, co)
    b1 = jnp.pad(params["bias1"].astype(jnp.float32), (0, co - cout)).reshape(1, co)
    s2 = jnp.pad(params["scale2"].astype(jnp.float32), (0, co - cout)).reshape(1, co)
    b2 = jnp.pad(params["bias2"].astype(jnp.float32), (0, co - cout)).reshape(1, co)

    kernel = functools.partial(_double_conv_kernel, wp=wp)

    out_flat = pl.pallas_call(
        kernel,
        out_shape=jax.ShapeDtypeStruct((n, n_tiles, l2, co), jnp.float32),
        grid=(n, n_tiles),
        in_specs=[
            pl.BlockSpec((1, 1, lin, ci), lambda b, t: (b, t, 0, 0)),
            pl.BlockSpec((1, l1, 1), lambda b, t: (t, 0, 0)),
            pl.BlockSpec((9, ci, co), lambda b, t: (0, 0, 0)),
            pl.BlockSpec((1, co), lambda b, t: (0, 0)),
            pl.BlockSpec((1, co), lambda b, t: (0, 0)),
            pl.BlockSpec((9, co, co), lambda b, t: (0, 0, 0)),
            pl.BlockSpec((1, co), lambda b, t: (0, 0)),
            pl.BlockSpec((1, co), lambda b, t: (0, 0)),
        ],
        out_specs=pl.BlockSpec((1, 1, l2, co), lambda b, t: (b, t, 0, 0)),
        scratch_shapes=[
            pltpu.VMEM((l1, co), jnp.float32),        # shared f32 accumulator
            pltpu.VMEM((ls, co), compute_dtype),      # staged intermediate (VMEM-only)
        ],
        compiler_params=pltpu.CompilerParams(
            dimension_semantics=("parallel", "parallel"),
            vmem_limit_bytes=_vmem_limit_bytes()),
        interpret=interpret,
    )(x_t, mask, w1, s1, b1, w2, s2, b2)

    # (n, n_tiles, th*wp, co) -> (n, h_pad, wp, co) -> drop junk cols / pad chans.
    out = out_flat.reshape(n, h_pad, wp, co)[:, :h, :w, :cout]
    return jnp.transpose(out, (0, 3, 1, 2))                     # NHWC -> NCHW


# ---------------- reference (plain JAX, f32) for verification ----------------
def _ref_conv_bn_relu(x_nhwc, w, scale, bias):
    y = jax.lax.conv_general_dilated(
        x_nhwc, w, window_strides=(1, 1), padding="SAME",
        dimension_numbers=("NHWC", "HWIO", "NHWC"))
    y = y * scale.reshape(1, 1, 1, -1) + bias.reshape(1, 1, 1, -1)
    return jnp.maximum(y, 0.0)


def _ref_double_conv(x_nchw, params):
    x = jnp.transpose(x_nchw, (0, 2, 3, 1))
    y = _ref_conv_bn_relu(x, params["w1"], params["scale1"], params["bias1"])
    y = _ref_conv_bn_relu(y, params["w2"], params["scale2"], params["bias2"])
    return jnp.transpose(y, (0, 3, 1, 2))


def _fold_bn(conv_bias, gamma, beta, running_mean, running_var, eps=1e-5):
    scale = gamma / jnp.sqrt(running_var + eps)
    bias = beta + (conv_bias - running_mean) * scale
    return scale, bias


if __name__ == "__main__":
    key = jax.random.PRNGKey(0)
    N, Cin, Cout, H, W = 2, 4, 8, 16, 16
    ks = jax.random.split(key, 13)

    x = jax.random.normal(ks[0], (N, Cin, H, W), jnp.float32)

    # Deterministic synthetic parameters (shapes per nn.Conv2d / nn.BatchNorm2d).
    w1 = 0.1 * jax.random.normal(ks[1], (3, 3, Cin, Cout), jnp.float32)
    b1 = 0.1 * jax.random.normal(ks[2], (Cout,), jnp.float32)
    g1 = 1.0 + 0.1 * jax.random.normal(ks[3], (Cout,), jnp.float32)
    be1 = 0.1 * jax.random.normal(ks[4], (Cout,), jnp.float32)
    m1 = 0.1 * jax.random.normal(ks[5], (Cout,), jnp.float32)
    v1 = jnp.abs(jax.random.normal(ks[6], (Cout,), jnp.float32)) + 0.5

    w2 = 0.1 * jax.random.normal(ks[7], (3, 3, Cout, Cout), jnp.float32)
    b2 = 0.1 * jax.random.normal(ks[8], (Cout,), jnp.float32)
    g2 = 1.0 + 0.1 * jax.random.normal(ks[9], (Cout,), jnp.float32)
    be2 = 0.1 * jax.random.normal(ks[10], (Cout,), jnp.float32)
    m2 = 0.1 * jax.random.normal(ks[11], (Cout,), jnp.float32)
    v2 = jnp.abs(jax.random.normal(ks[12], (Cout,), jnp.float32)) + 0.5

    scale1, bias1 = _fold_bn(b1, g1, be1, m1, v1)
    scale2, bias2 = _fold_bn(b2, g2, be2, m2, v2)

    params = dict(w1=w1, scale1=scale1, bias1=bias1,
                  w2=w2, scale2=scale2, bias2=bias2)

    # row_tile=8 -> 2 row tiles per image: exercises the inter-tile halo path.
    out = jax.block_until_ready(double_conv_forward(x, params, row_tile=8))
    ref = jax.block_until_ready(_ref_double_conv(x, params))

    assert out.shape == (N, Cout, H, W), out.shape
    # bf16 MXU inputs vs f32 reference -> loosened tolerance.
    np.testing.assert_allclose(np.asarray(out), np.asarray(ref),
                               rtol=5e-2, atol=5e-2)
    print("KERNEL_OK")
</pallas_src>

<mosaic_0001>
module attributes {stable_mosaic.version = 11 : i64} {
  func.func @_double_conv_kernel(%arg0: i32, %arg1: i32, %arg2: memref<1x1x224x128xbf16, #tpu.memory_space<vmem>>, %arg3: memref<1x180x1xf32, #tpu.memory_space<vmem>>, %arg4: memref<9x128x128xbf16, #tpu.memory_space<vmem>>, %arg5: memref<1x128xf32, #tpu.memory_space<vmem>>, %arg6: memref<1x128xf32, #tpu.memory_space<vmem>>, %arg7: memref<9x128x128xbf16, #tpu.memory_space<vmem>>, %arg8: memref<1x128xf32, #tpu.memory_space<vmem>>, %arg9: memref<1x128xf32, #tpu.memory_space<vmem>>, %arg10: memref<1x1x144x128xf32, #tpu.memory_space<vmem>>, %arg11: memref<180x128xf32, #tpu.memory_space<vmem>>, %arg12: memref<192x128xbf16, #tpu.memory_space<vmem>>) attributes {dimension_semantics = [#tpu.dimension_semantics<parallel>, #tpu.dimension_semantics<parallel>], iteration_bounds = array<i64: 2, 2>, scalar_prefetch = 0 : i64, scratch_operands = 2 : i64, tpu.core_type = #tpu.core_type<tc>, window_params = [{transform_indices = @transform_0, window_bounds = array<i64: 1, 1, 224, 128>}, {transform_indices = @transform_1, window_bounds = array<i64: 1, 180, 1>}, {pipeline_mode = #tpu.pipeline_mode<synchronous>, transform_indices = @transform_2, window_bounds = array<i64: 9, 128, 128>}, {pipeline_mode = #tpu.pipeline_mode<synchronous>, transform_indices = @transform_3, window_bounds = array<i64: 1, 128>}, {pipeline_mode = #tpu.pipeline_mode<synchronous>, transform_indices = @transform_4, window_bounds = array<i64: 1, 128>}, {pipeline_mode = #tpu.pipeline_mode<synchronous>, transform_indices = @transform_5, window_bounds = array<i64: 9, 128, 128>}, {pipeline_mode = #tpu.pipeline_mode<synchronous>, transform_indices = @transform_6, window_bounds = array<i64: 1, 128>}, {pipeline_mode = #tpu.pipeline_mode<synchronous>, transform_indices = @transform_7, window_bounds = array<i64: 1, 128>}, {transform_indices = @transform_8, window_bounds = array<i64: 1, 1, 144, 128>}]} {
    %c0 = arith.constant 0 : index
    %c0_0 = arith.constant 0 : index
    %c0_1 = arith.constant 0 : index
    %c0_2 = arith.constant 0 : index
    %0 = vector.load %arg2[%c0, %c0_0, %c0_1, %c0_2] : memref<1x1x224x128xbf16, #tpu.memory_space<vmem>>, vector<1x1x180x128xbf16>
    %1 = vector.shape_cast %0 : vector<1x1x180x128xbf16> to vector<180x128xbf16>
    %c0_3 = arith.constant 0 : index
    %c0_4 = arith.constant 0 : index
    %c0_5 = arith.constant 0 : index
    %2 = vector.load %arg4[%c0_3, %c0_4, %c0_5] : memref<9x128x128xbf16, #tpu.memory_space<vmem>>, vector<1x128x128xbf16>
    %3 = vector.shape_cast %2 : vector<1x128x128xbf16> to vector<128x128xbf16>
    %cst = arith.constant dense<0.000000e+00> : vector<180x128xf32>
    %4 = tpu.matmul %1, %3, %cst {dimension_numbers = #tpu.dot_dimension_numbers<[1], [0], [0], [1], [0, 0, 1, 1], [], []>} : vector<180x128xbf16>, vector<128x128xbf16>, vector<180x128xf32> -> vector<180x128xf32>
    %c0_6 = arith.constant 0 : index
    %c0_7 = arith.constant 0 : index
    %5 = vector.load %arg11[%c0_6, %c0_7] : memref<180x128xf32, #tpu.memory_space<vmem>>, vector<180x128xf32>
    tpu.vector_store %arg11[%c0_6, %c0_7], %4 {strides = array<i32>} : memref<180x128xf32, #tpu.memory_space<vmem>>, vector<180x128xf32>,
    %c0_8 = arith.constant 0 : index
    %c0_9 = arith.constant 0 : index
    %c1 = arith.constant 1 : index
    %c0_10 = arith.constant 0 : index
    %6 = vector.load %arg2[%c0_8, %c0_9, %c1, %c0_10] : memref<1x1x224x128xbf16, #tpu.memory_space<vmem>>, vector<1x1x180x128xbf16>
    %7 = vector.shape_cast %6 : vector<1x1x180x128xbf16> to vector<180x128xbf16>
    %c1_11 = arith.constant 1 : index
    %c0_12 = arith.constant 0 : index
    %c0_13 = arith.constant 0 : index
    %8 = vector.load %arg4[%c1_11, %c0_12, %c0_13] : memref<9x128x128xbf16, #tpu.memory_space<vmem>>, vector<1x128x128xbf16>
    %9 = vector.shape_cast %8 : vector<1x128x128xbf16> to vector<128x128xbf16>
    %cst_14 = arith.constant dense<0.000000e+00> : vector<180x128xf32>
    %10 = tpu.matmul %7, %9, %cst_14 {dimension_numbers = #tpu.dot_dimension_numbers<[1], [0], [0], [1], [0, 0, 1, 1], [], []>} : vector<180x128xbf16>, vector<128x128xbf16>, vector<180x128xf32> -> vector<180x128xf32>
    %c0_15 = arith.constant 0 : index
    %c0_16 = arith.constant 0 : index
    %11 = vector.load %arg11[%c0_15, %c0_16] : memref<180x128xf32, #tpu.memory_space<vmem>>, vector<180x128xf32>
    %12 = arith.addf %11, %10 : vector<180x128xf32>
    %c0_17 = arith.constant 0 : index
    %c0_18 = arith.constant 0 : index
    %13 = vector.load %arg11[%c0_17, %c0_18] : memref<180x128xf32, #tpu.memory_space<vmem>>, vector<180x128xf32>
    tpu.vector_store %arg11[%c0_17, %c0_18], %12 {strides = array<i32>} : memref<180x128xf32, #tpu.memory_space<vmem>>, vector<180x128xf32>,
    %c0_19 = arith.constant 0 : index
    %c0_20 = arith.constant 0 : index
    %c2 = arith.constant 2 : index
    %c0_21 = arith.constant 0 : index
    %14 = vector.load %arg2[%c0_19, %c0_20, %c2, %c0_21] : memref<1x1x224x128xbf16, #tpu.memory_space<vmem>>, vector<1x1x180x128xbf16>
    %15 = vector.shape_cast %14 : vector<1x1x180x128xbf16> to vector<180x128xbf16>
    %c2_22 = arith.constant 2 : index
    %c0_23 = arith.constant 0 : index
    %c0_24 = arith.constant 0 : index
    %16 = vector.load %arg4[%c2_22, %c0_23, %c0_24] : memref<9x128x128xbf16, #tpu.memory_space<vmem>>, vector<1x128x128xbf16>
    %17 = vector.shape_cast %16 : vector<1x128x128xbf16> to vector<128x128xbf16>
    %cst_25 = arith.constant dense<0.000000e+00> : vector<180x128xf32>
    %18 = tpu.matmul %15, %17, %cst_25 {dimension_numbers = #tpu.dot_dimension_numbers<[1], [0], [0], [1], [0, 0, 1, 1], [], []>} : vector<180x128xbf16>, vector<128x128xbf16>, vector<180x128xf32> -> vector<180x128xf32>
    %c0_26 = arith.constant 0 : index
    %c0_27 = arith.constant 0 : index
    %19 = vector.load %arg11[%c0_26, %c0_27] : memref<180x128xf32, #tpu.memory_space<vmem>>, vector<180x128xf32>
    %20 = arith.addf %19, %18 : vector<180x128xf32>
    %c0_28 = arith.constant 0 : index
    %c0_29 = arith.constant 0 : index
    %21 = vector.load %arg11[%c0_28, %c0_29] : memref<180x128xf32, #tpu.memory_space<vmem>>, vector<180x128xf32>
    tpu.vector_store %arg11[%c0_28, %c0_29], %20 {strides = array<i32>} : memref<180x128xf32, #tpu.memory_space<vmem>>, vector<180x128xf32>,
    %c0_30 = arith.constant 0 : index
    %c0_31 = arith.constant 0 : index
    %c18 = arith.constant 18 : index
    %c0_32 = arith.constant 0 : index
    %22 = vector.load %arg2[%c0_30, %c0_31, %c18, %c0_32] : memref<1x1x224x128xbf16, #tpu.memory_space<vmem>>, vector<1x1x180x128xbf16>
    %23 = vector.shape_cast %22 : vector<1x1x180x128xbf16> to vector<180x128xbf16>
    %c3 = arith.constant 3 : index
    %c0_33 = arith.constant 0 : index
    %c0_34 = arith.constant 0 : index
    %24 = vector.load %arg4[%c3, %c0_33, %c0_34] : memref<9x128x128xbf16, #tpu.memory_space<vmem>>, vector<1x128x128xbf16>
    %25 = vector.shape_cast %24 : vector<1x128x128xbf16> to vector<128x128xbf16>
    %cst_35 = arith.constant dense<0.000000e+00> : vector<180x128xf32>
    %26 = tpu.matmul %23, %25, %cst_35 {dimension_numbers = #tpu.dot_dimension_numbers<[1], [0], [0], [1], [0, 0, 1, 1], [], []>} : vector<180x128xbf16>, vector<128x128xbf16>, vector<180x128xf32> -> vector<180x128xf32>
    %c0_36 = arith.constant 0 : index
    %c0_37 = arith.constant 0 : index
    %27 = vector.load %arg11[%c0_36, %c0_37] : memref<180x128xf32, #tpu.memory_space<vmem>>, vector<180x128xf32>
    %28 = arith.addf %27, %26 : vector<180x128xf32>
    %c0_38 = arith.constant 0 : index
    %c0_39 = arith.constant 0 : index
    %29 = vector.load %arg11[%c0_38, %c0_39] : memref<180x128xf32, #tpu.memory_space<vmem>>, vector<180x128xf32>
    tpu.vector_store %arg11[%c0_38, %c0_39], %28 {strides = array<i32>} : memref<180x128xf32, #tpu.memory_space<vmem>>, vector<180x128xf32>,
    %c0_40 = arith.constant 0 : index
    %c0_41 = arith.constant 0 : index
    %c19 = arith.constant 19 : index
    %c0_42 = arith.constant 0 : index
    %30 = vector.load %arg2[%c0_40, %c0_41, %c19, %c0_42] : memref<1x1x224x128xbf16, #tpu.memory_space<vmem>>, vector<1x1x180x128xbf16>
    %31 = vector.shape_cast %30 : vector<1x1x180x128xbf16> to vector<180x128xbf16>
    %c4 = arith.constant 4 : index
    %c0_43 = arith.constant 0 : index
    %c0_44 = arith.constant 0 : index
    %32 = vector.load %arg4[%c4, %c0_43, %c0_44] : memref<9x128x128xbf16, #tpu.memory_space<vmem>>, vector<1x128x128xbf16>
    %33 = vector.shape_cast %32 : vector<1x128x128xbf16> to vector<128x128xbf16>
    %cst_45 = arith.constant dense<0.000000e+00> : vector<180x128xf32>
    %34 = tpu.matmul %31, %33, %cst_45 {dimension_numbers = #tpu.dot_dimension_numbers<[1], [0], [0], [1], [0, 0, 1, 1], [], []>} : vector<180x128xbf16>, vector<128x128xbf16>, vector<180x128xf32> -> vector<180x128xf32>
    %c0_46 = arith.constant 0 : index
    %c0_47 = arith.constant 0 : index
    %35 = vector.load %arg11[%c0_46, %c0_47] : memref<180x128xf32, #tpu.memory_space<vmem>>, vector<180x128xf32>
    %36 = arith.addf %35, %34 : vector<180x128xf32>
    %c0_48 = arith.constant 0 : index
    %c0_49 = arith.constant 0 : index
    %37 = vector.load %arg11[%c0_48, %c0_49] : memref<180x128xf32, #tpu.memory_space<vmem>>, vector<180x128xf32>
    tpu.vector_store %arg11[%c0_48, %c0_49], %36 {strides = array<i32>} : memref<180x128xf32, #tpu.memory_space<vmem>>, vector<180x128xf32>,
    %c0_50 = arith.constant 0 : index
    %c0_51 = arith.constant 0 : index
    %c20 = arith.constant 20 : index
    %c0_52 = arith.constant 0 : index
    %38 = vector.load %arg2[%c0_50, %c0_51, %c20, %c0_52] : memref<1x1x224x128xbf16, #tpu.memory_space<vmem>>, vector<1x1x180x128xbf16>
    %39 = vector.shape_cast %38 : vector<1x1x180x128xbf16> to vector<180x128xbf16>
    %c5 = arith.constant 5 : index
    %c0_53 = arith.constant 0 : index
    %c0_54 = arith.constant 0 : index
    %40 = vector.load %arg4[%c5, %c0_53, %c0_54] : memref<9x128x128xbf16, #tpu.memory_space<vmem>>, vector<1x128x128xbf16>
    %41 = vector.shape_cast %40 : vector<1x128x128xbf16> to vector<128x128xbf16>
    %cst_55 = arith.constant dense<0.000000e+00> : vector<180x128xf32>
    %42 = tpu.matmul %39, %41, %cst_55 {dimension_numbers = #tpu.dot_dimension_numbers<[1], [0], [0], [1], [0, 0, 1, 1], [], []>} : vector<180x128xbf16>, vector<128x128xbf16>, vector<180x128xf32> -> vector<180x128xf32>
    %c0_56 = arith.constant 0 : index
    %c0_57 = arith.constant 0 : index
    %43 = vector.load %arg11[%c0_56, %c0_57] : memref<180x128xf32, #tpu.memory_space<vmem>>, vector<180x128xf32>
    %44 = arith.addf %43, %42 : vector<180x128xf32>
    %c0_58 = arith.constant 0 : index
    %c0_59 = arith.constant 0 : index
    %45 = vector.load %arg11[%c0_58, %c0_59] : memref<180x128xf32, #tpu.memory_space<vmem>>, vector<180x128xf32>
    tpu.vector_store %arg11[%c0_58, %c0_59], %44 {strides = array<i32>} : memref<180x128xf32, #tpu.memory_space<vmem>>, vector<180x128xf32>,
    %c0_60 = arith.constant 0 : index
    %c0_61 = arith.constant 0 : index
    %c36 = arith.constant 36 : index
    %c0_62 = arith.constant 0 : index
    %46 = vector.load %arg2[%c0_60, %c0_61, %c36, %c0_62] : memref<1x1x224x128xbf16, #tpu.memory_space<vmem>>, vector<1x1x180x128xbf16>
    %47 = vector.shape_cast %46 : vector<1x1x180x128xbf16> to vector<180x128xbf16>
    %c6 = arith.constant 6 : index
    %c0_63 = arith.constant 0 : index
    %c0_64 = arith.constant 0 : index
    %48 = vector.load %arg4[%c6, %c0_63, %c0_64] : memref<9x128x128xbf16, #tpu.memory_space<vmem>>, vector<1x128x128xbf16>
    %49 = vector.shape_cast %48 : vector<1x128x128xbf16> to vector<128x128xbf16>
    %cst_65 = arith.constant dense<0.000000e+00> : vector<180x128xf32>
    %50 = tpu.matmul %47, %49, %cst_65 {dimension_numbers = #tpu.dot_dimension_numbers<[1], [0], [0], [1], [0, 0, 1, 1], [], []>} : vector<180x128xbf16>, vector<128x128xbf16>, vector<180x128xf32> -> vector<180x128xf32>
    %c0_66 = arith.constant 0 : index
    %c0_67 = arith.constant 0 : index
    %51 = vector.load %arg11[%c0_66, %c0_67] : memref<180x128xf32, #tpu.memory_space<vmem>>, vector<180x128xf32>
    %52 = arith.addf %51, %50 : vector<180x128xf32>
    %c0_68 = arith.constant 0 : index
    %c0_69 = arith.constant 0 : index
    %53 = vector.load %arg11[%c0_68, %c0_69] : memref<180x128xf32, #tpu.memory_space<vmem>>, vector<180x128xf32>
    tpu.vector_store %arg11[%c0_68, %c0_69], %52 {strides = array<i32>} : memref<180x128xf32, #tpu.memory_space<vmem>>, vector<180x128xf32>,
    %c0_70 = arith.constant 0 : index
    %c0_71 = arith.constant 0 : index
    %c37 = arith.constant 37 : index
    %c0_72 = arith.constant 0 : index
    %54 = vector.load %arg2[%c0_70, %c0_71, %c37, %c0_72] : memref<1x1x224x128xbf16, #tpu.memory_space<vmem>>, vector<1x1x180x128xbf16>
    %55 = vector.shape_cast %54 : vector<1x1x180x128xbf16> to vector<180x128xbf16>
    %c7 = arith.constant 7 : index
    %c0_73 = arith.constant 0 : index
    %c0_74 = arith.constant 0 : index
    %56 = vector.load %arg4[%c7, %c0_73, %c0_74] : memref<9x128x128xbf16, #tpu.memory_space<vmem>>, vector<1x128x128xbf16>
    %57 = vector.shape_cast %56 : vector<1x128x128xbf16> to vector<128x128xbf16>
    %cst_75 = arith.constant dense<0.000000e+00> : vector<180x128xf32>
    %58 = tpu.matmul %55, %57, %cst_75 {dimension_numbers = #tpu.dot_dimension_numbers<[1], [0], [0], [1], [0, 0, 1, 1], [], []>} : vector<180x128xbf16>, vector<128x128xbf16>, vector<180x128xf32> -> vector<180x128xf32>
    %c0_76 = arith.constant 0 : index
    %c0_77 = arith.constant 0 : index
    %59 = vector.load %arg11[%c0_76, %c0_77] : memref<180x128xf32, #tpu.memory_space<vmem>>, vector<180x128xf32>
    %60 = arith.addf %59, %58 : vector<180x128xf32>
    %c0_78 = arith.constant 0 : index
    %c0_79 = arith.constant 0 : index
    %61 = vector.load %arg11[%c0_78, %c0_79] : memref<180x128xf32, #tpu.memory_space<vmem>>, vector<180x128xf32>
    tpu.vector_store %arg11[%c0_78, %c0_79], %60 {strides = array<i32>} : memref<180x128xf32, #tpu.memory_space<vmem>>, vector<180x128xf32>,
    %c0_80 = arith.constant 0 : index
    %c0_81 = arith.constant 0 : index
    %c38 = arith.constant 38 : index
    %c0_82 = arith.constant 0 : index
    %62 = vector.load %arg2[%c0_80, %c0_81, %c38, %c0_82] : memref<1x1x224x128xbf16, #tpu.memory_space<vmem>>, vector<1x1x180x128xbf16>
    %63 = vector.shape_cast %62 : vector<1x1x180x128xbf16> to vector<180x128xbf16>
    %c8 = arith.constant 8 : index
    %c0_83 = arith.constant 0 : index
    %c0_84 = arith.constant 0 : index
    %64 = vector.load %arg4[%c8, %c0_83, %c0_84] : memref<9x128x128xbf16, #tpu.memory_space<vmem>>, vector<1x128x128xbf16>
    %65 = vector.shape_cast %64 : vector<1x128x128xbf16> to vector<128x128xbf16>
    %cst_85 = arith.constant dense<0.000000e+00> : vector<180x128xf32>
    %66 = tpu.matmul %63, %65, %cst_85 {dimension_numbers = #tpu.dot_dimension_numbers<[1], [0], [0], [1], [0, 0, 1, 1], [], []>} : vector<180x128xbf16>, vector<128x128xbf16>, vector<180x128xf32> -> vector<180x128xf32>
    %c0_86 = arith.constant 0 : index
    %c0_87 = arith.constant 0 : index
    %67 = vector.load %arg11[%c0_86, %c0_87] : memref<180x128xf32, #tpu.memory_space<vmem>>, vector<180x128xf32>
    %68 = arith.addf %67, %66 : vector<180x128xf32>
    %c0_88 = arith.constant 0 : index
    %c0_89 = arith.constant 0 : index
    %69 = vector.load %arg11[%c0_88, %c0_89] : memref<180x128xf32, #tpu.memory_space<vmem>>, vector<180x128xf32>
    tpu.vector_store %arg11[%c0_88, %c0_89], %68 {strides = array<i32>} : memref<180x128xf32, #tpu.memory_space<vmem>>, vector<180x128xf32>,
    %c0_90 = arith.constant 0 : index
    %c0_91 = arith.constant 0 : index
    %70 = vector.load %arg11[%c0_90, %c0_91] : memref<180x128xf32, #tpu.memory_space<vmem>>, vector<180x128xf32>
    %c0_92 = arith.constant 0 : index
    %c0_93 = arith.constant 0 : index
    %71 = vector.load %arg5[%c0_92, %c0_93] : memref<1x128xf32, #tpu.memory_space<vmem>>, vector<1x128xf32>
    %72 = vector.broadcast %71 : vector<1x128xf32> to vector<180x128xf32>
    %73 = arith.mulf %70, %72 : vector<180x128xf32>
    %c0_94 = arith.constant 0 : index
    %c0_95 = arith.constant 0 : index
    %74 = vector.load %arg6[%c0_94, %c0_95] : memref<1x128xf32, #tpu.memory_space<vmem>>, vector<1x128xf32>
    %75 = vector.broadcast %74 : vector<1x128xf32> to vector<180x128xf32>
    %76 = arith.addf %73, %75 : vector<180x128xf32>
    %cst_96 = arith.constant 0.000000e+00 : f32
    %77 = vector.broadcast %cst_96 : f32 to vector<180x128xf32>
    %78 = arith.maximumf %76, %77 : vector<180x128xf32>
    %c0_97 = arith.constant 0 : index
    %c0_98 = arith.constant 0 : index
    %c0_99 = arith.constant 0 : index
    %79 = vector.load %arg3[%c0_97, %c0_98, %c0_99] : memref<1x180x1xf32, #tpu.memory_space<vmem>>, vector<1x180x1xf32>
    %80 = vector.shape_cast %79 : vector<1x180x1xf32> to vector<180x1xf32>
    %81 = vector.broadcast %80 : vector<180x1xf32> to vector<180x128xf32>
    %82 = arith.mulf %78, %81 : vector<180x128xf32>
    %83 = arith.truncf %82 : vector<180x128xf32> to vector<180x128xbf16>
    %c0_100 = arith.constant 0 : index
    %c0_101 = arith.constant 0 : index
    %84 = vector.load %arg12[%c0_100, %c0_101] : memref<192x128xbf16, #tpu.memory_space<vmem>>, vector<180x128xbf16>
    tpu.vector_store %arg12[%c0_100, %c0_101], %83 {strides = array<i32>} : memref<192x128xbf16, #tpu.memory_space<vmem>>, vector<180x128xbf16>,
    %cst_102 = arith.constant 0.000000e+00 : bf16
    %85 = vector.broadcast %cst_102 : bf16 to vector<12x128xbf16>
    %c180 = arith.constant 180 : index
    %c0_103 = arith.constant 0 : index
    %86 = vector.load %arg12[%c180, %c0_103] : memref<192x128xbf16, #tpu.memory_space<vmem>>, vector<12x128xbf16>
    tpu.vector_store %arg12[%c180, %c0_103], %85 {strides = array<i32>} : memref<192x128xbf16, #tpu.memory_space<vmem>>, vector<12x128xbf16>,
    %c0_104 = arith.constant 0 : index
    %c0_105 = arith.constant 0 : index
    %87 = vector.load %arg12[%c0_104, %c0_105] : memref<192x128xbf16, #tpu.memory_space<vmem>>, vector<144x128xbf16>
    %c0_106 = arith.constant 0 : index
    %c0_107 = arith.constant 0 : index
    %c0_108 = arith.constant 0 : index
    %88 = vector.load %arg7[%c0_106, %c0_107, %c0_108] : memref<9x128x128xbf16, #tpu.memory_space<vmem>>, vector<1x128x128xbf16>
    %89 = vector.shape_cast %88 : vector<1x128x128xbf16> to vector<128x128xbf16>
    %cst_109 = arith.constant dense<0.000000e+00> : vector<144x128xf32>
    %90 = tpu.matmul %87, %89, %cst_109 {dimension_numbers = #tpu.dot_dimension_numbers<[1], [0], [0], [1], [0, 0, 1, 1], [], []>} : vector<144x128xbf16>, vector<128x128xbf16>, vector<144x128xf32> -> vector<144x128xf32>
    %c0_110 = arith.constant 0 : index
    %c0_111 = arith.constant 0 : index
    %91 = vector.load %arg11[%c0_110, %c0_111] : memref<180x128xf32, #tpu.memory_space<vmem>>, vector<144x128xf32>
    tpu.vector_store %arg11[%c0_110, %c0_111], %90 {strides = array<i32>} : memref<180x128xf32, #tpu.memory_space<vmem>>, vector<144x128xf32>,
    %c1_112 = arith.constant 1 : index
    %c0_113 = arith.constant 0 : index
    %92 = vector.load %arg12[%c1_112, %c0_113] : memref<192x128xbf16, #tpu.memory_space<vmem>>, vector<144x128xbf16>
    %c1_114 = arith.constant 1 : index
    %c0_115 = arith.constant 0 : index
    %c0_116 = arith.constant 0 : index
    %93 = vector.load %arg7[%c1_114, %c0_115, %c0_116] : memref<9x128x128xbf16, #tpu.memory_space<vmem>>, vector<1x128x128xbf16>
    %94 = vector.shape_cast %93 : vector<1x128x128xbf16> to vector<128x128xbf16>
    %cst_117 = arith.constant dense<0.000000e+00> : vector<144x128xf32>
    %95 = tpu.matmul %92, %94, %cst_117 {dimension_numbers = #tpu.dot_dimension_numbers<[1], [0], [0], [1], [0, 0, 1, 1], [], []>} : vector<144x128xbf16>, vector<128x128xbf16>, vector<144x128xf32> -> vector<144x128xf32>
    %c0_118 = arith.constant 0 : index
    %c0_119 = arith.constant 0 : index
    %96 = vector.load %arg11[%c0_118, %c0_119] : memref<180x128xf32, #tpu.memory_space<vmem>>, vector<144x128xf32>
    %97 = arith.addf %96, %95 : vector<144x128xf32>
    %c0_120 = arith.constant 0 : index
    %c0_121 = arith.constant 0 : index
    %98 = vector.load %arg11[%c0_120, %c0_121] : memref<180x128xf32, #tpu.memory_space<vmem>>, vector<144x128xf32>
    tpu.vector_store %arg11[%c0_120, %c0_121], %97 {strides = array<i32>} : memref<180x128xf32, #tpu.memory_space<vmem>>, vector<144x128xf32>,
    %c2_122 = arith.constant 2 : index
    %c0_123 = arith.constant 0 : index
    %99 = vector.load %arg12[%c2_122, %c0_123] : memref<192x128xbf16, #tpu.memory_space<vmem>>, vector<144x128xbf16>
    %c2_124 = arith.constant 2 : index
    %c0_125 = arith.constant 0 : index
    %c0_126 = arith.constant 0 : index
    %100 = vector.load %arg7[%c2_124, %c0_125, %c0_126] : memref<9x128x128xbf16, #tpu.memory_space<vmem>>, vector<1x128x128xbf16>
    %101 = vector.shape_cast %100 : vector<1x128x128xbf16> to vector<128x128xbf16>
    %cst_127 = arith.constant dense<0.000000e+00> : vector<144x128xf32>
    %102 = tpu.matmul %99, %101, %cst_127 {dimension_numbers = #tpu.dot_dimension_numbers<[1], [0], [0], [1], [0, 0, 1, 1], [], []>} : vector<144x128xbf16>, vector<128x128xbf16>, vector<144x128xf32> -> vector<144x128xf32>
    %c0_128 = arith.constant 0 : index
    %c0_129 = arith.constant 0 : index
    %103 = vector.load %arg11[%c0_128, %c0_129] : memref<180x128xf32, #tpu.memory_space<vmem>>, vector<144x128xf32>
    %104 = arith.addf %103, %102 : vector<144x128xf32>
    %c0_130 = arith.constant 0 : index
    %c0_131 = arith.constant 0 : index
    %105 = vector.load %arg11[%c0_130, %c0_131] : memref<180x128xf32, #tpu.memory_space<vmem>>, vector<144x128xf32>
    tpu.vector_store %arg11[%c0_130, %c0_131], %104 {strides = array<i32>} : memref<180x128xf32, #tpu.memory_space<vmem>>, vector<144x128xf32>,
    %c18_132 = arith.constant 18 : index
    %c0_133 = arith.constant 0 : index
    %106 = vector.load %arg12[%c18_132, %c0_133] : memref<192x128xbf16, #tpu.memory_space<vmem>>, vector<144x128xbf16>
    %c3_134 = arith.constant 3 : index
    %c0_135 = arith.constant 0 : index
    %c0_136 = arith.constant 0 : index
    %107 = vector.load %arg7[%c3_134, %c0_135, %c0_136] : memref<9x128x128xbf16, #tpu.memory_space<vmem>>, vector<1x128x128xbf16>
    %108 = vector.shape_cast %107 : vector<1x128x128xbf16> to vector<128x128xbf16>
    %cst_137 = arith.constant dense<0.000000e+00> : vector<144x128xf32>
    %109 = tpu.matmul %106, %108, %cst_137 {dimension_numbers = #tpu.dot_dimension_numbers<[1], [0], [0], [1], [0, 0, 1, 1], [], []>} : vector<144x128xbf16>, vector<128x128xbf16>, vector<144x128xf32> -> vector<144x128xf32>
    %c0_138 = arith.constant 0 : index
    %c0_139 = arith.constant 0 : index
    %110 = vector.load %arg11[%c0_138, %c0_139] : memref<180x128xf32, #tpu.memory_space<vmem>>, vector<144x128xf32>
    %111 = arith.addf %110, %109 : vector<144x128xf32>
    %c0_140 = arith.constant 0 : index
    %c0_141 = arith.constant 0 : index
    %112 = vector.load %arg11[%c0_140, %c0_141] : memref<180x128xf32, #tpu.memory_space<vmem>>, vector<144x128xf32>
    tpu.vector_store %arg11[%c0_140, %c0_141], %111 {strides = array<i32>} : memref<180x128xf32, #tpu.memory_space<vmem>>, vector<144x128xf32>,
    %c19_142 = arith.constant 19 : index
    %c0_143 = arith.constant 0 : index
    %113 = vector.load %arg12[%c19_142, %c0_143] : memref<192x128xbf16, #tpu.memory_space<vmem>>, vector<144x128xbf16>
    %c4_144 = arith.constant 4 : index
    %c0_145 = arith.constant 0 : index
    %c0_146 = arith.constant 0 : index
    %114 = vector.load %arg7[%c4_144, %c0_145, %c0_146] : memref<9x128x128xbf16, #tpu.memory_space<vmem>>, vector<1x128x128xbf16>
    %115 = vector.shape_cast %114 : vector<1x128x128xbf16> to vector<128x128xbf16>
    %cst_147 = arith.constant dense<0.000000e+00> : vector<144x128xf32>
    %116 = tpu.matmul %113, %115, %cst_147 {dimension_numbers = #tpu.dot_dimension_numbers<[1], [0], [0], [1], [0, 0, 1, 1], [], []>} : vector<144x128xbf16>, vector<128x128xbf16>, vector<144x128xf32> -> vector<144x128xf32>
    %c0_148 = arith.constant 0 : index
    %c0_149 = arith.constant 0 : index
    %117 = vector.load %arg11[%c0_148, %c0_149] : memref<180x128xf32, #tpu.memory_space<vmem>>, vector<144x128xf32>
    %118 = arith.addf %117, %116 : vector<144x128xf32>
    %c0_150 = arith.constant 0 : index
    %c0_151 = arith.constant 0 : index
    %119 = vector.load %arg11[%c0_150, %c0_151] : memref<180x128xf32, #tpu.memory_space<vmem>>, vector<144x128xf32>
    tpu.vector_store %arg11[%c0_150, %c0_151], %118 {strides = array<i32>} : memref<180x128xf32, #tpu.memory_space<vmem>>, vector<144x128xf32>,
    %c20_152 = arith.constant 20 : index
    %c0_153 = arith.constant 0 : index
    %120 = vector.load %arg12[%c20_152, %c0_153] : memref<192x128xbf16, #tpu.memory_space<vmem>>, vector<144x128xbf16>
    %c5_154 = arith.constant 5 : index
    %c0_155 = arith.constant 0 : index
    %c0_156 = arith.constant 0 : index
    %121 = vector.load %arg7[%c5_154, %c0_155, %c0_156] : memref<9x128x128xbf16, #tpu.memory_space<vmem>>, vector<1x128x128xbf16>
    %122 = vector.shape_cast %121 : vector<1x128x128xbf16> to vector<128x128xbf16>
    %cst_157 = arith.constant dense<0.000000e+00> : vector<144x128xf32>
    %123 = tpu.matmul %120, %122, %cst_157 {dimension_numbers = #tpu.dot_dimension_numbers<[1], [0], [0], [1], [0, 0, 1, 1], [], []>} : vector<144x128xbf16>, vector<128x128xbf16>, vector<144x128xf32> -> vector<144x128xf32>
    %c0_158 = arith.constant 0 : index
    %c0_159 = arith.constant 0 : index
    %124 = vector.load %arg11[%c0_158, %c0_159] : memref<180x128xf32, #tpu.memory_space<vmem>>, vector<144x128xf32>
    %125 = arith.addf %124, %123 : vector<144x128xf32>
    %c0_160 = arith.constant 0 : index
    %c0_161 = arith.constant 0 : index
    %126 = vector.load %arg11[%c0_160, %c0_161] : memref<180x128xf32, #tpu.memory_space<vmem>>, vector<144x128xf32>
    tpu.vector_store %arg11[%c0_160, %c0_161], %125 {strides = array<i32>} : memref<180x128xf32, #tpu.memory_space<vmem>>, vector<144x128xf32>,
    %c36_162 = arith.constant 36 : index
    %c0_163 = arith.constant 0 : index
    %127 = vector.load %arg12[%c36_162, %c0_163] : memref<192x128xbf16, #tpu.memory_space<vmem>>, vector<144x128xbf16>
    %c6_164 = arith.constant 6 : index
    %c0_165 = arith.constant 0 : index
    %c0_166 = arith.constant 0 : index
    %128 = vector.load %arg7[%c6_164, %c0_165, %c0_166] : memref<9x128x128xbf16, #tpu.memory_space<vmem>>, vector<1x128x128xbf16>
    %129 = vector.shape_cast %128 : vector<1x128x128xbf16> to vector<128x128xbf16>
    %cst_167 = arith.constant dense<0.000000e+00> : vector<144x128xf32>
    %130 = tpu.matmul %127, %129, %cst_167 {dimension_numbers = #tpu.dot_dimension_numbers<[1], [0], [0], [1], [0, 0, 1, 1], [], []>} : vector<144x128xbf16>, vector<128x128xbf16>, vector<144x128xf32> -> vector<144x128xf32>
    %c0_168 = arith.constant 0 : index
    %c0_169 = arith.constant 0 : index
    %131 = vector.load %arg11[%c0_168, %c0_169] : memref<180x128xf32, #tpu.memory_space<vmem>>, vector<144x128xf32>
    %132 = arith.addf %131, %130 : vector<144x128xf32>
    %c0_170 = arith.constant 0 : index
    %c0_171 = arith.constant 0 : index
    %133 = vector.load %arg11[%c0_170, %c0_171] : memref<180x128xf32, #tpu.memory_space<vmem>>, vector<144x128xf32>
    tpu.vector_store %arg11[%c0_170, %c0_171], %132 {strides = array<i32>} : memref<180x128xf32, #tpu.memory_space<vmem>>, vector<144x128xf32>,
    %c37_172 = arith.constant 37 : index
    %c0_173 = arith.constant 0 : index
    %134 = vector.load %arg12[%c37_172, %c0_173] : memref<192x128xbf16, #tpu.memory_space<vmem>>, vector<144x128xbf16>
    %c7_174 = arith.constant 7 : index
    %c0_175 = arith.constant 0 : index
    %c0_176 = arith.constant 0 : index
    %135 = vector.load %arg7[%c7_174, %c0_175, %c0_176] : memref<9x128x128xbf16, #tpu.memory_space<vmem>>, vector<1x128x128xbf16>
    %136 = vector.shape_cast %135 : vector<1x128x128xbf16> to vector<128x128xbf16>
    %cst_177 = arith.constant dense<0.000000e+00> : vector<144x128xf32>
    %137 = tpu.matmul %134, %136, %cst_177 {dimension_numbers = #tpu.dot_dimension_numbers<[1], [0], [0], [1], [0, 0, 1, 1], [], []>} : vector<144x128xbf16>, vector<128x128xbf16>, vector<144x128xf32> -> vector<144x128xf32>
    %c0_178 = arith.constant 0 : index
    %c0_179 = arith.constant 0 : index
    %138 = vector.load %arg11[%c0_178, %c0_179] : memref<180x128xf32, #tpu.memory_space<vmem>>, vector<144x128xf32>
    %139 = arith.addf %138, %137 : vector<144x128xf32>
    %c0_180 = arith.constant 0 : index
    %c0_181 = arith.constant 0 : index
    %140 = vector.load %arg11[%c0_180, %c0_181] : memref<180x128xf32, #tpu.memory_space<vmem>>, vector<144x128xf32>
    tpu.vector_store %arg11[%c0_180, %c0_181], %139 {strides = array<i32>} : memref<180x128xf32, #tpu.memory_space<vmem>>, vector<144x128xf32>,
    %c38_182 = arith.constant 38 : index
    %c0_183 = arith.constant 0 : index
    %141 = vector.load %arg12[%c38_182, %c0_183] : memref<192x128xbf16, #tpu.memory_space<vmem>>, vector<144x128xbf16>
    %c8_184 = arith.constant 8 : index
    %c0_185 = arith.constant 0 : index
    %c0_186 = arith.constant 0 : index
    %142 = vector.load %arg7[%c8_184, %c0_185, %c0_186] : memref<9x128x128xbf16, #tpu.memory_space<vmem>>, vector<1x128x128xbf16>
    %143 = vector.shape_cast %142 : vector<1x128x128xbf16> to vector<128x128xbf16>
    %cst_187 = arith.constant dense<0.000000e+00> : vector<144x128xf32>
    %144 = tpu.matmul %141, %143, %cst_187 {dimension_numbers = #tpu.dot_dimension_numbers<[1], [0], [0], [1], [0, 0, 1, 1], [], []>} : vector<144x128xbf16>, vector<128x128xbf16>, vector<144x128xf32> -> vector<144x128xf32>
    %c0_188 = arith.constant 0 : index
    %c0_189 = arith.constant 0 : index
    %145 = vector.load %arg11[%c0_188, %c0_189] : memref<180x128xf32, #tpu.memory_space<vmem>>, vector<144x128xf32>
    %146 = arith.addf %145, %144 : vector<144x128xf32>
    %c0_190 = arith.constant 0 : index
    %c0_191 = arith.constant 0 : index
    %147 = vector.load %arg11[%c0_190, %c0_191] : memref<180x128xf32, #tpu.memory_space<vmem>>, vector<144x128xf32>
    tpu.vector_store %arg11[%c0_190, %c0_191], %146 {strides = array<i32>} : memref<180x128xf32, #tpu.memory_space<vmem>>, vector<144x128xf32>,
    %c0_192 = arith.constant 0 : index
    %c0_193 = arith.constant 0 : index
    %148 = vector.load %arg11[%c0_192, %c0_193] : memref<180x128xf32, #tpu.memory_space<vmem>>, vector<144x128xf32>
    %c0_194 = arith.constant 0 : index
    %c0_195 = arith.constant 0 : index
    %149 = vector.load %arg8[%c0_194, %c0_195] : memref<1x128xf32, #tpu.memory_space<vmem>>, vector<1x128xf32>
    %150 = vector.broadcast %149 : vector<1x128xf32> to vector<144x128xf32>
    %151 = arith.mulf %148, %150 : vector<144x128xf32>
    %c0_196 = arith.constant 0 : index
    %c0_197 = arith.constant 0 : index
    %152 = vector.load %arg9[%c0_196, %c0_197] : memref<1x128xf32, #tpu.memory_space<vmem>>, vector<1x128xf32>
    %153 = vector.broadcast %152 : vector<1x128xf32> to vector<144x128xf32>
    %154 = arith.addf %151, %153 : vector<144x128xf32>
    %cst_198 = arith.constant 0.000000e+00 : f32
    %155 = vector.broadcast %cst_198 : f32 to vector<144x128xf32>
    %156 = arith.maximumf %154, %155 : vector<144x128xf32>
    %c0_199 = arith.constant 0 : index
    %c0_200 = arith.constant 0 : index
    %c0_201 = arith.constant 0 : index
    %c0_202 = arith.constant 0 : index
    %157 = vector.load %arg10[%c0_199, %c0_200, %c0_201, %c0_202] : memref<1x1x144x128xf32, #tpu.memory_space<vmem>>, vector<1x1x144x128xf32>
    %158 = vector.shape_cast %157 : vector<1x1x144x128xf32> to vector<144x128xf32>
    %159 = vector.shape_cast %156 : vector<144x128xf32> to vector<1x1x144x128xf32>
    tpu.vector_store %arg10[%c0_199, %c0_200, %c0_201, %c0_202], %159 {strides = array<i32>} : memref<1x1x144x128xf32, #tpu.memory_space<vmem>>, vector<1x1x144x128xf32>,
    return
  }
  func.func @transform_0(%arg0: i32, %arg1: i32) -> (i32, i32, i32, i32) {
    %c0_i32 = arith.constant 0 : i32
    %c0_i32_0 = arith.constant 0 : i32
    %c0_i32_1 = arith.constant 0 : i32
    return %arg0, %arg1, %c0_i32, %c0_i32_0 : i32, i32, i32, i32
  }
  func.func @transform_1(%arg0: i32, %arg1: i32) -> (i32, i32, i32) {
    %c0_i32 = arith.constant 0 : i32
    %c0_i32_0 = arith.constant 0 : i32
    %c0_i32_1 = arith.constant 0 : i32
    return %arg1, %c0_i32, %c0_i32_0 : i32, i32, i32
  }
  func.func @transform_2(%arg0: i32, %arg1: i32) -> (i32, i32, i32) {
    %c0_i32 = arith.constant 0 : i32
    %c0_i32_0 = arith.constant 0 : i32
    %c0_i32_1 = arith.constant 0 : i32
    %c0_i32_2 = arith.constant 0 : i32
    return %c0_i32, %c0_i32_0, %c0_i32_1 : i32, i32, i32
  }
  func.func @transform_3(%arg0: i32, %arg1: i32) -> (i32, i32) {
    %c0_i32 = arith.constant 0 : i32
    %c0_i32_0 = arith.constant 0 : i32
    %c0_i32_1 = arith.constant 0 : i32
    return %c0_i32, %c0_i32_0 : i32, i32
  }
  func.func @transform_4(%arg0: i32, %arg1: i32) -> (i32, i32) {
    %c0_i32 = arith.constant 0 : i32
    %c0_i32_0 = arith.constant 0 : i32
    %c0_i32_1 = arith.constant 0 : i32
    return %c0_i32, %c0_i32_0 : i32, i32
  }
  func.func @transform_5(%arg0: i32, %arg1: i32) -> (i32, i32, i32) {
    %c0_i32 = arith.constant 0 : i32
    %c0_i32_0 = arith.constant 0 : i32
    %c0_i32_1 = arith.constant 0 : i32
    %c0_i32_2 = arith.constant 0 : i32
    return %c0_i32, %c0_i32_0, %c0_i32_1 : i32, i32, i32
  }
  func.func @transform_6(%arg0: i32, %arg1: i32) -> (i32, i32) {
    %c0_i32 = arith.constant 0 : i32
    %c0_i32_0 = arith.constant 0 : i32
    %c0_i32_1 = arith.constant 0 : i32
    return %c0_i32, %c0_i32_0 : i32, i32
  }
  func.func @transform_7(%arg0: i32, %arg1: i32) -> (i32, i32) {
    %c0_i32 = arith.constant 0 : i32
    %c0_i32_0 = arith.constant 0 : i32
    %c0_i32_1 = arith.constant 0 : i32
    return %c0_i32, %c0_i32_0 : i32, i32
  }
  func.func @transform_8(%arg0: i32, %arg1: i32) -> (i32, i32, i32, i32) {
    %c0_i32 = arith.constant 0 : i32
    %c0_i32_0 = arith.constant 0 : i32
    %c0_i32_1 = arith.constant 0 : i32
    return %arg0, %arg1, %c0_i32, %c0_i32_0 : i32, i32, i32, i32
  }
}

</mosaic_0001>

<llo_original>
// kernel: tpu_custom_call.1
$region0: #{tpu_custom_call.1}
  #allocation0 [shape = 'u32[]', space=smem, size = 0x4, offset = 0x4, fixed_abs, tag = 'smem constant byte address 0x4 - core index']
  #allocation1 [shape = 'u32[72,128]{1,0:T(1,128)}', space=vmem, size = 0x9000, scoped, tag = 'internal scratch']
  #allocation2 [shape = 'f32[180,128]{1,0:T(8,128)}', space=vmem, size = 0x17000, scoped, tag = 'scratch operand']
  #allocation3 [shape = 'bf16[192,128]{1,0:T(8,128)(2,1)}', space=vmem, size = 0xc000, scoped, tag = 'scratch operand']
  %s0 = inlined_call_operand.hbm [shape: bf16[2,2,224,128], index: 0, kind: input, shape index: {}]
  %s1 = inlined_call_operand.vmem [shape: f32[2,180,1], index: 1, kind: input, shape index: {}]
  %s2 = inlined_call_operand.hbm [shape: bf16[9,128,128], index: 2, kind: input, shape index: {}]
  %s3 = inlined_call_operand.vmem [shape: f32[1,128], index: 3, kind: input, shape index: {}]
  %s4 = inlined_call_operand.vmem [shape: f32[1,128], index: 4, kind: input, shape index: {}]
  %s5 = inlined_call_operand.hbm [shape: bf16[9,128,128], index: 5, kind: input, shape index: {}]
  %s6 = inlined_call_operand.vmem [shape: f32[1,128], index: 6, kind: input, shape index: {}]
  %s7 = inlined_call_operand.vmem [shape: f32[1,128], index: 7, kind: input, shape index: {}]
  %s8 = inlined_call_operand.hbm [shape: f32[2,2,144,128], index: 8, kind: output, shape index: {}]
  %s9 = sld [smem:[#allocation0]]
  $region77: #{tpu_custom_call.1} parent=0
    _
  %s11 = ssub.s32 1, %s9
  %s12 = scalar_select 0, %s11, %s9
  $region1: #{tpu_custom_call.1} parent=0
    #allocation4 [shape = 'u8[114688]{0}', space=vmem, size = 0x1c000, scoped, tag = 'input window, operand 0']
    #allocation5 [shape = 's32[2]{0}', space=sflag, size = 0x8, scoped, tag = 'scoped memory for tpu_custom_call.1']
    #allocation6 [shape = 's32[2]{0}', space=sflag, size = 0x8, scoped, tag = 'scoped memory for tpu_custom_call.1']
    #allocation7 [shape = 'u8[294912]{0}', space=vmem, size = 0x48000, scoped, tag = 'input window, operand 2, single buffered']
    #allocation8 [shape = 's32[1]{0}', space=sflag, size = 0x4, scoped, tag = 'scoped memory for tpu_custom_call.1']
    #allocation9 [shape = 'u8[294912]{0}', space=vmem, size = 0x48000, scoped, tag = 'input window, operand 5, single buffered']
    #allocation10 [shape = 'u8[147456]{0}', space=vmem, size = 0x24000, scoped, tag = 'output window, operand 0']
    %13 = vsyncpa [#allocation5], 0
    %s14 = scalar_lea.sflag [#allocation5], 1
    %15 = vsyncpa %s14, 0
    %16 = vsyncpa [#allocation8], 0
    %17 = vsyncpa [#allocation6], 0
    %s18 = scalar_lea.sflag [#allocation6], 1
    %19 = vsyncpa %s18, 0
    loop: start=0, step=1, limit=6
    $region2: #{tpu_custom_call.1} parent=1 // loop_pre_header
      _
    $region3: #{tpu_custom_call.1} parent=1 // loop_header
      %s21 = sphi 0, %s25
      %p22 = scmp.ge.s32.totalorder %s21, 6
      %s28 = sphi 0, %s40
      %s29 = sphi 0, %s36
      %s30 = sphi 0, %s28
      %s31 = sphi 0, %s29
      %s32 = sphi 0, %s30
      %s33 = sphi 0, %s31
      %s45 = sphi 0, %s47
      %s48 = sphi 0, %s45
      %s49 = sphi 0, %s48
      %s65 = sphi 0, %s49
      %s71 = sphi 0, %s73
      %s74 = sphi 0, %s71
      %s75 = sphi 0, %s74
      %s91 = sphi 0, %s75
      %s95 = sphi 0, %s95
      %s97 = sphi 0, %s95
      %s98 = sphi 0, %s97
      %s112 = sphi 0, %s98
      %s116 = sphi 0, %s116
      %s118 = sphi 0, %s116
      %s119 = sphi 0, %s118
      %s133 = sphi 0, %s119
      %s137 = sphi 0, %s137
      %s139 = sphi 0, %s137
      %s140 = sphi 0, %s139
      %s154 = sphi 0, %s140
      %s158 = sphi 0, %s158
      %s160 = sphi 0, %s158
      %s161 = sphi 0, %s160
      %s175 = sphi 0, %s161
      %s179 = sphi 0, %s179
      %s181 = sphi 0, %s179
      %s182 = sphi 0, %s181
      %s196 = sphi 0, %s182
      %s200 = sphi 0, %s200
      %s202 = sphi 0, %s200
      %s203 = sphi 0, %s202
      %s217 = sphi 0, %s203
      %s225 = sphi 0, %s227
      %s228 = sphi 0, %s225
      %s229 = sphi 0, %s228
      %s245 = sphi 0, %s229
    $region4: #{tpu_custom_call.1} parent=1 // loop_header_branch
      %24 = sbr.rel (%p22) target = $region8
    $region5: #{tpu_custom_call.1} parent=1 // loop_body
      %s26 = ssub.s32 %s21, 1
      %s27 = ssub.s32 %s21, 2
      %s34 = sadd.s32 1, %s29
      %p35 = scmp.ge.s32.totalorder %s34, 2
      %s36 = scalar_select %p35, 0, %s34
      %s37 = sadd.s32 1, %s28
      %s38 = scalar_select %p35, %s37, %s28
      %p39 = scmp.ge.s32.totalorder %s38, 2
      %s40 = scalar_select %p39, 0, %s38
      %s41 = ssub.s32 %s28, %s40
      %s42 = ssub.s32 %s29, %s36
      %s43 = sor.u32 %s41, %s42
      %p44 = scmp.eq.s32.totalorder %s43, 0
      %s46 = sadd.s32 %s45, 1
      %s47 = scalar_select %p44, %s45, %s46
      %p50 = pneg %p44
      %p51 = scmp.eq.s32.totalorder %s21, 3
      %p52 = por %p50, %p51
      %p53 = scmp.ne.s32.totalorder %s45, %s48
      %p54 = scmp.eq.s32.totalorder %s21, 0
      %p55 = por %p53, %p54
      %p56 = scmp.ne.s32.totalorder %s45, %s48
      %p57 = scmp.eq.s32.totalorder %s26, 3
      %p58 = por %p56, %p57
      %p59 = scmp.ne.s32.totalorder %s48, %s49
      %p60 = scmp.eq.s32.totalorder %s26, 0
      %p61 = por %p59, %p60
      %p62 = scmp.ne.s32.totalorder %s48, %s49
      %p63 = scmp.eq.s32.totalorder %s27, 3
      %p64 = por %p62, %p63
      %p66 = scmp.ne.s32.totalorder %s49, %s65
      %p67 = scmp.eq.s32.totalorder %s27, 0
      %p68 = por %p66, %p67
      %s69 = ssub.s32 %s29, %s36
      %p70 = scmp.eq.s32.totalorder %s69, 0
      %s72 = sadd.s32 %s71, 1
      %s73 = scalar_select %p70, %s71, %s72
      %p76 = pneg %p70
      %p77 = scmp.eq.s32.totalorder %s21, 3
      %p78 = por %p76, %p77
      %p79 = scmp.ne.s32.totalorder %s71, %s74
      %p80 = scmp.eq.s32.totalorder %s21, 0
      %p81 = por %p79, %p80
      %p82 = scmp.ne.s32.totalorder %s71, %s74
      %p83 = scmp.eq.s32.totalorder %s26, 3
      %p84 = por %p82, %p83
      %p85 = scmp.ne.s32.totalorder %s74, %s75
      %p86 = scmp.eq.s32.totalorder %s26, 0
      %p87 = por %p85, %p86
      %p88 = scmp.ne.s32.totalorder %s74, %s75
      %p89 = scmp.eq.s32.totalorder %s27, 3
      %p90 = por %p88, %p89
      %p92 = scmp.ne.s32.totalorder %s75, %s91
      %p93 = scmp.eq.s32.totalorder %s27, 0
      %p94 = por %p92, %p93
      %s96 = sadd.s32 %s95, 1
      %p99 = scmp.eq.s32.totalorder %s21, 3
      %p100 = scmp.ne.s32.totalorder %s95, %s97
      %p101 = scmp.eq.s32.totalorder %s21, 0
      %p102 = por %p100, %p101
      %p103 = scmp.ne.s32.totalorder %s95, %s97
      %p104 = scmp.eq.s32.totalorder %s26, 3
      %p105 = por %p103, %p104
      %p106 = scmp.ne.s32.totalorder %s97, %s98
      %p107 = scmp.eq.s32.totalorder %s26, 0
      %p108 = por %p106, %p107
      %p109 = scmp.ne.s32.totalorder %s97, %s98
      %p110 = scmp.eq.s32.totalorder %s27, 3
      %p111 = por %p109, %p110
      %p113 = scmp.ne.s32.totalorder %s98, %s112
      %p114 = scmp.eq.s32.totalorder %s27, 0
      %p115 = por %p113, %p114
      %s117 = sadd.s32 %s116, 1
      %p120 = scmp.eq.s32.totalorder %s21, 3
      %p121 = scmp.ne.s32.totalorder %s116, %s118
      %p122 = scmp.eq.s32.totalorder %s21, 0
      %p123 = por %p121, %p122
      %p124 = scmp.ne.s32.totalorder %s116, %s118
      %p125 = scmp.eq.s32.totalorder %s26, 3
      %p126 = por %p124, %p125
      %p127 = scmp.ne.s32.totalorder %s118, %s119
      %p128 = scmp.eq.s32.totalorder %s26, 0
      %p129 = por %p127, %p128
      %p130 = scmp.ne.s32.totalorder %s118, %s119
      %p131 = scmp.eq.s32.totalorder %s27, 3
      %p132 = por %p130, %p131
      %p134 = scmp.ne.s32.totalorder %s119, %s133
      %p135 = scmp.eq.s32.totalorder %s27, 0
      %p136 = por %p134, %p135
      %s138 = sadd.s32 %s137, 1
      %p141 = scmp.eq.s32.totalorder %s21, 3
      %p142 = scmp.ne.s32.totalorder %s137, %s139
      %p143 = scmp.eq.s32.totalorder %s21, 0
      %p144 = por %p142, %p143
      %p145 = scmp.ne.s32.totalorder %s137, %s139
      %p146 = scmp.eq.s32.totalorder %s26, 3
      %p147 = por %p145, %p146
      %p148 = scmp.ne.s32.totalorder %s139, %s140
      %p149 = scmp.eq.s32.totalorder %s26, 0
      %p150 = por %p148, %p149
      %p151 = scmp.ne.s32.totalorder %s139, %s140
      %p152 = scmp.eq.s32.totalorder %s27, 3
      %p153 = por %p151, %p152
      %p155 = scmp.ne.s32.totalorder %s140, %s154
      %p156 = scmp.eq.s32.totalorder %s27, 0
      %p157 = por %p155, %p156
      %s159 = sadd.s32 %s158, 1
      %p162 = scmp.eq.s32.totalorder %s21, 3
      %p163 = scmp.ne.s32.totalorder %s158, %s160
      %p164 = scmp.eq.s32.totalorder %s21, 0
      %p165 = por %p163, %p164
      %p166 = scmp.ne.s32.totalorder %s158, %s160
      %p167 = scmp.eq.s32.totalorder %s26, 3
      %p168 = por %p166, %p167
      %p169 = scmp.ne.s32.totalorder %s160, %s161
      %p170 = scmp.eq.s32.totalorder %s26, 0
      %p171 = por %p169, %p170
      %p172 = scmp.ne.s32.totalorder %s160, %s161
      %p173 = scmp.eq.s32.totalorder %s27, 3
      %p174 = por %p172, %p173
      %p176 = scmp.ne.s32.totalorder %s161, %s175
      %p177 = scmp.eq.s32.totalorder %s27, 0
      %p178 = por %p176, %p177
      %s180 = sadd.s32 %s179, 1
      %p183 = scmp.eq.s32.totalorder %s21, 3
      %p184 = scmp.ne.s32.totalorder %s179, %s181
      %p185 = scmp.eq.s32.totalorder %s21, 0
      %p186 = por %p184, %p185
      %p187 = scmp.ne.s32.totalorder %s179, %s181
      %p188 = scmp.eq.s32.totalorder %s26, 3
      %p189 = por %p187, %p188
      %p190 = scmp.ne.s32.totalorder %s181, %s182
      %p191 = scmp.eq.s32.totalorder %s26, 0
      %p192 = por %p190, %p191
      %p193 = scmp.ne.s32.totalorder %s181, %s182
      %p194 = scmp.eq.s32.totalorder %s27, 3
      %p195 = por %p193, %p194
      %p197 = scmp.ne.s32.totalorder %s182, %s196
      %p198 = scmp.eq.s32.totalorder %s27, 0
      %p199 = por %p197, %p198
      %s201 = sadd.s32 %s200, 1
      %p204 = scmp.eq.s32.totalorder %s21, 3
      %p205 = scmp.ne.s32.totalorder %s200, %s202
      %p206 = scmp.eq.s32.totalorder %s21, 0
      %p207 = por %p205, %p206
      %p208 = scmp.ne.s32.totalorder %s200, %s202
      %p209 = scmp.eq.s32.totalorder %s26, 3
      %p210 = por %p208, %p209
      %p211 = scmp.ne.s32.totalorder %s202, %s203
      %p212 = scmp.eq.s32.totalorder %s26, 0
      %p213 = por %p211, %p212
      %p214 = scmp.ne.s32.totalorder %s202, %s203
      %p215 = scmp.eq.s32.totalorder %s27, 3
      %p216 = por %p214, %p215
      %p218 = scmp.ne.s32.totalorder %s203, %s217
      %p219 = scmp.eq.s32.totalorder %s27, 0
      %p220 = por %p218, %p219
      %s221 = ssub.s32 %s28, %s40
      %s222 = ssub.s32 %s29, %s36
      %s223 = sor.u32 %s221, %s222
      %p224 = scmp.eq.s32.totalorder %s223, 0
      %s226 = sadd.s32 %s225, 1
      %s227 = scalar_select %p224, %s225, %s226
      %p230 = pneg %p224
      %p231 = scmp.eq.s32.totalorder %s21, 3
      %p232 = por %p230, %p231
      %p233 = scmp.ne.s32.totalorder %s225, %s228
      %p234 = scmp.eq.s32.totalorder %s21, 0
      %p235 = por %p233, %p234
      %p236 = scmp.ne.s32.totalorder %s225, %s228
      %p237 = scmp.eq.s32.totalorder %s26, 3
      %p238 = por %p236, %p237
      %p239 = scmp.ne.s32.totalorder %s228, %s229
      %p240 = scmp.eq.s32.totalorder %s26, 0
      %p241 = por %p239, %p240
      %p242 = scmp.ne.s32.totalorder %s228, %s229
      %p243 = scmp.eq.s32.totalorder %s27, 3
      %p244 = por %p242, %p243
      %p246 = scmp.ne.s32.totalorder %s229, %s245
      %p247 = scmp.eq.s32.totalorder %s27, 0
      %p248 = por %p246, %p247
      %p249 = scmp.le.s32.totalorder 1, %s21
      %p250 = scmp.lt.s32.totalorder %s21, 5
      %p251 = pnand %p249, %p250
      %p252 = pneg %p251
      // Predicated region
      $region9: #{tpu_custom_call.1} parent=5 // pred_check
        _
      $region10: #{tpu_custom_call.1} parent=5 // pred_check_branch
        %254 = sbr.rel (%p251) target = $region12
      $region11: #{tpu_custom_call.1} parent=5 // pred_region
        %s255 = ssub.s32 %s21, 1
        // Predicated region
        $region13: #{tpu_custom_call.1} parent=11 // pred_check
          %p256 = pneg %p108
        $region14: #{tpu_custom_call.1} parent=11 // pred_check_branch
          %258 = sbr.rel (%p256) target = $region16
        $region15: #{tpu_custom_call.1} parent=11 // pred_region
          %260 = vsyncadd [#allocation8], 0
          %s261 = sshll.u32 %s2, 4
          %s262 = int_to_ptr.hbm [resolvable:$true] %s261
          %s263 = sshll.u32 [#allocation7], 4
          %s264 = int_to_ptr.vmem [resolvable:$true] %s263
          %269 = dma.hbm_to_vmem [thread:$0]  %s262, 9216, %s264, [#allocation8], 64, 64, 4
        $region16: #{tpu_custom_call.1} parent=11 // pred_fallthru
          _
        // Predicated region
        $region17: #{tpu_custom_call.1} parent=11 // pred_check
          %p270 = pneg %p129
        $region18: #{tpu_custom_call.1} parent=11 // pred_check_branch
          %272 = sbr.rel (%p270) target = $region20
        $region19: #{tpu_custom_call.1} parent=11 // pred_region
          _
        $region20: #{tpu_custom_call.1} parent=11 // pred_fallthru
          _
        // Predicated region
        $region21: #{tpu_custom_call.1} parent=11 // pred_check
          %p273 = pneg %p150
        $region22: #{tpu_custom_call.1} parent=11 // pred_check_branch
          %275 = sbr.rel (%p273) target = $region24
        $region23: #{tpu_custom_call.1} parent=11 // pred_region
          _
        $region24: #{tpu_custom_call.1} parent=11 // pred_fallthru
          _
        // Predicated region
        $region25: #{tpu_custom_call.1} parent=11 // pred_check
          %p276 = pneg %p171
        $region26: #{tpu_custom_call.1} parent=11 // pred_check_branch
          %278 = sbr.rel (%p276) target = $region28
        $region27: #{tpu_custom_call.1} parent=11 // pred_region
          %280 = vsyncadd [#allocation8], 0
          %s281 = sshll.u32 %s5, 4
          %s282 = int_to_ptr.hbm [resolvable:$true] %s281
          %s283 = sshll.u32 [#allocation9], 4
          %s284 = int_to_ptr.vmem [resolvable:$true] %s283
          %289 = dma.hbm_to_vmem [thread:$0]  %s282, 9216, %s284, [#allocation8], 64, 64, 4
        $region28: #{tpu_custom_call.1} parent=11 // pred_fallthru
          _
        // Predicated region
        $region29: #{tpu_custom_call.1} parent=11 // pred_check
          %p290 = pneg %p192
        $region30: #{tpu_custom_call.1} parent=11 // pred_check_branch
          %292 = sbr.rel (%p290) target = $region32
        $region31: #{tpu_custom_call.1} parent=11 // pred_region
          _
        $region32: #{tpu_custom_call.1} parent=11 // pred_fallthru
          _
        // Predicated region
        $region33: #{tpu_custom_call.1} parent=11 // pred_check
          %p293 = pneg %p213
        $region34: #{tpu_custom_call.1} parent=11 // pred_check_branch
          %295 = sbr.rel (%p293) target = $region36
        $region35: #{tpu_custom_call.1} parent=11 // pred_region
          _
        $region36: #{tpu_custom_call.1} parent=11 // pred_fallthru
          _
      $region12: #{tpu_custom_call.1} parent=5 // pred_fallthru
        _
      %p296 = scmp.lt.s32.totalorder %s21, 4
      // Predicated region
      $region37: #{tpu_custom_call.1} parent=5 // pred_check
        %p297 = pneg %p296
      $region38: #{tpu_custom_call.1} parent=5 // pred_check_branch
        %299 = sbr.rel (%p297) target = $region40
      $region39: #{tpu_custom_call.1} parent=5 // pred_region
        // Predicated region
        $region41: #{tpu_custom_call.1} parent=39 // pred_check
          %p300 = pneg %p55
        $region42: #{tpu_custom_call.1} parent=39 // pred_check_branch
          %302 = sbr.rel (%p300) target = $region44
        $region43: #{tpu_custom_call.1} parent=39 // pred_region
          %s303 = sand.u32 %s45, 1
          %s304 = scalar_lea.sflag [#allocation5], %s303
          %s305 = sand.u32 %s45, 1
          %s306 = smul.addr %s305, 112
          %s307 = scalar_lea.vmem [#allocation4], %s306
          %309 = vsyncadd %s304, 0
          %s310 = smul.addr %s29, 28
          %s311 = smul.addr %s28, 56
          %s312 = sadd.s32 %s310, %s311
          %s313 = smul.addr %s312, 4
          %s314 = scalar_lea.hbm %s0, %s313
          %s315 = sshll.u32 %s314, 4
          %s316 = int_to_ptr.hbm [resolvable:$true] %s315
          %s317 = sshll.u32 %s307, 4
          %s318 = int_to_ptr.vmem [resolvable:$true] %s317
          %323 = dma.hbm_to_vmem [thread:$0]  %s316, 1792, %s318, %s304, 64, 64, 4
        $region44: #{tpu_custom_call.1} parent=39 // pred_fallthru
          _
        // Predicated region
        $region45: #{tpu_custom_call.1} parent=39 // pred_check
          %p324 = pneg %p81
        $region46: #{tpu_custom_call.1} parent=39 // pred_check_branch
          %326 = sbr.rel (%p324) target = $region48
        $region47: #{tpu_custom_call.1} parent=39 // pred_region
          %p327 = scmp.lt.s32.totalorder %s29, 1
          %s328 = scalar_select %p327, %s29, 1
          %s329 = smul.addr %s328, 23
          %s330 = smul.addr %s329, 8
          %s331 = scalar_lea.vmem %s1, %s330
        $region48: #{tpu_custom_call.1} parent=39 // pred_fallthru
          _
      $region40: #{tpu_custom_call.1} parent=5 // pred_fallthru
        _
      %p332 = scmp.le.s32.totalorder 1, %s21
      %p333 = scmp.lt.s32.totalorder %s21, 5
      %p334 = pnand %p332, %p333
      %p335 = pneg %p334
      // Predicated region
      $region49: #{tpu_custom_call.1} parent=5 // pred_check
        _
      $region50: #{tpu_custom_call.1} parent=5 // pred_check_branch
        %337 = sbr.rel (%p334) target = $region52
      $region51: #{tpu_custom_call.1} parent=5 // pred_region
        %s338 = ssub.s32 %s21, 1
        %s339 = sand.u32 %s48, 1
        %s340 = scalar_lea.sflag [#allocation5], %s339
        %s341 = sand.u32 %s48, 1
        %s342 = smul.addr %s341, 112
        %s343 = scalar_lea.vmem [#allocation4], %s342
        // Predicated region
        $region53: #{tpu_custom_call.1} parent=51 // pred_check
          %p344 = pneg %p61
        $region54: #{tpu_custom_call.1} parent=51 // pred_check_branch
          %346 = sbr.rel (%p344) target = $region56
        $region55: #{tpu_custom_call.1} parent=51 // pred_region
          %348 = dma.done %s340, 1792
        $region56: #{tpu_custom_call.1} parent=51 // pred_fallthru
          _
        // Predicated region
        $region57: #{tpu_custom_call.1} parent=51 // pred_check
          %p349 = pneg %p108
        $region58: #{tpu_custom_call.1} parent=51 // pred_check_branch
          %351 = sbr.rel (%p349) target = $region60
        $region59: #{tpu_custom_call.1} parent=51 // pred_region
          %353 = dma.done [#allocation8], 9216
        $region60: #{tpu_custom_call.1} parent=51 // pred_fallthru
          _
        // Predicated region
        $region61: #{tpu_custom_call.1} parent=51 // pred_check
          %p354 = pneg %p171
        $region62: #{tpu_custom_call.1} parent=51 // pred_check_branch
          %356 = sbr.rel (%p354) target = $region64
        $region63: #{tpu_custom_call.1} parent=51 // pred_region
          %358 = dma.done [#allocation8], 9216
        $region64: #{tpu_custom_call.1} parent=51 // pred_fallthru
          _
        %s359 = sand.u32 %s48, 1
        %s360 = scalar_lea.sflag [#allocation5], %s359
        %s361 = sand.u32 %s48, 1
        %s362 = smul.addr %s361, 112
        %s363 = scalar_lea.vmem [#allocation4], %s362
        %p364 = pneg %p61
        %p365 = pneg %p58
        %p366 = scmp.lt.s32.totalorder %s31, 1
        %s367 = scalar_select %p366, %s31, 1
        %s368 = smul.addr %s367, 23
        %s369 = smul.addr %s368, 8
        %s370 = scalar_lea.vmem %s1, %s369
        %p371 = pneg %p87
        %p372 = pneg %p84
        %p373 = pneg %p108
        %p374 = pneg %p105
        %p375 = pneg %p129
        %p376 = pneg %p126
        %p377 = pneg %p150
        %p378 = pneg %p147
        %p379 = pneg %p171
        %p380 = pneg %p168
        %p381 = pneg %p192
        %p382 = pneg %p189
        %p383 = pneg %p213
        %p384 = pneg %p210
        %p385 = pneg %p241
        %p386 = pneg %p238
        %s387 = sand.u32 %s228, 1
        %s388 = scalar_lea.sflag [#allocation6], %s387
        %s389 = sand.u32 %s228, 1
        %s390 = smul.addr %s389, 144
        %s391 = scalar_lea.vmem [#allocation10], %s390
        %p392 = scmp.lt.s32.totalorder %s31, 1
        %s393 = scalar_select %p392, %s31, 1
        %s394 = smul.addr %s393, 23
        %s395 = smul.addr %s394, 8
        %s396 = scalar_lea.vmem %s1, %s395
        %v398 = vld [vmem:[%s343] sm:$0xf]
        %v399 = vld [vmem:[%s343 + $0x4] sm:$0xf]
        %v400 = vld [vmem:[%s343 + $0x8] sm:$0xf]
        %v401 = vld [vmem:[%s343 + $0xc] sm:$0xf]
        %v402 = vld [vmem:[%s343 + $0x10] sm:$0xf]
        %v403 = vld [vmem:[%s343 + $0x14] sm:$0xf]
        %v404 = vld [vmem:[%s343 + $0x18] sm:$0xf]
        %v405 = vld [vmem:[%s343 + $0x1c] sm:$0xf]
        %v406 = vld [vmem:[%s343 + $0x20] sm:$0xf]
        %v407 = vld [vmem:[%s343 + $0x24] sm:$0xf]
        %v408 = vld [vmem:[%s343 + $0x28] sm:$0xf]
        %v409 = vld [vmem:[%s343 + $0x2c] sm:$0xf]
        %v410 = vld [vmem:[%s343 + $0x30] sm:$0xf]
        %v411 = vld [vmem:[%s343 + $0x34] sm:$0xf]
        %v412 = vld [vmem:[%s343 + $0x38] sm:$0xf]
        %v413 = vld [vmem:[%s343 + $0x3c] sm:$0xf]
        %v414 = vld [vmem:[%s343 + $0x40] sm:$0xf]
        %v415 = vld [vmem:[%s343 + $0x44] sm:$0xf]
        %v416 = vld [vmem:[%s343 + $0x48] sm:$0xf]
        %v417 = vld [vmem:[%s343 + $0x4c] sm:$0xf]
        %v418 = vld [vmem:[%s343 + $0x50] sm:$0xf]
        %v419 = vld [vmem:[%s343 + $0x54] sm:$0xf]
        %v420 = vld [vmem:[%s343 + $0x58] sm:$0x3]
        %v421 = vld [vmem:[#allocation7] sm:$0xf]
        %v422 = vld [vmem:[#allocation7 + $0x4] sm:$0xf]
        %v423 = vld [vmem:[#allocation7 + $0x8] sm:$0xf]
        %v424 = vld [vmem:[#allocation7 + $0xc] sm:$0xf]
        %v425 = vld [vmem:[#allocation7 + $0x10] sm:$0xf]
        %v426 = vld [vmem:[#allocation7 + $0x14] sm:$0xf]
        %v427 = vld [vmem:[#allocation7 + $0x18] sm:$0xf]
        %v428 = vld [vmem:[#allocation7 + $0x1c] sm:$0xf]
        %v429 = vld [vmem:[#allocation7 + $0x20] sm:$0xf]
        %v430 = vld [vmem:[#allocation7 + $0x24] sm:$0xf]
        %v431 = vld [vmem:[#allocation7 + $0x28] sm:$0xf]
        %v432 = vld [vmem:[#allocation7 + $0x2c] sm:$0xf]
        %v433 = vld [vmem:[#allocation7 + $0x30] sm:$0xf]
        %v434 = vld [vmem:[#allocation7 + $0x34] sm:$0xf]
        %v435 = vld [vmem:[#allocation7 + $0x38] sm:$0xf]
        %v436 = vld [vmem:[#allocation7 + $0x3c] sm:$0xf]
        %v460 = vunpack.c.l.b16 %v398
        %v461 = vunpack.c.l.b16 %v399
        %v462 = vunpack.c.l.b16 %v400
        %v463 = vunpack.c.l.b16 %v401
        %v464 = vunpack.c.l.b16 %v402
        %v465 = vunpack.c.l.b16 %v403
        %v466 = vunpack.c.l.b16 %v404
        %v467 = vunpack.c.l.b16 %v405
        %v468 = vunpack.c.l.b16 %v406
        %v469 = vunpack.c.l.b16 %v407
        %v470 = vunpack.c.l.b16 %v408
        %v471 = vunpack.c.l.b16 %v409
        %v472 = vunpack.c.l.b16 %v410
        %v473 = vunpack.c.l.b16 %v411
        %v474 = vunpack.c.l.b16 %v412
        %v475 = vunpack.c.l.b16 %v413
        %v476 = vunpack.c.l.b16 %v414
        %v477 = vunpack.c.l.b16 %v415
        %v478 = vunpack.c.l.b16 %v416
        %v479 = vunpack.c.l.b16 %v417
        %v480 = vunpack.c.l.b16 %v418
        %v481 = vunpack.c.l.b16 %v419
        %v482 = vunpack.c.l.b16 %v420
        %v483 = vpack.c.b16 %v461, %v460
        %v484 = vpack.c.b16 %v463, %v462
        %v485 = vpack.c.b16 %v465, %v464
        %v486 = vpack.c.b16 %v467, %v466
        %v487 = vpack.c.b16 %v469, %v468
        %v488 = vpack.c.b16 %v471, %v470
        %v489 = vpack.c.b16 %v473, %v472
        %v490 = vpack.c.b16 %v475, %v474
        %v491 = vpack.c.b16 %v477, %v476
        %v492 = vpack.c.b16 %v479, %v478
        %v493 = vpack.c.b16 %v481, %v480
        %v494 = vpack.c.b16 %v482, %v482
        %v523 = vunpack.c.l.b16 %v421
        %v524 = vunpack.c.l.b16 %v422
        %v525 = vunpack.c.l.b16 %v423
        %v526 = vunpack.c.l.b16 %v424
        %v527 = vunpack.c.l.b16 %v425
        %v528 = vunpack.c.l.b16 %v426
        %v529 = vunpack.c.l.b16 %v427
        %v530 = vunpack.c.l.b16 %v428
        %v531 = vunpack.c.l.b16 %v429
        %v532 = vunpack.c.l.b16 %v430
        %v533 = vunpack.c.l.b16 %v431
        %v534 = vunpack.c.l.b16 %v432
        %v535 = vunpack.c.l.b16 %v433
        %v536 = vunpack.c.l.b16 %v434
        %v537 = vunpack.c.l.b16 %v435
        %v538 = vunpack.c.l.b16 %v436
        %v539 = vpack.c.b16 %v524, %v523
        %v540 = vpack.c.b16 %v526, %v525
        %v541 = vpack.c.b16 %v528, %v527
        %v542 = vpack.c.b16 %v530, %v529
        %v543 = vpack.c.b16 %v532, %v531
        %v544 = vpack.c.b16 %v534, %v533
        %v545 = vpack.c.b16 %v536, %v535
        %v546 = vpack.c.b16 %v538, %v537
        %555 = vmatpush.bf16.msra.mxu0 %v546
        %556 = vmatpush.bf16.msra.mxu0 %v545
        %557 = vmatpush.bf16.msra.mxu0 %v544
        %558 = vmatpush.bf16.msra.mxu0 %v543
        %559 = vmatpush.bf16.msra.mxu0 %v542
        %560 = vmatpush.bf16.msra.mxu0 %v541
        %561 = vmatpush.bf16.msra.mxu0 %v540
        %562 = vmatpush.bf16.msra.mxu0 %v539
        %563 = vmatmul.bf16.gmra.mxu0 %v483
        %v564 = vpop.f32.mrf.mxu0
        %v565 = vadd.f32 0.0, %v564
        %v566 = vpop.f32.mrf.mxu0
        %v567 = vadd.f32 0.0, %v566
        %568 = vmatmul.bf16.gmra.mxu0 %v484
        %v569 = vpop.f32.mrf.mxu0
        %v570 = vadd.f32 0.0, %v569
        %v571 = vpop.f32.mrf.mxu0
        %v572 = vadd.f32 0.0, %v571
        %573 = vmatmul.bf16.gmra.mxu0 %v485
        %v574 = vpop.f32.mrf.mxu0
        %v575 = vadd.f32 0.0, %v574
        %v576 = vpop.f32.mrf.mxu0
        %v577 = vadd.f32 0.0, %v576
        %578 = vmatmul.bf16.gmra.mxu0 %v486
        %v579 = vpop.f32.mrf.mxu0
        %v580 = vadd.f32 0.0, %v579
        %v581 = vpop.f32.mrf.mxu0
        %v582 = vadd.f32 0.0, %v581
        %583 = vmatmul.bf16.gmra.mxu0 %v487
        %v584 = vpop.f32.mrf.mxu0
        %v585 = vadd.f32 0.0, %v584
        %v586 = vpop.f32.mrf.mxu0
        %v587 = vadd.f32 0.0, %v586
        %588 = vmatmul.bf16.gmra.mxu0 %v488
        %v589 = vpop.f32.mrf.mxu0
        %v590 = vadd.f32 0.0, %v589
        %v591 = vpop.f32.mrf.mxu0
        %v592 = vadd.f32 0.0, %v591
        %593 = vmatmul.bf16.gmra.mxu0 %v489
        %v594 = vpop.f32.mrf.mxu0
        %v595 = vadd.f32 0.0, %v594
        %v596 = vpop.f32.mrf.mxu0
        %v597 = vadd.f32 0.0, %v596
        %598 = vmatmul.bf16.gmra.mxu0 %v490
        %v599 = vpop.f32.mrf.mxu0
        %v600 = vadd.f32 0.0, %v599
        %v601 = vpop.f32.mrf.mxu0
        %v602 = vadd.f32 0.0, %v601
        %603 = vmatmul.bf16.gmra.mxu0 %v491
        %v604 = vpop.f32.mrf.mxu0
        %v605 = vadd.f32 0.0, %v604
        %v606 = vpop.f32.mrf.mxu0
        %v607 = vadd.f32 0.0, %v606
        %608 = vmatmul.bf16.gmra.mxu0 %v492
        %v609 = vpop.f32.mrf.mxu0
        %v610 = vadd.f32 0.0, %v609
        %v611 = vpop.f32.mrf.mxu0
        %v612 = vadd.f32 0.0, %v611
        %613 = vmatmul.bf16.gmra.mxu0 %v493
        %v614 = vpop.f32.mrf.mxu0
        %v615 = vadd.f32 0.0, %v614
        %v616 = vpop.f32.mrf.mxu0
        %v617 = vadd.f32 0.0, %v616
        %618 = vmatmul.bf16.gmra.mxu0 %v494
        %v619 = vpop.f32.mrf.mxu0
        %v620 = vadd.f32 0.0, %v619
        %v621 = vpop.f32.mrf.mxu0
        %622 = vdwg.mxu0
        %623 = vst [vmem:[#allocation2] sm:$0xff] %v565
        %624 = vst [vmem:[#allocation2 + $0x8] sm:$0xff] %v567
        %625 = vst [vmem:[#allocation2 + $0x10] sm:$0xff] %v570
        %626 = vst [vmem:[#allocation2 + $0x18] sm:$0xff] %v572
        %627 = vst [vmem:[#allocation2 + $0x20] sm:$0xff] %v575
        %628 = vst [vmem:[#allocation2 + $0x28] sm:$0xff] %v577
        %629 = vst [vmem:[#allocation2 + $0x30] sm:$0xff] %v580
        %630 = vst [vmem:[#allocation2 + $0x38] sm:$0xff] %v582
        %631 = vst [vmem:[#allocation2 + $0x40] sm:$0xff] %v585
        %632 = vst [vmem:[#allocation2 + $0x48] sm:$0xff] %v587
        %633 = vst [vmem:[#allocation2 + $0x50] sm:$0xff] %v590
        %634 = vst [vmem:[#allocation2 + $0x58] sm:$0xff] %v592
        %635 = vst [vmem:[#allocation2 + $0x60] sm:$0xff] %v595
        %636 = vst [vmem:[#allocation2 + $0x68] sm:$0xff] %v597
        %637 = vst [vmem:[#allocation2 + $0x70] sm:$0xff] %v600
        %638 = vst [vmem:[#allocation2 + $0x78] sm:$0xff] %v602
        %639 = vst [vmem:[#allocation2 + $0x80] sm:$0xff] %v605
        %640 = vst [vmem:[#allocation2 + $0x88] sm:$0xff] %v607
        %641 = vst [vmem:[#allocation2 + $0x90] sm:$0xff] %v610
        %642 = vst [vmem:[#allocation2 + $0x98] sm:$0xff] %v612
        %643 = vst [vmem:[#allocation2 + $0xa0] sm:$0xff] %v615
        %644 = vst [vmem:[#allocation2 + $0xa8] sm:$0xff] %v617
        %645 = vst [vmem:[#allocation2 + $0xb0] sm:$0xf] %v620
        %v646 = vld [vmem:[%s343] sm:$0xf]
        %v647 = vld [vmem:[%s343 + $0x4] sm:$0xf]
        %v648 = vld [vmem:[%s343 + $0x8] sm:$0xf]
        %v649 = vld [vmem:[%s343 + $0xc] sm:$0xf]
        %v650 = vld [vmem:[%s343 + $0x10] sm:$0xf]
        %v651 = vld [vmem:[%s343 + $0x14] sm:$0xf]
        %v652 = vld [vmem:[%s343 + $0x18] sm:$0xf]
        %v653 = vld [vmem:[%s343 + $0x1c] sm:$0xf]
        %v654 = vld [vmem:[%s343 + $0x20] sm:$0xf]
        %v655 = vld [vmem:[%s343 + $0x24] sm:$0xf]
        %v656 = vld [vmem:[%s343 + $0x28] sm:$0xf]
        %v657 = vld [vmem:[%s343 + $0x2c] sm:$0xf]
        %v658 = vld [vmem:[%s343 + $0x30] sm:$0xf]
        %v659 = vld [vmem:[%s343 + $0x34] sm:$0xf]
        %v660 = vld [vmem:[%s343 + $0x38] sm:$0xf]
        %v661 = vld [vmem:[%s343 + $0x3c] sm:$0xf]
        %v662 = vld [vmem:[%s343 + $0x40] sm:$0xf]
        %v663 = vld [vmem:[%s343 + $0x44] sm:$0xf]
        %v664 = vld [vmem:[%s343 + $0x48] sm:$0xf]
        %v665 = vld [vmem:[%s343 + $0x4c] sm:$0xf]
        %v666 = vld [vmem:[%s343 + $0x50] sm:$0xf]
        %v667 = vld [vmem:[%s343 + $0x54] sm:$0xf]
        %v668 = vld [vmem:[%s343 + $0x58] sm:$0x7]
        %s669 = scalar_lea.vmem [#allocation7], 64
        %v670 = vld [vmem:[%s669] sm:$0xf]
        %v671 = vld [vmem:[%s669 + $0x4] sm:$0xf]
        %v672 = vld [vmem:[%s669 + $0x8] sm:$0xf]
        %v673 = vld [vmem:[%s669 + $0xc] sm:$0xf]
        %v674 = vld [vmem:[%s669 + $0x10] sm:$0xf]
        %v675 = vld [vmem:[%s669 + $0x14] sm:$0xf]
        %v676 = vld [vmem:[%s669 + $0x18] sm:$0xf]
        %v677 = vld [vmem:[%s669 + $0x1c] sm:$0xf]
        %v678 = vld [vmem:[%s669 + $0x20] sm:$0xf]
        %v679 = vld [vmem:[%s669 + $0x24] sm:$0xf]
        %v680 = vld [vmem:[%s669 + $0x28] sm:$0xf]
        %v681 = vld [vmem:[%s669 + $0x2c] sm:$0xf]
        %v682 = vld [vmem:[%s669 + $0x30] sm:$0xf]
        %v683 = vld [vmem:[%s669 + $0x34] sm:$0xf]
        %v684 = vld [vmem:[%s669 + $0x38] sm:$0xf]
        %v685 = vld [vmem:[%s669 + $0x3c] sm:$0xf]
        %v709 = vunpack.c.l.b16 %v646
        %v710 = vunpack.c.l.b16 %v647
        %v711 = vunpack.c.l.b16 %v648
        %v712 = vunpack.c.l.b16 %v649
        %v713 = vunpack.c.l.b16 %v650
        %v714 = vunpack.c.l.b16 %v651
        %v715 = vunpack.c.l.b16 %v652
        %v716 = vunpack.c.l.b16 %v653
        %v717 = vunpack.c.l.b16 %v654
        %v718 = vunpack.c.l.b16 %v655
        %v719 = vunpack.c.l.b16 %v656
        %v720 = vunpack.c.l.b16 %v657
        %v721 = vunpack.c.l.b16 %v658
        %v722 = vunpack.c.l.b16 %v659
        %v723 = vunpack.c.l.b16 %v660
        %v724 = vunpack.c.l.b16 %v661
        %v725 = vunpack.c.l.b16 %v662
        %v726 = vunpack.c.l.b16 %v663
        %v727 = vunpack.c.l.b16 %v664
        %v728 = vunpack.c.l.b16 %v665
        %v729 = vunpack.c.l.b16 %v666
        %v730 = vunpack.c.l.b16 %v667
        %v731 = vunpack.c.l.b16 %v668
        %v732 = vpack.c.b16 %v710, %v709
        %v733 = vpack.c.b16 %v712, %v711
        %v734 = vpack.c.b16 %v714, %v713
        %v735 = vpack.c.b16 %v716, %v715
        %v736 = vpack.c.b16 %v718, %v717
        %v737 = vpack.c.b16 %v720, %v719
        %v738 = vpack.c.b16 %v722, %v721
        %v739 = vpack.c.b16 %v724, %v723
        %v740 = vpack.c.b16 %v726, %v725
        %v741 = vpack.c.b16 %v728, %v727
        %v742 = vpack.c.b16 %v730, %v729
        %v743 = vpack.c.b16 %v731, %v731
        %vm744 = vsmask.f32 7424
        %v746 = vshrl.u32 %v732, 16
        %v748 = vshll.u32 %v732, 16
        %v750 = vrot.slane %v748, 1
        %v751 = vor.u32 %v746, %v750
        %v753 = vshll.u32 %v733, 16
        %v755 = vrot.slane %v753, 1
        %v756 = vsel %vm744, %v751, %v755
        %v757 = vshrl.u32 %v733, 16
        %v759 = vor.u32 %v757, %v755
        %v761 = vshll.u32 %v734, 16
        %v763 = vrot.slane %v761, 1
        %v764 = vsel %vm744, %v759, %v763
        %v765 = vshrl.u32 %v734, 16
        %v767 = vor.u32 %v765, %v763
        %v769 = vshll.u32 %v735, 16
        %v771 = vrot.slane %v769, 1
        %v772 = vsel %vm744, %v767, %v771
        %v773 = vshrl.u32 %v735, 16
        %v775 = vor.u32 %v773, %v771
        %v777 = vshll.u32 %v736, 16
        %v779 = vrot.slane %v777, 1
        %v780 = vsel %vm744, %v775, %v779
        %v781 = vshrl.u32 %v736, 16
        %v783 = vor.u32 %v781, %v779
        %v785 = vshll.u32 %v737, 16
        %v787 = vrot.slane %v785, 1
        %v788 = vsel %vm744, %v783, %v787
        %v789 = vshrl.u32 %v737, 16
        %v791 = vor.u32 %v789, %v787
        %v793 = vshll.u32 %v738, 16
        %v795 = vrot.slane %v793, 1
        %v796 = vsel %vm744, %v791, %v795
        %v797 = vshrl.u32 %v738, 16
        %v799 = vor.u32 %v797, %v795
        %v801 = vshll.u32 %v739, 16
        %v803 = vrot.slane %v801, 1
        %v804 = vsel %vm744, %v799, %v803
        %v805 = vshrl.u32 %v739, 16
        %v807 = vor.u32 %v805, %v803
        %v809 = vshll.u32 %v740, 16
        %v811 = vrot.slane %v809, 1
        %v812 = vsel %vm744, %v807, %v811
        %v813 = vshrl.u32 %v740, 16
        %v815 = vor.u32 %v813, %v811
        %v817 = vshll.u32 %v741, 16
        %v819 = vrot.slane %v817, 1
        %v820 = vsel %vm744, %v815, %v819
        %v821 = vshrl.u32 %v741, 16
        %v823 = vor.u32 %v821, %v819
        %v825 = vshll.u32 %v742, 16
        %v827 = vrot.slane %v825, 1
        %v828 = vsel %vm744, %v823, %v827
        %v829 = vshrl.u32 %v742, 16
        %v831 = vor.u32 %v829, %v827
        %v833 = vshll.u32 %v743, 16
        %v835 = vrot.slane %v833, 1
        %v836 = vsel %vm744, %v831, %v835
        %v837 = vshrl.u32 %v743, 16
        %v839 = vor.u32 %v837, %v835
        %v868 = vunpack.c.l.b16 %v670
        %v869 = vunpack.c.l.b16 %v671
        %v870 = vunpack.c.l.b16 %v672
        %v871 = vunpack.c.l.b16 %v673
        %v872 = vunpack.c.l.b16 %v674
        %v873 = vunpack.c.l.b16 %v675
        %v874 = vunpack.c.l.b16 %v676
        %v875 = vunpack.c.l.b16 %v677
        %v876 = vunpack.c.l.b16 %v678
        %v877 = vunpack.c.l.b16 %v679
        %v878 = vunpack.c.l.b16 %v680
        %v879 = vunpack.c.l.b16 %v681
        %v880 = vunpack.c.l.b16 %v682
        %v881 = vunpack.c.l.b16 %v683
        %v882 = vunpack.c.l.b16 %v684
        %v883 = vunpack.c.l.b16 %v685
        %v884 = vpack.c.b16 %v869, %v868
        %v885 = vpack.c.b16 %v871, %v870
        %v886 = vpack.c.b16 %v873, %v872
        %v887 = vpack.c.b16 %v875, %v874
        %v888 = vpack.c.b16 %v877, %v876
        %v889 = vpack.c.b16 %v879, %v878
        %v890 = vpack.c.b16 %v881, %v880
        %v891 = vpack.c.b16 %v883, %v882
        %900 = vmatpush.bf16.msra.mxu0 %v891
        %901 = vmatpush.bf16.msra.mxu0 %v890
        %902 = vmatpush.bf16.msra.mxu0 %v889
        %903 = vmatpush.bf16.msra.mxu0 %v888
        %904 = vmatpush.bf16.msra.mxu0 %v887
        %905 = vmatpush.bf16.msra.mxu0 %v886
        %906 = vmatpush.bf16.msra.mxu0 %v885
        %907 = vmatpush.bf16.msra.mxu0 %v884
        %908 = vmatmul.bf16.gmra.mxu0 %v756
        %v909 = vpop.f32.mrf.mxu0
        %v910 = vadd.f32 0.0, %v909
        %v911 = vpop.f32.mrf.mxu0
        %v912 = vadd.f32 0.0, %v911
        %913 = vmatmul.bf16.gmra.mxu0 %v764
        %v914 = vpop.f32.mrf.mxu0
        %v915 = vadd.f32 0.0, %v914
        %v916 = vpop.f32.mrf.mxu0
        %v917 = vadd.f32 0.0, %v916
        %918 = vmatmul.bf16.gmra.mxu0 %v772
        %v919 = vpop.f32.mrf.mxu0
        %v920 = vadd.f32 0.0, %v919
        %v921 = vpop.f32.mrf.mxu0
        %v922 = vadd.f32 0.0, %v921
        %923 = vmatmul.bf16.gmra.mxu0 %v780
        %v924 = vpop.f32.mrf.mxu0
        %v925 = vadd.f32 0.0, %v924
        %v926 = vpop.f32.mrf.mxu0
        %v927 = vadd.f32 0.0, %v926
        %928 = vmatmul.bf16.gmra.mxu0 %v788
        %v929 = vpop.f32.mrf.mxu0
        %v930 = vadd.f32 0.0, %v929
        %v931 = vpop.f32.mrf.mxu0
        %v932 = vadd.f32 0.0, %v931
        %933 = vmatmul.bf16.gmra.mxu0 %v796
        %v934 = vpop.f32.mrf.mxu0
        %v935 = vadd.f32 0.0, %v934
        %v936 = vpop.f32.mrf.mxu0
        %v937 = vadd.f32 0.0, %v936
        %938 = vmatmul.bf16.gmra.mxu0 %v804
        %v939 = vpop.f32.mrf.mxu0
        %v940 = vadd.f32 0.0, %v939
        %v941 = vpop.f32.mrf.mxu0
        %v942 = vadd.f32 0.0, %v941
        %943 = vmatmul.bf16.gmra.mxu0 %v812
        %v944 = vpop.f32.mrf.mxu0
        %v945 = vadd.f32 0.0, %v944
        %v946 = vpop.f32.mrf.mxu0
        %v947 = vadd.f32 0.0, %v946
        %948 = vmatmul.bf16.gmra.mxu0 %v820
        %v949 = vpop.f32.mrf.mxu0
        %v950 = vadd.f32 0.0, %v949
        %v951 = vpop.f32.mrf.mxu0
        %v952 = vadd.f32 0.0, %v951
        %953 = vmatmul.bf16.gmra.mxu0 %v828
        %v954 = vpop.f32.mrf.mxu0
        %v955 = vadd.f32 0.0, %v954
        %v956 = vpop.f32.mrf.mxu0
        %v957 = vadd.f32 0.0, %v956
        %958 = vmatmul.bf16.gmra.mxu0 %v836
        %v959 = vpop.f32.mrf.mxu0
        %v960 = vadd.f32 0.0, %v959
        %v961 = vpop.f32.mrf.mxu0
        %v962 = vadd.f32 0.0, %v961
        %963 = vmatmul.bf16.gmra.mxu0 %v839
        %v964 = vpop.f32.mrf.mxu0
        %v965 = vadd.f32 0.0, %v964
        %v966 = vpop.f32.mrf.mxu0
        %967 = vdwg.mxu0
        %v968 = vld [vmem:[#allocation2] sm:$0xff]
        %v969 = vld [vmem:[#allocation2 + $0x8] sm:$0xff]
        %v970 = vld [vmem:[#allocation2 + $0x10] sm:$0xff]
        %v971 = vld [vmem:[#allocation2 + $0x18] sm:$0xff]
        %v972 = vld [vmem:[#allocation2 + $0x20] sm:$0xff]
        %v973 = vld [vmem:[#allocation2 + $0x28] sm:$0xff]
        %v974 = vld [vmem:[#allocation2 + $0x30] sm:$0xff]
        %v975 = vld [vmem:[#allocation2 + $0x38] sm:$0xff]
        %v976 = vld [vmem:[#allocation2 + $0x40] sm:$0xff]
        %v977 = vld [vmem:[#allocation2 + $0x48] sm:$0xff]
        %v978 = vld [vmem:[#allocation2 + $0x50] sm:$0xff]
        %v979 = vld [vmem:[#allocation2 + $0x58] sm:$0xff]
        %v980 = vld [vmem:[#allocation2 + $0x60] sm:$0xff]
        %v981 = vld [vmem:[#allocation2 + $0x68] sm:$0xff]
        %v982 = vld [vmem:[#allocation2 + $0x70] sm:$0xff]
        %v983 = vld [vmem:[#allocation2 + $0x78] sm:$0xff]
        %v984 = vld [vmem:[#allocation2 + $0x80] sm:$0xff]
        %v985 = vld [vmem:[#allocation2 + $0x88] sm:$0xff]
        %v986 = vld [vmem:[#allocation2 + $0x90] sm:$0xff]
        %v987 = vld [vmem:[#allocation2 + $0x98] sm:$0xff]
        %v988 = vld [vmem:[#allocation2 + $0xa0] sm:$0xff]
        %v989 = vld [vmem:[#allocation2 + $0xa8] sm:$0xff]
        %v990 = vld [vmem:[#allocation2 + $0xb0] sm:$0xf]
        %v991 = vadd.f32 %v968, %v910
        %v992 = vadd.f32 %v969, %v912
        %v993 = vadd.f32 %v970, %v915
        %v994 = vadd.f32 %v971, %v917
        %v995 = vadd.f32 %v972, %v920
        %v996 = vadd.f32 %v973, %v922
        %v997 = vadd.f32 %v974, %v925
        %v998 = vadd.f32 %v975, %v927
        %v999 = vadd.f32 %v976, %v930
        %v1000 = vadd.f32 %v977, %v932
        %v1001 = vadd.f32 %v978, %v935
        %v1002 = vadd.f32 %v979, %v937
        %v1003 = vadd.f32 %v980, %v940
        %v1004 = vadd.f32 %v981, %v942
        %v1005 = vadd.f32 %v982, %v945
        %v1006 = vadd.f32 %v983, %v947
        %v1007 = vadd.f32 %v984, %v950
        %v1008 = vadd.f32 %v985, %v952
        %v1009 = vadd.f32 %v986, %v955
        %v1010 = vadd.f32 %v987, %v957
        %v1011 = vadd.f32 %v988, %v960
        %v1012 = vadd.f32 %v989, %v962
        %v1013 = vadd.f32 %v990, %v965
        %1014 = vst [vmem:[#allocation2] sm:$0xff] %v991
        %1015 = vst [vmem:[#allocation2 + $0x8] sm:$0xff] %v992
        %1016 = vst [vmem:[#allocation2 + $0x10] sm:$0xff] %v993
        %1017 = vst [vmem:[#allocation2 + $0x18] sm:$0xff] %v994
        %1018 = vst [vmem:[#allocation2 + $0x20] sm:$0xff] %v995
        %1019 = vst [vmem:[#allocation2 + $0x28] sm:$0xff] %v996
        %1020 = vst [vmem:[#allocation2 + $0x30] sm:$0xff] %v997
        %1021 = vst [vmem:[#allocation2 + $0x38] sm:$0xff] %v998
        %1022 = vst [vmem:[#allocation2 + $0x40] sm:$0xff] %v999
        %1023 = vst [vmem:[#allocation2 + $0x48] sm:$0xff] %v1000
        %1024 = vst [vmem:[#allocation2 + $0x50] sm:$0xff] %v1001
        %1025 = vst [vmem:[#allocation2 + $0x58] sm:$0xff] %v1002
        %1026 = vst [vmem:[#allocation2 + $0x60] sm:$0xff] %v1003
        %1027 = vst [vmem:[#allocation2 + $0x68] sm:$0xff] %v1004
        %1028 = vst [vmem:[#allocation2 + $0x70] sm:$0xff] %v1005
        %1029 = vst [vmem:[#allocation2 + $0x78] sm:$0xff] %v1006
        %1030 = vst [vmem:[#allocation2 + $0x80] sm:$0xff] %v1007
        %1031 = vst [vmem:[#allocation2 + $0x88] sm:$0xff] %v1008
        %1032 = vst [vmem:[#allocation2 + $0x90] sm:$0xff] %v1009
        %1033 = vst [vmem:[#allocation2 + $0x98] sm:$0xff] %v1010
        %1034 = vst [vmem:[#allocation2 + $0xa0] sm:$0xff] %v1011
        %1035 = vst [vmem:[#allocation2 + $0xa8] sm:$0xff] %v1012
        %1036 = vst [vmem:[#allocation2 + $0xb0] sm:$0xf] %v1013
        %v1037 = vld [vmem:[%s343] sm:$0xe]
        %v1038 = vld [vmem:[%s343 + $0x4] sm:$0xf]
        %v1039 = vld [vmem:[%s343 + $0x8] sm:$0xf]
        %v1040 = vld [vmem:[%s343 + $0xc] sm:$0xf]
        %v1041 = vld [vmem:[%s343 + $0x10] sm:$0xf]
        %v1042 = vld [vmem:[%s343 + $0x14] sm:$0xf]
        %v1043 = vld [vmem:[%s343 + $0x18] sm:$0xf]
        %v1044 = vld [vmem:[%s343 + $0x1c] sm:$0xf]
        %v1045 = vld [vmem:[%s343 + $0x20] sm:$0xf]
        %v1046 = vld [vmem:[%s343 + $0x24] sm:$0xf]
        %v1047 = vld [vmem:[%s343 + $0x28] sm:$0xf]
        %v1048 = vld [vmem:[%s343 + $0x2c] sm:$0xf]
        %v1049 = vld [vmem:[%s343 + $0x30] sm:$0xf]
        %v1050 = vld [vmem:[%s343 + $0x34] sm:$0xf]
        %v1051 = vld [vmem:[%s343 + $0x38] sm:$0xf]
        %v1052 = vld [vmem:[%s343 + $0x3c] sm:$0xf]
        %v1053 = vld [vmem:[%s343 + $0x40] sm:$0xf]
        %v1054 = vld [vmem:[%s343 + $0x44] sm:$0xf]
        %v1055 = vld [vmem:[%s343 + $0x48] sm:$0xf]
        %v1056 = vld [vmem:[%s343 + $0x4c] sm:$0xf]
        %v1057 = vld [vmem:[%s343 + $0x50] sm:$0xf]
        %v1058 = vld [vmem:[%s343 + $0x54] sm:$0xf]
        %v1059 = vld [vmem:[%s343 + $0x58] sm:$0x7]
        %s1060 = scalar_lea.vmem [#allocation7], 128
        %v1061 = vld [vmem:[%s1060] sm:$0xf]
        %v1062 = vld [vmem:[%s1060 + $0x4] sm:$0xf]
        %v1063 = vld [vmem:[%s1060 + $0x8] sm:$0xf]
        %v1064 = vld [vmem:[%s1060 + $0xc] sm:$0xf]
        %v1065 = vld [vmem:[%s1060 + $0x10] sm:$0xf]
        %v1066 = vld [vmem:[%s1060 + $0x14] sm:$0xf]
        %v1067 = vld [vmem:[%s1060 + $0x18] sm:$0xf]
        %v1068 = vld [vmem:[%s1060 + $0x1c] sm:$0xf]
        %v1069 = vld [vmem:[%s1060 + $0x20] sm:$0xf]
        %v1070 = vld [vmem:[%s1060 + $0x24] sm:$0xf]
        %v1071 = vld [vmem:[%s1060 + $0x28] sm:$0xf]
        %v1072 = vld [vmem:[%s1060 + $0x2c] sm:$0xf]
        %v1073 = vld [vmem:[%s1060 + $0x30] sm:$0xf]
        %v1074 = vld [vmem:[%s1060 + $0x34] sm:$0xf]
        %v1075 = vld [vmem:[%s1060 + $0x38] sm:$0xf]
        %v1076 = vld [vmem:[%s1060 + $0x3c] sm:$0xf]
        %v1100 = vunpack.c.l.b16 %v1037
        %v1101 = vunpack.c.l.b16 %v1038
        %v1102 = vunpack.c.l.b16 %v1039
        %v1103 = vunpack.c.l.b16 %v1040
        %v1104 = vunpack.c.l.b16 %v1041
        %v1105 = vunpack.c.l.b16 %v1042
        %v1106 = vunpack.c.l.b16 %v1043
        %v1107 = vunpack.c.l.b16 %v1044
        %v1108 = vunpack.c.l.b16 %v1045
        %v1109 = vunpack.c.l.b16 %v1046
        %v1110 = vunpack.c.l.b16 %v1047
        %v1111 = vunpack.c.l.b16 %v1048
        %v1112 = vunpack.c.l.b16 %v1049
        %v1113 = vunpack.c.l.b16 %v1050
        %v1114 = vunpack.c.l.b16 %v1051
        %v1115 = vunpack.c.l.b16 %v1052
        %v1116 = vunpack.c.l.b16 %v1053
        %v1117 = vunpack.c.l.b16 %v1054
        %v1118 = vunpack.c.l.b16 %v1055
        %v1119 = vunpack.c.l.b16 %v1056
        %v1120 = vunpack.c.l.b16 %v1057
        %v1121 = vunpack.c.l.b16 %v1058
        %v1122 = vunpack.c.l.b16 %v1059
        %v1123 = vpack.c.b16 %v1101, %v1100
        %v1124 = vpack.c.b16 %v1103, %v1102
        %v1125 = vpack.c.b16 %v1105, %v1104
        %v1126 = vpack.c.b16 %v1107, %v1106
        %v1127 = vpack.c.b16 %v1109, %v1108
        %v1128 = vpack.c.b16 %v1111, %v1110
        %v1129 = vpack.c.b16 %v1113, %v1112
        %v1130 = vpack.c.b16 %v1115, %v1114
        %v1131 = vpack.c.b16 %v1117, %v1116
        %v1132 = vpack.c.b16 %v1119, %v1118
        %v1133 = vpack.c.b16 %v1121, %v1120
        %v1134 = vpack.c.b16 %v1122, %v1122
        %vm1135 = vcmask 1046528
        %v1136 = vrot.slane %v1123, 1
        %v1137 = vrot.slane %v1124, 1
        %v1138 = vsel %vm1135, %v1136, %v1137
        %v1139 = vrot.slane %v1125, 1
        %v1140 = vsel %vm1135, %v1137, %v1139
        %v1141 = vrot.slane %v1126, 1
        %v1142 = vsel %vm1135, %v1139, %v1141
        %v1143 = vrot.slane %v1127, 1
        %v1144 = vsel %vm1135, %v1141, %v1143
        %v1145 = vrot.slane %v1128, 1
        %v1146 = vsel %vm1135, %v1143, %v1145
        %v1147 = vrot.slane %v1129, 1
        %v1148 = vsel %vm1135, %v1145, %v1147
        %v1149 = vrot.slane %v1130, 1
        %v1150 = vsel %vm1135, %v1147, %v1149
        %v1151 = vrot.slane %v1131, 1
        %v1152 = vsel %vm1135, %v1149, %v1151
        %v1153 = vrot.slane %v1132, 1
        %v1154 = vsel %vm1135, %v1151, %v1153
        %v1155 = vrot.slane %v1133, 1
        %v1156 = vsel %vm1135, %v1153, %v1155
        %v1157 = vrot.slane %v1134, 1
        %v1158 = vsel %vm1135, %v1155, %v1157
        %v1187 = vunpack.c.l.b16 %v1061
        %v1188 = vunpack.c.l.b16 %v1062
        %v1189 = vunpack.c.l.b16 %v1063
        %v1190 = vunpack.c.l.b16 %v1064
        %v1191 = vunpack.c.l.b16 %v1065
        %v1192 = vunpack.c.l.b16 %v1066
        %v1193 = vunpack.c.l.b16 %v1067
        %v1194 = vunpack.c.l.b16 %v1068
        %v1195 = vunpack.c.l.b16 %v1069
        %v1196 = vunpack.c.l.b16 %v1070
        %v1197 = vunpack.c.l.b16 %v1071
        %v1198 = vunpack.c.l.b16 %v1072
        %v1199 = vunpack.c.l.b16 %v1073
        %v1200 = vunpack.c.l.b16 %v1074
        %v1201 = vunpack.c.l.b16 %v1075
        %v1202 = vunpack.c.l.b16 %v1076
        %v1203 = vpack.c.b16 %v1188, %v1187
        %v1204 = vpack.c.b16 %v1190, %v1189
        %v1205 = vpack.c.b16 %v1192, %v1191
        %v1206 = vpack.c.b16 %v1194, %v1193
        %v1207 = vpack.c.b16 %v1196, %v1195
        %v1208 = vpack.c.b16 %v1198, %v1197
        %v1209 = vpack.c.b16 %v1200, %v1199
        %v1210 = vpack.c.b16 %v1202, %v1201
        %1219 = vmatpush.bf16.msra.mxu0 %v1210
        %1220 = vmatpush.bf16.msra.mxu0 %v1209
        %1221 = vmatpush.bf16.msra.mxu0 %v1208
        %1222 = vmatpush.bf16.msra.mxu0 %v1207
        %1223 = vmatpush.bf16.msra.mxu0 %v1206
        %1224 = vmatpush.bf16.msra.mxu0 %v1205
        %1225 = vmatpush.bf16.msra.mxu0 %v1204
        %1226 = vmatpush.bf16.msra.mxu0 %v1203
        %1227 = vmatmul.bf16.gmra.mxu0 %v1138
        %v1228 = vpop.f32.mrf.mxu0
        %v1229 = vadd.f32 0.0, %v1228
        %v1230 = vpop.f32.mrf.mxu0
        %v1231 = vadd.f32 0.0, %v1230
        %1232 = vmatmul.bf16.gmra.mxu0 %v1140
        %v1233 = vpop.f32.mrf.mxu0
        %v1234 = vadd.f32 0.0, %v1233
        %v1235 = vpop.f32.mrf.mxu0
        %v1236 = vadd.f32 0.0, %v1235
        %1237 = vmatmul.bf16.gmra.mxu0 %v1142
        %v1238 = vpop.f32.mrf.mxu0
        %v1239 = vadd.f32 0.0, %v1238
        %v1240 = vpop.f32.mrf.mxu0
        %v1241 = vadd.f32 0.0, %v1240
        %1242 = vmatmul.bf16.gmra.mxu0 %v1144
        %v1243 = vpop.f32.mrf.mxu0
        %v1244 = vadd.f32 0.0, %v1243
        %v1245 = vpop.f32.mrf.mxu0
        %v1246 = vadd.f32 0.0, %v1245
        %1247 = vmatmul.bf16.gmra.mxu0 %v1146
        %v1248 = vpop.f32.mrf.mxu0
        %v1249 = vadd.f32 0.0, %v1248
        %v1250 = vpop.f32.mrf.mxu0
        %v1251 = vadd.f32 0.0, %v1250
        %1252 = vmatmul.bf16.gmra.mxu0 %v1148
        %v1253 = vpop.f32.mrf.mxu0
        %v1254 = vadd.f32 0.0, %v1253
        %v1255 = vpop.f32.mrf.mxu0
        %v1256 = vadd.f32 0.0, %v1255
        %1257 = vmatmul.bf16.gmra.mxu0 %v1150
        %v1258 = vpop.f32.mrf.mxu0
        %v1259 = vadd.f32 0.0, %v1258
        %v1260 = vpop.f32.mrf.mxu0
        %v1261 = vadd.f32 0.0, %v1260
        %1262 = vmatmul.bf16.gmra.mxu0 %v1152
        %v1263 = vpop.f32.mrf.mxu0
        %v1264 = vadd.f32 0.0, %v1263
        %v1265 = vpop.f32.mrf.mxu0
        %v1266 = vadd.f32 0.0, %v1265
        %1267 = vmatmul.bf16.gmra.mxu0 %v1154
        %v1268 = vpop.f32.mrf.mxu0
        %v1269 = vadd.f32 0.0, %v1268
        %v1270 = vpop.f32.mrf.mxu0
        %v1271 = vadd.f32 0.0, %v1270
        %1272 = vmatmul.bf16.gmra.mxu0 %v1156
        %v1273 = vpop.f32.mrf.mxu0
        %v1274 = vadd.f32 0.0, %v1273
        %v1275 = vpop.f32.mrf.mxu0
        %v1276 = vadd.f32 0.0, %v1275
        %1277 = vmatmul.bf16.gmra.mxu0 %v1158
        %v1278 = vpop.f32.mrf.mxu0
        %v1279 = vadd.f32 0.0, %v1278
        %v1280 = vpop.f32.mrf.mxu0
        %v1281 = vadd.f32 0.0, %v1280
        %1282 = vmatmul.bf16.gmra.mxu0 %v1157
        %v1283 = vpop.f32.mrf.mxu0
        %v1284 = vadd.f32 0.0, %v1283
        %v1285 = vpop.f32.mrf.mxu0
        %1286 = vdwg.mxu0
        %v1287 = vld [vmem:[#allocation2] sm:$0xff]
        %v1288 = vld [vmem:[#allocation2 + $0x8] sm:$0xff]
        %v1289 = vld [vmem:[#allocation2 + $0x10] sm:$0xff]
        %v1290 = vld [vmem:[#allocation2 + $0x18] sm:$0xff]
        %v1291 = vld [vmem:[#allocation2 + $0x20] sm:$0xff]
        %v1292 = vld [vmem:[#allocation2 + $0x28] sm:$0xff]
        %v1293 = vld [vmem:[#allocation2 + $0x30] sm:$0xff]
        %v1294 = vld [vmem:[#allocation2 + $0x38] sm:$0xff]
        %v1295 = vld [vmem:[#allocation2 + $0x40] sm:$0xff]
        %v1296 = vld [vmem:[#allocation2 + $0x48] sm:$0xff]
        %v1297 = vld [vmem:[#allocation2 + $0x50] sm:$0xff]
        %v1298 = vld [vmem:[#allocation2 + $0x58] sm:$0xff]
        %v1299 = vld [vmem:[#allocation2 + $0x60] sm:$0xff]
        %v1300 = vld [vmem:[#allocation2 + $0x68] sm:$0xff]
        %v1301 = vld [vmem:[#allocation2 + $0x70] sm:$0xff]
        %v1302 = vld [vmem:[#allocation2 + $0x78] sm:$0xff]
        %v1303 = vld [vmem:[#allocation2 + $0x80] sm:$0xff]
        %v1304 = vld [vmem:[#allocation2 + $0x88] sm:$0xff]
        %v1305 = vld [vmem:[#allocation2 + $0x90] sm:$0xff]
        %v1306 = vld [vmem:[#allocation2 + $0x98] sm:$0xff]
        %v1307 = vld [vmem:[#allocation2 + $0xa0] sm:$0xff]
        %v1308 = vld [vmem:[#allocation2 + $0xa8] sm:$0xff]
        %v1309 = vld [vmem:[#allocation2 + $0xb0] sm:$0xf]
        %v1310 = vadd.f32 %v1287, %v1229
        %v1311 = vadd.f32 %v1288, %v1231
        %v1312 = vadd.f32 %v1289, %v1234
        %v1313 = vadd.f32 %v1290, %v1236
        %v1314 = vadd.f32 %v1291, %v1239
        %v1315 = vadd.f32 %v1292, %v1241
        %v1316 = vadd.f32 %v1293, %v1244
        %v1317 = vadd.f32 %v1294, %v1246
        %v1318 = vadd.f32 %v1295, %v1249
        %v1319 = vadd.f32 %v1296, %v1251
        %v1320 = vadd.f32 %v1297, %v1254
        %v1321 = vadd.f32 %v1298, %v1256
        %v1322 = vadd.f32 %v1299, %v1259
        %v1323 = vadd.f32 %v1300, %v1261
        %v1324 = vadd.f32 %v1301, %v1264
        %v1325 = vadd.f32 %v1302, %v1266
        %v1326 = vadd.f32 %v1303, %v1269
        %v1327 = vadd.f32 %v1304, %v1271
        %v1328 = vadd.f32 %v1305, %v1274
        %v1329 = vadd.f32 %v1306, %v1276
        %v1330 = vadd.f32 %v1307, %v1279
        %v1331 = vadd.f32 %v1308, %v1281
        %v1332 = vadd.f32 %v1309, %v1284
        %1333 = vst [vmem:[#allocation2] sm:$0xff] %v1310
        %1334 = vst [vmem:[#allocation2 + $0x8] sm:$0xff] %v1311
        %1335 = vst [vmem:[#allocation2 + $0x10] sm:$0xff] %v1312
        %1336 = vst [vmem:[#allocation2 + $0x18] sm:$0xff] %v1313
        %1337 = vst [vmem:[#allocation2 + $0x20] sm:$0xff] %v1314
        %1338 = vst [vmem:[#allocation2 + $0x28] sm:$0xff] %v1315
        %1339 = vst [vmem:[#allocation2 + $0x30] sm:$0xff] %v1316
        %1340 = vst [vmem:[#allocation2 + $0x38] sm:$0xff] %v1317
        %1341 = vst [vmem:[#allocation2 + $0x40] sm:$0xff] %v1318
        %1342 = vst [vmem:[#allocation2 + $0x48] sm:$0xff] %v1319
        %1343 = vst [vmem:[#allocation2 + $0x50] sm:$0xff] %v1320
        %1344 = vst [vmem:[#allocation2 + $0x58] sm:$0xff] %v1321
        %1345 = vst [vmem:[#allocation2 + $0x60] sm:$0xff] %v1322
        %1346 = vst [vmem:[#allocation2 + $0x68] sm:$0xff] %v1323
        %1347 = vst [vmem:[#allocation2 + $0x70] sm:$0xff] %v1324
        %1348 = vst [vmem:[#allocation2 + $0x78] sm:$0xff] %v1325
        %1349 = vst [vmem:[#allocation2 + $0x80] sm:$0xff] %v1326
        %1350 = vst [vmem:[#allocation2 + $0x88] sm:$0xff] %v1327
        %1351 = vst [vmem:[#allocation2 + $0x90] sm:$0xff] %v1328
        %1352 = vst [vmem:[#allocation2 + $0x98] sm:$0xff] %v1329
        %1353 = vst [vmem:[#allocation2 + $0xa0] sm:$0xff] %v1330
        %1354 = vst [vmem:[#allocation2 + $0xa8] sm:$0xff] %v1331
        %1355 = vst [vmem:[#allocation2 + $0xb0] sm:$0xf] %v1332
        %v1356 = vld [vmem:[%s343 + $0x8] sm:$0xe]
        %v1357 = vld [vmem:[%s343 + $0xc] sm:$0xf]
        %v1358 = vld [vmem:[%s343 + $0x10] sm:$0xf]
        %v1359 = vld [vmem:[%s343 + $0x14] sm:$0xf]
        %v1360 = vld [vmem:[%s343 + $0x18] sm:$0xf]
        %v1361 = vld [vmem:[%s343 + $0x1c] sm:$0xf]
        %v1362 = vld [vmem:[%s343 + $0x20] sm:$0xf]
        %v1363 = vld [vmem:[%s343 + $0x24] sm:$0xf]
        %v1364 = vld [vmem:[%s343 + $0x28] sm:$0xf]
        %v1365 = vld [vmem:[%s343 + $0x2c] sm:$0xf]
        %v1366 = vld [vmem:[%s343 + $0x30] sm:$0xf]
        %v1367 = vld [vmem:[%s343 + $0x34] sm:$0xf]
        %v1368 = vld [vmem:[%s343 + $0x38] sm:$0xf]
        %v1369 = vld [vmem:[%s343 + $0x3c] sm:$0xf]
        %v1370 = vld [vmem:[%s343 + $0x40] sm:$0xf]
        %v1371 = vld [vmem:[%s343 + $0x44] sm:$0xf]
        %v1372 = vld [vmem:[%s343 + $0x48] sm:$0xf]
        %v1373 = vld [vmem:[%s343 + $0x4c] sm:$0xf]
        %v1374 = vld [vmem:[%s343 + $0x50] sm:$0xf]
        %v1375 = vld [vmem:[%s343 + $0x54] sm:$0xf]
        %v1376 = vld [vmem:[%s343 + $0x58] sm:$0xf]
        %v1377 = vld [vmem:[%s343 + $0x5c] sm:$0xf]
        %v1378 = vld [vmem:[%s343 + $0x60] sm:$0x7]
        %s1379 = scalar_lea.vmem [#allocation7], 192
        %v1380 = vld [vmem:[%s1379] sm:$0xf]
        %v1381 = vld [vmem:[%s1379 + $0x4] sm:$0xf]
        %v1382 = vld [vmem:[%s1379 + $0x8] sm:$0xf]
        %v1383 = vld [vmem:[%s1379 + $0xc] sm:$0xf]
        %v1384 = vld [vmem:[%s1379 + $0x10] sm:$0xf]
        %v1385 = vld [vmem:[%s1379 + $0x14] sm:$0xf]
        %v1386 = vld [vmem:[%s1379 + $0x18] sm:$0xf]
        %v1387 = vld [vmem:[%s1379 + $0x1c] sm:$0xf]
        %v1388 = vld [vmem:[%s1379 + $0x20] sm:$0xf]
        %v1389 = vld [vmem:[%s1379 + $0x24] sm:$0xf]
        %v1390 = vld [vmem:[%s1379 + $0x28] sm:$0xf]
        %v1391 = vld [vmem:[%s1379 + $0x2c] sm:$0xf]
        %v1392 = vld [vmem:[%s1379 + $0x30] sm:$0xf]
        %v1393 = vld [vmem:[%s1379 + $0x34] sm:$0xf]
        %v1394 = vld [vmem:[%s1379 + $0x38] sm:$0xf]
        %v1395 = vld [vmem:[%s1379 + $0x3c] sm:$0xf]
        %v1419 = vunpack.c.l.b16 %v1356
        %v1420 = vunpack.c.l.b16 %v1357
        %v1421 = vunpack.c.l.b16 %v1358
        %v1422 = vunpack.c.l.b16 %v1359
        %v1423 = vunpack.c.l.b16 %v1360
        %v1424 = vunpack.c.l.b16 %v1361
        %v1425 = vunpack.c.l.b16 %v1362
        %v1426 = vunpack.c.l.b16 %v1363
        %v1427 = vunpack.c.l.b16 %v1364
        %v1428 = vunpack.c.l.b16 %v1365
        %v1429 = vunpack.c.l.b16 %v1366
        %v1430 = vunpack.c.l.b16 %v1367
        %v1431 = vunpack.c.l.b16 %v1368
        %v1432 = vunpack.c.l.b16 %v1369
        %v1433 = vunpack.c.l.b16 %v1370
        %v1434 = vunpack.c.l.b16 %v1371
        %v1435 = vunpack.c.l.b16 %v1372
        %v1436 = vunpack.c.l.b16 %v1373
        %v1437 = vunpack.c.l.b16 %v1374
        %v1438 = vunpack.c.l.b16 %v1375
        %v1439 = vunpack.c.l.b16 %v1376
        %v1440 = vunpack.c.l.b16 %v1377
        %v1441 = vunpack.c.l.b16 %v1378
        %v1442 = vpack.c.b16 %v1420, %v1419
        %v1443 = vpack.c.b16 %v1422, %v1421
        %v1444 = vpack.c.b16 %v1424, %v1423
        %v1445 = vpack.c.b16 %v1426, %v1425
        %v1446 = vpack.c.b16 %v1428, %v1427
        %v1447 = vpack.c.b16 %v1430, %v1429
        %v1448 = vpack.c.b16 %v1432, %v1431
        %v1449 = vpack.c.b16 %v1434, %v1433
        %v1450 = vpack.c.b16 %v1436, %v1435
        %v1451 = vpack.c.b16 %v1438, %v1437
        %v1452 = vpack.c.b16 %v1440, %v1439
        %v1453 = vpack.c.b16 %v1441, %v1441
        %v1454 = vrot.slane %v1442, 1
        %v1455 = vrot.slane %v1443, 1
        %v1456 = vsel %vm1135, %v1454, %v1455
        %v1457 = vrot.slane %v1444, 1
        %v1458 = vsel %vm1135, %v1455, %v1457
        %v1459 = vrot.slane %v1445, 1
        %v1460 = vsel %vm1135, %v1457, %v1459
        %v1461 = vrot.slane %v1446, 1
        %v1462 = vsel %vm1135, %v1459, %v1461
        %v1463 = vrot.slane %v1447, 1
        %v1464 = vsel %vm1135, %v1461, %v1463
        %v1465 = vrot.slane %v1448, 1
        %v1466 = vsel %vm1135, %v1463, %v1465
        %v1467 = vrot.slane %v1449, 1
        %v1468 = vsel %vm1135, %v1465, %v1467
        %v1469 = vrot.slane %v1450, 1
        %v1470 = vsel %vm1135, %v1467, %v1469
        %v1471 = vrot.slane %v1451, 1
        %v1472 = vsel %vm1135, %v1469, %v1471
        %v1473 = vrot.slane %v1452, 1
        %v1474 = vsel %vm1135, %v1471, %v1473
        %v1475 = vrot.slane %v1453, 1
        %v1476 = vsel %vm1135, %v1473, %v1475
        %v1505 = vunpack.c.l.b16 %v1380
        %v1506 = vunpack.c.l.b16 %v1381
        %v1507 = vunpack.c.l.b16 %v1382
        %v1508 = vunpack.c.l.b16 %v1383
        %v1509 = vunpack.c.l.b16 %v1384
        %v1510 = vunpack.c.l.b16 %v1385
        %v1511 = vunpack.c.l.b16 %v1386
        %v1512 = vunpack.c.l.b16 %v1387
        %v1513 = vunpack.c.l.b16 %v1388
        %v1514 = vunpack.c.l.b16 %v1389
        %v1515 = vunpack.c.l.b16 %v1390
        %v1516 = vunpack.c.l.b16 %v1391
        %v1517 = vunpack.c.l.b16 %v1392
        %v1518 = vunpack.c.l.b16 %v1393
        %v1519 = vunpack.c.l.b16 %v1394
        %v1520 = vunpack.c.l.b16 %v1395
        %v1521 = vpack.c.b16 %v1506, %v1505
        %v1522 = vpack.c.b16 %v1508, %v1507
        %v1523 = vpack.c.b16 %v1510, %v1509
        %v1524 = vpack.c.b16 %v1512, %v1511
        %v1525 = vpack.c.b16 %v1514, %v1513
        %v1526 = vpack.c.b16 %v1516, %v1515
        %v1527 = vpack.c.b16 %v1518, %v1517
        %v1528 = vpack.c.b16 %v1520, %v1519
        %1537 = vmatpush.bf16.msra.mxu0 %v1528
        %1538 = vmatpush.bf16.msra.mxu0 %v1527
        %1539 = vmatpush.bf16.msra.mxu0 %v1526
        %1540 = vmatpush.bf16.msra.mxu0 %v1525
        %1541 = vmatpush.bf16.msra.mxu0 %v1524
        %1542 = vmatpush.bf16.msra.mxu0 %v1523
        %1543 = vmatpush.bf16.msra.mxu0 %v1522
        %1544 = vmatpush.bf16.msra.mxu0 %v1521
        %1545 = vmatmul.bf16.gmra.mxu0 %v1456
        %v1546 = vpop.f32.mrf.mxu0
        %v1547 = vadd.f32 0.0, %v1546
        %v1548 = vpop.f32.mrf.mxu0
        %v1549 = vadd.f32 0.0, %v1548
        %1550 = vmatmul.bf16.gmra.mxu0 %v1458
        %v1551 = vpop.f32.mrf.mxu0
        %v1552 = vadd.f32 0.0, %v1551
        %v1553 = vpop.f32.mrf.mxu0
        %v1554 = vadd.f32 0.0, %v1553
        %1555 = vmatmul.bf16.gmra.mxu0 %v1460
        %v1556 = vpop.f32.mrf.mxu0
        %v1557 = vadd.f32 0.0, %v1556
        %v1558 = vpop.f32.mrf.mxu0
        %v1559 = vadd.f32 0.0, %v1558
        %1560 = vmatmul.bf16.gmra.mxu0 %v1462
        %v1561 = vpop.f32.mrf.mxu0
        %v1562 = vadd.f32 0.0, %v1561
        %v1563 = vpop.f32.mrf.mxu0
        %v1564 = vadd.f32 0.0, %v1563
        %1565 = vmatmul.bf16.gmra.mxu0 %v1464
        %v1566 = vpop.f32.mrf.mxu0
        %v1567 = vadd.f32 0.0, %v1566
        %v1568 = vpop.f32.mrf.mxu0
        %v1569 = vadd.f32 0.0, %v1568
        %1570 = vmatmul.bf16.gmra.mxu0 %v1466
        %v1571 = vpop.f32.mrf.mxu0
        %v1572 = vadd.f32 0.0, %v1571
        %v1573 = vpop.f32.mrf.mxu0
        %v1574 = vadd.f32 0.0, %v1573
        %1575 = vmatmul.bf16.gmra.mxu0 %v1468
        %v1576 = vpop.f32.mrf.mxu0
        %v1577 = vadd.f32 0.0, %v1576
        %v1578 = vpop.f32.mrf.mxu0
        %v1579 = vadd.f32 0.0, %v1578
        %1580 = vmatmul.bf16.gmra.mxu0 %v1470
        %v1581 = vpop.f32.mrf.mxu0
        %v1582 = vadd.f32 0.0, %v1581
        %v1583 = vpop.f32.mrf.mxu0
        %v1584 = vadd.f32 0.0, %v1583
        %1585 = vmatmul.bf16.gmra.mxu0 %v1472
        %v1586 = vpop.f32.mrf.mxu0
        %v1587 = vadd.f32 0.0, %v1586
        %v1588 = vpop.f32.mrf.mxu0
        %v1589 = vadd.f32 0.0, %v1588
        %1590 = vmatmul.bf16.gmra.mxu0 %v1474
        %v1591 = vpop.f32.mrf.mxu0
        %v1592 = vadd.f32 0.0, %v1591
        %v1593 = vpop.f32.mrf.mxu0
        %v1594 = vadd.f32 0.0, %v1593
        %1595 = vmatmul.bf16.gmra.mxu0 %v1476
        %v1596 = vpop.f32.mrf.mxu0
        %v1597 = vadd.f32 0.0, %v1596
        %v1598 = vpop.f32.mrf.mxu0
        %v1599 = vadd.f32 0.0, %v1598
        %1600 = vmatmul.bf16.gmra.mxu0 %v1475
        %v1601 = vpop.f32.mrf.mxu0
        %v1602 = vadd.f32 0.0, %v1601
        %v1603 = vpop.f32.mrf.mxu0
        %1604 = vdwg.mxu0
        %v1605 = vld [vmem:[#allocation2] sm:$0xff]
        %v1606 = vld [vmem:[#allocation2 + $0x8] sm:$0xff]
        %v1607 = vld [vmem:[#allocation2 + $0x10] sm:$0xff]
        %v1608 = vld [vmem:[#allocation2 + $0x18] sm:$0xff]
        %v1609 = vld [vmem:[#allocation2 + $0x20] sm:$0xff]
        %v1610 = vld [vmem:[#allocation2 + $0x28] sm:$0xff]
        %v1611 = vld [vmem:[#allocation2 + $0x30] sm:$0xff]
        %v1612 = vld [vmem:[#allocation2 + $0x38] sm:$0xff]
        %v1613 = vld [vmem:[#allocation2 + $0x40] sm:$0xff]
        %v1614 = vld [vmem:[#allocation2 + $0x48] sm:$0xff]
        %v1615 = vld [vmem:[#allocation2 + $0x50] sm:$0xff]
        %v1616 = vld [vmem:[#allocation2 + $0x58] sm:$0xff]
        %v1617 = vld [vmem:[#allocation2 + $0x60] sm:$0xff]
        %v1618 = vld [vmem:[#allocation2 + $0x68] sm:$0xff]
        %v1619 = vld [vmem:[#allocation2 + $0x70] sm:$0xff]
        %v1620 = vld [vmem:[#allocation2 + $0x78] sm:$0xff]
        %v1621 = vld [vmem:[#allocation2 + $0x80] sm:$0xff]
        %v1622 = vld [vmem:[#allocation2 + $0x88] sm:$0xff]
        %v1623 = vld [vmem:[#allocation2 + $0x90] sm:$0xff]
        %v1624 = vld [vmem:[#allocation2 + $0x98] sm:$0xff]
        %v1625 = vld [vmem:[#allocation2 + $0xa0] sm:$0xff]
        %v1626 = vld [vmem:[#allocation2 + $0xa8] sm:$0xff]
        %v1627 = vld [vmem:[#allocation2 + $0xb0] sm:$0xf]
        %v1628 = vadd.f32 %v1605, %v1547
        %v1629 = vadd.f32 %v1606, %v1549
        %v1630 = vadd.f32 %v1607, %v1552
        %v1631 = vadd.f32 %v1608, %v1554
        %v1632 = vadd.f32 %v1609, %v1557
        %v1633 = vadd.f32 %v1610, %v1559
        %v1634 = vadd.f32 %v1611, %v1562
        %v1635 = vadd.f32 %v1612, %v1564
        %v1636 = vadd.f32 %v1613, %v1567
        %v1637 = vadd.f32 %v1614, %v1569
        %v1638 = vadd.f32 %v1615, %v1572
        %v1639 = vadd.f32 %v1616, %v1574
        %v1640 = vadd.f32 %v1617, %v1577
        %v1641 = vadd.f32 %v1618, %v1579
        %v1642 = vadd.f32 %v1619, %v1582
        %v1643 = vadd.f32 %v1620, %v1584
        %v1644 = vadd.f32 %v1621, %v1587
        %v1645 = vadd.f32 %v1622, %v1589
        %v1646 = vadd.f32 %v1623, %v1592
        %v1647 = vadd.f32 %v1624, %v1594
        %v1648 = vadd.f32 %v1625, %v1597
        %v1649 = vadd.f32 %v1626, %v1599
        %v1650 = vadd.f32 %v1627, %v1602
        %1651 = vst [vmem:[#allocation2] sm:$0xff] %v1628
        %1652 = vst [vmem:[#allocation2 + $0x8] sm:$0xff] %v1629
        %1653 = vst [vmem:[#allocation2 + $0x10] sm:$0xff] %v1630
        %1654 = vst [vmem:[#allocation2 + $0x18] sm:$0xff] %v1631
        %1655 = vst [vmem:[#allocation2 + $0x20] sm:$0xff] %v1632
        %1656 = vst [vmem:[#allocation2 + $0x28] sm:$0xff] %v1633
        %1657 = vst [vmem:[#allocation2 + $0x30] sm:$0xff] %v1634
        %1658 = vst [vmem:[#allocation2 + $0x38] sm:$0xff] %v1635
        %1659 = vst [vmem:[#allocation2 + $0x40] sm:$0xff] %v1636
        %1660 = vst [vmem:[#allocation2 + $0x48] sm:$0xff] %v1637
        %1661 = vst [vmem:[#allocation2 + $0x50] sm:$0xff] %v1638
        %1662 = vst [vmem:[#allocation2 + $0x58] sm:$0xff] %v1639
        %1663 = vst [vmem:[#allocation2 + $0x60] sm:$0xff] %v1640
        %1664 = vst [vmem:[#allocation2 + $0x68] sm:$0xff] %v1641
        %1665 = vst [vmem:[#allocation2 + $0x70] sm:$0xff] %v1642
        %1666 = vst [vmem:[#allocation2 + $0x78] sm:$0xff] %v1643
        %1667 = vst [vmem:[#allocation2 + $0x80] sm:$0xff] %v1644
        %1668 = vst [vmem:[#allocation2 + $0x88] sm:$0xff] %v1645
        %1669 = vst [vmem:[#allocation2 + $0x90] sm:$0xff] %v1646
        %1670 = vst [vmem:[#allocation2 + $0x98] sm:$0xff] %v1647
        %1671 = vst [vmem:[#allocation2 + $0xa0] sm:$0xff] %v1648
        %1672 = vst [vmem:[#allocation2 + $0xa8] sm:$0xff] %v1649
        %1673 = vst [vmem:[#allocation2 + $0xb0] sm:$0xf] %v1650
        %v1674 = vld [vmem:[%s343 + $0x8] sm:$0xe]
        %v1675 = vld [vmem:[%s343 + $0xc] sm:$0xf]
        %v1676 = vld [vmem:[%s343 + $0x10] sm:$0xf]
        %v1677 = vld [vmem:[%s343 + $0x14] sm:$0xf]
        %v1678 = vld [vmem:[%s343 + $0x18] sm:$0xf]
        %v1679 = vld [vmem:[%s343 + $0x1c] sm:$0xf]
        %v1680 = vld [vmem:[%s343 + $0x20] sm:$0xf]
        %v1681 = vld [vmem:[%s343 + $0x24] sm:$0xf]
        %v1682 = vld [vmem:[%s343 + $0x28] sm:$0xf]
        %v1683 = vld [vmem:[%s343 + $0x2c] sm:$0xf]
        %v1684 = vld [vmem:[%s343 + $0x30] sm:$0xf]
        %v1685 = vld [vmem:[%s343 + $0x34] sm:$0xf]
        %v1686 = vld [vmem:[%s343 + $0x38] sm:$0xf]
        %v1687 = vld [vmem:[%s343 + $0x3c] sm:$0xf]
        %v1688 = vld [vmem:[%s343 + $0x40] sm:$0xf]
        %v1689 = vld [vmem:[%s343 + $0x44] sm:$0xf]
        %v1690 = vld [vmem:[%s343 + $0x48] sm:$0xf]
        %v1691 = vld [vmem:[%s343 + $0x4c] sm:$0xf]
        %v1692 = vld [vmem:[%s343 + $0x50] sm:$0xf]
        %v1693 = vld [vmem:[%s343 + $0x54] sm:$0xf]
        %v1694 = vld [vmem:[%s343 + $0x58] sm:$0xf]
        %v1695 = vld [vmem:[%s343 + $0x5c] sm:$0xf]
        %v1696 = vld [vmem:[%s343 + $0x60] sm:$0xf]
        %s1697 = scalar_lea.vmem [#allocation7], 256
        %v1698 = vld [vmem:[%s1697] sm:$0xf]
        %v1699 = vld [vmem:[%s1697 + $0x4] sm:$0xf]
        %v1700 = vld [vmem:[%s1697 + $0x8] sm:$0xf]
        %v1701 = vld [vmem:[%s1697 + $0xc] sm:$0xf]
        %v1702 = vld [vmem:[%s1697 + $0x10] sm:$0xf]
        %v1703 = vld [vmem:[%s1697 + $0x14] sm:$0xf]
        %v1704 = vld [vmem:[%s1697 + $0x18] sm:$0xf]
        %v1705 = vld [vmem:[%s1697 + $0x1c] sm:$0xf]
        %v1706 = vld [vmem:[%s1697 + $0x20] sm:$0xf]
        %v1707 = vld [vmem:[%s1697 + $0x24] sm:$0xf]
        %v1708 = vld [vmem:[%s1697 + $0x28] sm:$0xf]
        %v1709 = vld [vmem:[%s1697 + $0x2c] sm:$0xf]
        %v1710 = vld [vmem:[%s1697 + $0x30] sm:$0xf]
        %v1711 = vld [vmem:[%s1697 + $0x34] sm:$0xf]
        %v1712 = vld [vmem:[%s1697 + $0x38] sm:$0xf]
        %v1713 = vld [vmem:[%s1697 + $0x3c] sm:$0xf]
        %v1737 = vunpack.c.l.b16 %v1674
        %v1738 = vunpack.c.l.b16 %v1675
        %v1739 = vunpack.c.l.b16 %v1676
        %v1740 = vunpack.c.l.b16 %v1677
        %v1741 = vunpack.c.l.b16 %v1678
        %v1742 = vunpack.c.l.b16 %v1679
        %v1743 = vunpack.c.l.b16 %v1680
        %v1744 = vunpack.c.l.b16 %v1681
        %v1745 = vunpack.c.l.b16 %v1682
        %v1746 = vunpack.c.l.b16 %v1683
        %v1747 = vunpack.c.l.b16 %v1684
        %v1748 = vunpack.c.l.b16 %v1685
        %v1749 = vunpack.c.l.b16 %v1686
        %v1750 = vunpack.c.l.b16 %v1687
        %v1751 = vunpack.c.l.b16 %v1688
        %v1752 = vunpack.c.l.b16 %v1689
        %v1753 = vunpack.c.l.b16 %v1690
        %v1754 = vunpack.c.l.b16 %v1691
        %v1755 = vunpack.c.l.b16 %v1692
        %v1756 = vunpack.c.l.b16 %v1693
        %v1757 = vunpack.c.l.b16 %v1694
        %v1758 = vunpack.c.l.b16 %v1695
        %v1759 = vunpack.c.l.b16 %v1696
        %v1760 = vpack.c.b16 %v1738, %v1737
        %v1761 = vpack.c.b16 %v1740, %v1739
        %v1762 = vpack.c.b16 %v1742, %v1741
        %v1763 = vpack.c.b16 %v1744, %v1743
        %v1764 = vpack.c.b16 %v1746, %v1745
        %v1765 = vpack.c.b16 %v1748, %v1747
        %v1766 = vpack.c.b16 %v1750, %v1749
        %v1767 = vpack.c.b16 %v1752, %v1751
        %v1768 = vpack.c.b16 %v1754, %v1753
        %v1769 = vpack.c.b16 %v1756, %v1755
        %v1770 = vpack.c.b16 %v1758, %v1757
        %v1771 = vpack.c.b16 %v1759, %v1759
        %vm1772 = vsmask.f32 6400
        %v1774 = vshrl.u32 %v1760, 16
        %v1776 = vrot.slane %v1774, 1
        %v1777 = vshll.u32 %v1760, 16
        %v1779 = vrot.slane %v1777, 2
        %v1780 = vor.u32 %v1776, %v1779
        %v1782 = vshrl.u32 %v1761, 16
        %v1784 = vrot.slane %v1782, 1
        %v1785 = vshll.u32 %v1761, 16
        %v1787 = vrot.slane %v1785, 2
        %v1788 = vor.u32 %v1784, %v1787
        %v1789 = vsel %vm1772, %v1780, %v1788
        %v1791 = vshrl.u32 %v1762, 16
        %v1793 = vrot.slane %v1791, 1
        %v1794 = vshll.u32 %v1762, 16
        %v1796 = vrot.slane %v1794, 2
        %v1797 = vor.u32 %v1793, %v1796
        %v1798 = vsel %vm1772, %v1788, %v1797
        %v1800 = vshrl.u32 %v1763, 16
        %v1802 = vrot.slane %v1800, 1
        %v1803 = vshll.u32 %v1763, 16
        %v1805 = vrot.slane %v1803, 2
        %v1806 = vor.u32 %v1802, %v1805
        %v1807 = vsel %vm1772, %v1797, %v1806
        %v1809 = vshrl.u32 %v1764, 16
        %v1811 = vrot.slane %v1809, 1
        %v1812 = vshll.u32 %v1764, 16
        %v1814 = vrot.slane %v1812, 2
        %v1815 = vor.u32 %v1811, %v1814
        %v1816 = vsel %vm1772, %v1806, %v1815
        %v1818 = vshrl.u32 %v1765, 16
        %v1820 = vrot.slane %v1818, 1
        %v1821 = vshll.u32 %v1765, 16
        %v1823 = vrot.slane %v1821, 2
        %v1824 = vor.u32 %v1820, %v1823
        %v1825 = vsel %vm1772, %v1815, %v1824
        %v1827 = vshrl.u32 %v1766, 16
        %v1829 = vrot.slane %v1827, 1
        %v1830 = vshll.u32 %v1766, 16
        %v1832 = vrot.slane %v1830, 2
        %v1833 = vor.u32 %v1829, %v1832
        %v1834 = vsel %vm1772, %v1824, %v1833
        %v1836 = vshrl.u32 %v1767, 16
        %v1838 = vrot.slane %v1836, 1
        %v1839 = vshll.u32 %v1767, 16
        %v1841 = vrot.slane %v1839, 2
        %v1842 = vor.u32 %v1838, %v1841
        %v1843 = vsel %vm1772, %v1833, %v1842
        %v1845 = vshrl.u32 %v1768, 16
        %v1847 = vrot.slane %v1845, 1
        %v1848 = vshll.u32 %v1768, 16
        %v1850 = vrot.slane %v1848, 2
        %v1851 = vor.u32 %v1847, %v1850
        %v1852 = vsel %vm1772, %v1842, %v1851
        %v1854 = vshrl.u32 %v1769, 16
        %v1856 = vrot.slane %v1854, 1
        %v1857 = vshll.u32 %v1769, 16
        %v1859 = vrot.slane %v1857, 2
        %v1860 = vor.u32 %v1856, %v1859
        %v1861 = vsel %vm1772, %v1851, %v1860
        %v1863 = vshrl.u32 %v1770, 16
        %v1865 = vrot.slane %v1863, 1
        %v1866 = vshll.u32 %v1770, 16
        %v1868 = vrot.slane %v1866, 2
        %v1869 = vor.u32 %v1865, %v1868
        %v1870 = vsel %vm1772, %v1860, %v1869
        %v1872 = vshrl.u32 %v1771, 16
        %v1874 = vrot.slane %v1872, 1
        %v1875 = vshll.u32 %v1771, 16
        %v1877 = vrot.slane %v1875, 2
        %v1878 = vor.u32 %v1874, %v1877
        %v1879 = vsel %vm1772, %v1869, %v1878
        %v1908 = vunpack.c.l.b16 %v1698
        %v1909 = vunpack.c.l.b16 %v1699
        %v1910 = vunpack.c.l.b16 %v1700
        %v1911 = vunpack.c.l.b16 %v1701
        %v1912 = vunpack.c.l.b16 %v1702
        %v1913 = vunpack.c.l.b16 %v1703
        %v1914 = vunpack.c.l.b16 %v1704
        %v1915 = vunpack.c.l.b16 %v1705
        %v1916 = vunpack.c.l.b16 %v1706
        %v1917 = vunpack.c.l.b16 %v1707
        %v1918 = vunpack.c.l.b16 %v1708
        %v1919 = vunpack.c.l.b16 %v1709
        %v1920 = vunpack.c.l.b16 %v1710
        %v1921 = vunpack.c.l.b16 %v1711
        %v1922 = vunpack.c.l.b16 %v1712
        %v1923 = vunpack.c.l.b16 %v1713
        %v1924 = vpack.c.b16 %v1909, %v1908
        %v1925 = vpack.c.b16 %v1911, %v1910
        %v1926 = vpack.c.b16 %v1913, %v1912
        %v1927 = vpack.c.b16 %v1915, %v1914
        %v1928 = vpack.c.b16 %v1917, %v1916
        %v1929 = vpack.c.b16 %v1919, %v1918
        %v1930 = vpack.c.b16 %v1921, %v1920
        %v1931 = vpack.c.b16 %v1923, %v1922
        %1940 = vmatpush.bf16.msra.mxu0 %v1931
        %1941 = vmatpush.bf16.msra.mxu0 %v1930
        %1942 = vmatpush.bf16.msra.mxu0 %v1929
        %1943 = vmatpush.bf16.msra.mxu0 %v1928
        %1944 = vmatpush.bf16.msra.mxu0 %v1927
        %1945 = vmatpush.bf16.msra.mxu0 %v1926
        %1946 = vmatpush.bf16.msra.mxu0 %v1925
        %1947 = vmatpush.bf16.msra.mxu0 %v1924
        %1948 = vmatmul.bf16.gmra.mxu0 %v1789
        %v1949 = vpop.f32.mrf.mxu0
        %v1950 = vadd.f32 0.0, %v1949
        %v1951 = vpop.f32.mrf.mxu0
        %v1952 = vadd.f32 0.0, %v1951
        %1953 = vmatmul.bf16.gmra.mxu0 %v1798
        %v1954 = vpop.f32.mrf.mxu0
        %v1955 = vadd.f32 0.0, %v1954
        %v1956 = vpop.f32.mrf.mxu0
        %v1957 = vadd.f32 0.0, %v1956
        %1958 = vmatmul.bf16.gmra.mxu0 %v1807
        %v1959 = vpop.f32.mrf.mxu0
        %v1960 = vadd.f32 0.0, %v1959
        %v1961 = vpop.f32.mrf.mxu0
        %v1962 = vadd.f32 0.0, %v1961
        %1963 = vmatmul.bf16.gmra.mxu0 %v1816
        %v1964 = vpop.f32.mrf.mxu0
        %v1965 = vadd.f32 0.0, %v1964
        %v1966 = vpop.f32.mrf.mxu0
        %v1967 = vadd.f32 0.0, %v1966
        %1968 = vmatmul.bf16.gmra.mxu0 %v1825
        %v1969 = vpop.f32.mrf.mxu0
        %v1970 = vadd.f32 0.0, %v1969
        %v1971 = vpop.f32.mrf.mxu0
        %v1972 = vadd.f32 0.0, %v1971
        %1973 = vmatmul.bf16.gmra.mxu0 %v1834
        %v1974 = vpop.f32.mrf.mxu0
        %v1975 = vadd.f32 0.0, %v1974
        %v1976 = vpop.f32.mrf.mxu0
        %v1977 = vadd.f32 0.0, %v1976
        %1978 = vmatmul.bf16.gmra.mxu0 %v1843
        %v1979 = vpop.f32.mrf.mxu0
        %v1980 = vadd.f32 0.0, %v1979
        %v1981 = vpop.f32.mrf.mxu0
        %v1982 = vadd.f32 0.0, %v1981
        %1983 = vmatmul.bf16.gmra.mxu0 %v1852
        %v1984 = vpop.f32.mrf.mxu0
        %v1985 = vadd.f32 0.0, %v1984
        %v1986 = vpop.f32.mrf.mxu0
        %v1987 = vadd.f32 0.0, %v1986
        %1988 = vmatmul.bf16.gmra.mxu0 %v1861
        %v1989 = vpop.f32.mrf.mxu0
        %v1990 = vadd.f32 0.0, %v1989
        %v1991 = vpop.f32.mrf.mxu0
        %v1992 = vadd.f32 0.0, %v1991
        %1993 = vmatmul.bf16.gmra.mxu0 %v1870
        %v1994 = vpop.f32.mrf.mxu0
        %v1995 = vadd.f32 0.0, %v1994
        %v1996 = vpop.f32.mrf.mxu0
        %v1997 = vadd.f32 0.0, %v1996
        %1998 = vmatmul.bf16.gmra.mxu0 %v1879
        %v1999 = vpop.f32.mrf.mxu0
        %v2000 = vadd.f32 0.0, %v1999
        %v2001 = vpop.f32.mrf.mxu0
        %v2002 = vadd.f32 0.0, %v2001
        %2003 = vmatmul.bf16.gmra.mxu0 %v1878
        %v2004 = vpop.f32.mrf.mxu0
        %v2005 = vadd.f32 0.0, %v2004
        %v2006 = vpop.f32.mrf.mxu0
        %2007 = vdwg.mxu0
        %v2008 = vld [vmem:[#allocation2] sm:$0xff]
        %v2009 = vld [vmem:[#allocation2 + $0x8] sm:$0xff]
        %v2010 = vld [vmem:[#allocation2 + $0x10] sm:$0xff]
        %v2011 = vld [vmem:[#allocation2 + $0x18] sm:$0xff]
        %v2012 = vld [vmem:[#allocation2 + $0x20] sm:$0xff]
        %v2013 = vld [vmem:[#allocation2 + $0x28] sm:$0xff]
        %v2014 = vld [vmem:[#allocation2 + $0x30] sm:$0xff]
        %v2015 = vld [vmem:[#allocation2 + $0x38] sm:$0xff]
        %v2016 = vld [vmem:[#allocation2 + $0x40] sm:$0xff]
        %v2017 = vld [vmem:[#allocation2 + $0x48] sm:$0xff]
        %v2018 = vld [vmem:[#allocation2 + $0x50] sm:$0xff]
        %v2019 = vld [vmem:[#allocation2 + $0x58] sm:$0xff]
        %v2020 = vld [vmem:[#allocation2 + $0x60] sm:$0xff]
        %v2021 = vld [vmem:[#allocation2 + $0x68] sm:$0xff]
        %v2022 = vld [vmem:[#allocation2 + $0x70] sm:$0xff]
        %v2023 = vld [vmem:[#allocation2 + $0x78] sm:$0xff]
        %v2024 = vld [vmem:[#allocation2 + $0x80] sm:$0xff]
        %v2025 = vld [vmem:[#allocation2 + $0x88] sm:$0xff]
        %v2026 = vld [vmem:[#allocation2 + $0x90] sm:$0xff]
        %v2027 = vld [vmem:[#allocation2 + $0x98] sm:$0xff]
        %v2028 = vld [vmem:[#allocation2 + $0xa0] sm:$0xff]
        %v2029 = vld [vmem:[#allocation2 + $0xa8] sm:$0xff]
        %v2030 = vld [vmem:[#allocation2 + $0xb0] sm:$0xf]
        %v2031 = vadd.f32 %v2008, %v1950
        %v2032 = vadd.f32 %v2009, %v1952
        %v2033 = vadd.f32 %v2010, %v1955
        %v2034 = vadd.f32 %v2011, %v1957
        %v2035 = vadd.f32 %v2012, %v1960
        %v2036 = vadd.f32 %v2013, %v1962
        %v2037 = vadd.f32 %v2014, %v1965
        %v2038 = vadd.f32 %v2015, %v1967
        %v2039 = vadd.f32 %v2016, %v1970
        %v2040 = vadd.f32 %v2017, %v1972
        %v2041 = vadd.f32 %v2018, %v1975
        %v2042 = vadd.f32 %v2019, %v1977
        %v2043 = vadd.f32 %v2020, %v1980
        %v2044 = vadd.f32 %v2021, %v1982
        %v2045 = vadd.f32 %v2022, %v1985
        %v2046 = vadd.f32 %v2023, %v1987
        %v2047 = vadd.f32 %v2024, %v1990
        %v2048 = vadd.f32 %v2025, %v1992
        %v2049 = vadd.f32 %v2026, %v1995
        %v2050 = vadd.f32 %v2027, %v1997
        %v2051 = vadd.f32 %v2028, %v2000
        %v2052 = vadd.f32 %v2029, %v2002
        %v2053 = vadd.f32 %v2030, %v2005
        %2054 = vst [vmem:[#allocation2] sm:$0xff] %v2031
        %2055 = vst [vmem:[#allocation2 + $0x8] sm:$0xff] %v2032
        %2056 = vst [vmem:[#allocation2 + $0x10] sm:$0xff] %v2033
        %2057 = vst [vmem:[#allocation2 + $0x18] sm:$0xff] %v2034
        %2058 = vst [vmem:[#allocation2 + $0x20] sm:$0xff] %v2035
        %2059 = vst [vmem:[#allocation2 + $0x28] sm:$0xff] %v2036
        %2060 = vst [vmem:[#allocation2 + $0x30] sm:$0xff] %v2037
        %2061 = vst [vmem:[#allocation2 + $0x38] sm:$0xff] %v2038
        %2062 = vst [vmem:[#allocation2 + $0x40] sm:$0xff] %v2039
        %2063 = vst [vmem:[#allocation2 + $0x48] sm:$0xff] %v2040
        %2064 = vst [vmem:[#allocation2 + $0x50] sm:$0xff] %v2041
        %2065 = vst [vmem:[#allocation2 + $0x58] sm:$0xff] %v2042
        %2066 = vst [vmem:[#allocation2 + $0x60] sm:$0xff] %v2043
        %2067 = vst [vmem:[#allocation2 + $0x68] sm:$0xff] %v2044
        %2068 = vst [vmem:[#allocation2 + $0x70] sm:$0xff] %v2045
        %2069 = vst [vmem:[#allocation2 + $0x78] sm:$0xff] %v2046
        %2070 = vst [vmem:[#allocation2 + $0x80] sm:$0xff] %v2047
        %2071 = vst [vmem:[#allocation2 + $0x88] sm:$0xff] %v2048
        %2072 = vst [vmem:[#allocation2 + $0x90] sm:$0xff] %v2049
        %2073 = vst [vmem:[#allocation2 + $0x98] sm:$0xff] %v2050
        %2074 = vst [vmem:[#allocation2 + $0xa0] sm:$0xff] %v2051
        %2075 = vst [vmem:[#allocation2 + $0xa8] sm:$0xff] %v2052
        %2076 = vst [vmem:[#allocation2 + $0xb0] sm:$0xf] %v2053
        %v2077 = vld [vmem:[%s343 + $0x8] sm:$0xc]
        %v2078 = vld [vmem:[%s343 + $0xc] sm:$0xf]
        %v2079 = vld [vmem:[%s343 + $0x10] sm:$0xf]
        %v2080 = vld [vmem:[%s343 + $0x14] sm:$0xf]
        %v2081 = vld [vmem:[%s343 + $0x18] sm:$0xf]
        %v2082 = vld [vmem:[%s343 + $0x1c] sm:$0xf]
        %v2083 = vld [vmem:[%s343 + $0x20] sm:$0xf]
        %v2084 = vld [vmem:[%s343 + $0x24] sm:$0xf]
        %v2085 = vld [vmem:[%s343 + $0x28] sm:$0xf]
        %v2086 = vld [vmem:[%s343 + $0x2c] sm:$0xf]
        %v2087 = vld [vmem:[%s343 + $0x30] sm:$0xf]
        %v2088 = vld [vmem:[%s343 + $0x34] sm:$0xf]
        %v2089 = vld [vmem:[%s343 + $0x38] sm:$0xf]
        %v2090 = vld [vmem:[%s343 + $0x3c] sm:$0xf]
        %v2091 = vld [vmem:[%s343 + $0x40] sm:$0xf]
        %v2092 = vld [vmem:[%s343 + $0x44] sm:$0xf]
        %v2093 = vld [vmem:[%s343 + $0x48] sm:$0xf]
        %v2094 = vld [vmem:[%s343 + $0x4c] sm:$0xf]
        %v2095 = vld [vmem:[%s343 + $0x50] sm:$0xf]
        %v2096 = vld [vmem:[%s343 + $0x54] sm:$0xf]
        %v2097 = vld [vmem:[%s343 + $0x58] sm:$0xf]
        %v2098 = vld [vmem:[%s343 + $0x5c] sm:$0xf]
        %v2099 = vld [vmem:[%s343 + $0x60] sm:$0xf]
        %s2100 = scalar_lea.vmem [#allocation7], 320
        %v2101 = vld [vmem:[%s2100] sm:$0xf]
        %v2102 = vld [vmem:[%s2100 + $0x4] sm:$0xf]
        %v2103 = vld [vmem:[%s2100 + $0x8] sm:$0xf]
        %v2104 = vld [vmem:[%s2100 + $0xc] sm:$0xf]
        %v2105 = vld [vmem:[%s2100 + $0x10] sm:$0xf]
        %v2106 = vld [vmem:[%s2100 + $0x14] sm:$0xf]
        %v2107 = vld [vmem:[%s2100 + $0x18] sm:$0xf]
        %v2108 = vld [vmem:[%s2100 + $0x1c] sm:$0xf]
        %v2109 = vld [vmem:[%s2100 + $0x20] sm:$0xf]
        %v2110 = vld [vmem:[%s2100 + $0x24] sm:$0xf]
        %v2111 = vld [vmem:[%s2100 + $0x28] sm:$0xf]
        %v2112 = vld [vmem:[%s2100 + $0x2c] sm:$0xf]
        %v2113 = vld [vmem:[%s2100 + $0x30] sm:$0xf]
        %v2114 = vld [vmem:[%s2100 + $0x34] sm:$0xf]
        %v2115 = vld [vmem:[%s2100 + $0x38] sm:$0xf]
        %v2116 = vld [vmem:[%s2100 + $0x3c] sm:$0xf]
        %v2140 = vunpack.c.l.b16 %v2077
        %v2141 = vunpack.c.l.b16 %v2078
        %v2142 = vunpack.c.l.b16 %v2079
        %v2143 = vunpack.c.l.b16 %v2080
        %v2144 = vunpack.c.l.b16 %v2081
        %v2145 = vunpack.c.l.b16 %v2082
        %v2146 = vunpack.c.l.b16 %v2083
        %v2147 = vunpack.c.l.b16 %v2084
        %v2148 = vunpack.c.l.b16 %v2085
        %v2149 = vunpack.c.l.b16 %v2086
        %v2150 = vunpack.c.l.b16 %v2087
        %v2151 = vunpack.c.l.b16 %v2088
        %v2152 = vunpack.c.l.b16 %v2089
        %v2153 = vunpack.c.l.b16 %v2090
        %v2154 = vunpack.c.l.b16 %v2091
        %v2155 = vunpack.c.l.b16 %v2092
        %v2156 = vunpack.c.l.b16 %v2093
        %v2157 = vunpack.c.l.b16 %v2094
        %v2158 = vunpack.c.l.b16 %v2095
        %v2159 = vunpack.c.l.b16 %v2096
        %v2160 = vunpack.c.l.b16 %v2097
        %v2161 = vunpack.c.l.b16 %v2098
        %v2162 = vunpack.c.l.b16 %v2099
        %v2163 = vpack.c.b16 %v2141, %v2140
        %v2164 = vpack.c.b16 %v2143, %v2142
        %v2165 = vpack.c.b16 %v2145, %v2144
        %v2166 = vpack.c.b16 %v2147, %v2146
        %v2167 = vpack.c.b16 %v2149, %v2148
        %v2168 = vpack.c.b16 %v2151, %v2150
        %v2169 = vpack.c.b16 %v2153, %v2152
        %v2170 = vpack.c.b16 %v2155, %v2154
        %v2171 = vpack.c.b16 %v2157, %v2156
        %v2172 = vpack.c.b16 %v2159, %v2158
        %v2173 = vpack.c.b16 %v2161, %v2160
        %v2174 = vpack.c.b16 %v2162, %v2162
        %vm2175 = vcmask 1045504
        %v2176 = vrot.slane %v2163, 2
        %v2177 = vrot.slane %v2164, 2
        %v2178 = vsel %vm2175, %v2176, %v2177
        %v2179 = vrot.slane %v2165, 2
        %v2180 = vsel %vm2175, %v2177, %v2179
        %v2181 = vrot.slane %v2166, 2
        %v2182 = vsel %vm2175, %v2179, %v2181
        %v2183 = vrot.slane %v2167, 2
        %v2184 = vsel %vm2175, %v2181, %v2183
        %v2185 = vrot.slane %v2168, 2
        %v2186 = vsel %vm2175, %v2183, %v2185
        %v2187 = vrot.slane %v2169, 2
        %v2188 = vsel %vm2175, %v2185, %v2187
        %v2189 = vrot.slane %v2170, 2
        %v2190 = vsel %vm2175, %v2187, %v2189
        %v2191 = vrot.slane %v2171, 2
        %v2192 = vsel %vm2175, %v2189, %v2191
        %v2193 = vrot.slane %v2172, 2
        %v2194 = vsel %vm2175, %v2191, %v2193
        %v2195 = vrot.slane %v2173, 2
        %v2196 = vsel %vm2175, %v2193, %v2195
        %v2197 = vrot.slane %v2174, 2
        %v2198 = vsel %vm2175, %v2195, %v2197
        %v2227 = vunpack.c.l.b16 %v2101
        %v2228 = vunpack.c.l.b16 %v2102
        %v2229 = vunpack.c.l.b16 %v2103
        %v2230 = vunpack.c.l.b16 %v2104
        %v2231 = vunpack.c.l.b16 %v2105
        %v2232 = vunpack.c.l.b16 %v2106
        %v2233 = vunpack.c.l.b16 %v2107
        %v2234 = vunpack.c.l.b16 %v2108
        %v2235 = vunpack.c.l.b16 %v2109
        %v2236 = vunpack.c.l.b16 %v2110
        %v2237 = vunpack.c.l.b16 %v2111
        %v2238 = vunpack.c.l.b16 %v2112
        %v2239 = vunpack.c.l.b16 %v2113
        %v2240 = vunpack.c.l.b16 %v2114
        %v2241 = vunpack.c.l.b16 %v2115
        %v2242 = vunpack.c.l.b16 %v2116
        %v2243 = vpack.c.b16 %v2228, %v2227
        %v2244 = vpack.c.b16 %v2230, %v2229
        %v2245 = vpack.c.b16 %v2232, %v2231
        %v2246 = vpack.c.b16 %v2234, %v2233
        %v2247 = vpack.c.b16 %v2236, %v2235
        %v2248 = vpack.c.b16 %v2238, %v2237
        %v2249 = vpack.c.b16 %v2240, %v2239
        %v2250 = vpack.c.b16 %v2242, %v2241
        %2259 = vmatpush.bf16.msra.mxu0 %v2250
        %2260 = vmatpush.bf16.msra.mxu0 %v2249
        %2261 = vmatpush.bf16.msra.mxu0 %v2248
        %2262 = vmatpush.bf16.msra.mxu0 %v2247
        %2263 = vmatpush.bf16.msra.mxu0 %v2246
        %2264 = vmatpush.bf16.msra.mxu0 %v2245
        %2265 = vmatpush.bf16.msra.mxu0 %v2244
        %2266 = vmatpush.bf16.msra.mxu0 %v2243
        %2267 = vmatmul.bf16.gmra.mxu0 %v2178
        %v2268 = vpop.f32.mrf.mxu0
        %v2269 = vadd.f32 0.0, %v2268
        %v2270 = vpop.f32.mrf.mxu0
        %v2271 = vadd.f32 0.0, %v2270
        %2272 = vmatmul.bf16.gmra.mxu0 %v2180
        %v2273 = vpop.f32.mrf.mxu0
        %v2274 = vadd.f32 0.0, %v2273
        %v2275 = vpop.f32.mrf.mxu0
        %v2276 = vadd.f32 0.0, %v2275
        %2277 = vmatmul.bf16.gmra.mxu0 %v2182
        %v2278 = vpop.f32.mrf.mxu0
        %v2279 = vadd.f32 0.0, %v2278
        %v2280 = vpop.f32.mrf.mxu0
        %v2281 = vadd.f32 0.0, %v2280
        %2282 = vmatmul.bf16.gmra.mxu0 %v2184
        %v2283 = vpop.f32.mrf.mxu0
        %v2284 = vadd.f32 0.0, %v2283
        %v2285 = vpop.f32.mrf.mxu0
        %v2286 = vadd.f32 0.0, %v2285
        %2287 = vmatmul.bf16.gmra.mxu0 %v2186
        %v2288 = vpop.f32.mrf.mxu0
        %v2289 = vadd.f32 0.0, %v2288
        %v2290 = vpop.f32.mrf.mxu0
        %v2291 = vadd.f32 0.0, %v2290
        %2292 = vmatmul.bf16.gmra.mxu0 %v2188
        %v2293 = vpop.f32.mrf.mxu0
        %v2294 = vadd.f32 0.0, %v2293
        %v2295 = vpop.f32.mrf.mxu0
        %v2296 = vadd.f32 0.0, %v2295
        %2297 = vmatmul.bf16.gmra.mxu0 %v2190
        %v2298 = vpop.f32.mrf.mxu0
        %v2299 = vadd.f32 0.0, %v2298
        %v2300 = vpop.f32.mrf.mxu0
        %v2301 = vadd.f32 0.0, %v2300
        %2302 = vmatmul.bf16.gmra.mxu0 %v2192
        %v2303 = vpop.f32.mrf.mxu0
        %v2304 = vadd.f32 0.0, %v2303
        %v2305 = vpop.f32.mrf.mxu0
        %v2306 = vadd.f32 0.0, %v2305
        %2307 = vmatmul.bf16.gmra.mxu0 %v2194
        %v2308 = vpop.f32.mrf.mxu0
        %v2309 = vadd.f32 0.0, %v2308
        %v2310 = vpop.f32.mrf.mxu0
        %v2311 = vadd.f32 0.0, %v2310
        %2312 = vmatmul.bf16.gmra.mxu0 %v2196
        %v2313 = vpop.f32.mrf.mxu0
        %v2314 = vadd.f32 0.0, %v2313
        %v2315 = vpop.f32.mrf.mxu0
        %v2316 = vadd.f32 0.0, %v2315
        %2317 = vmatmul.bf16.gmra.mxu0 %v2198
        %v2318 = vpop.f32.mrf.mxu0
        %v2319 = vadd.f32 0.0, %v2318
        %v2320 = vpop.f32.mrf.mxu0
        %v2321 = vadd.f32 0.0, %v2320
        %2322 = vmatmul.bf16.gmra.mxu0 %v2197
        %v2323 = vpop.f32.mrf.mxu0
        %v2324 = vadd.f32 0.0, %v2323
        %v2325 = vpop.f32.mrf.mxu0
        %2326 = vdwg.mxu0
        %v2327 = vld [vmem:[#allocation2] sm:$0xff]
        %v2328 = vld [vmem:[#allocation2 + $0x8] sm:$0xff]
        %v2329 = vld [vmem:[#allocation2 + $0x10] sm:$0xff]
        %v2330 = vld [vmem:[#allocation2 + $0x18] sm:$0xff]
        %v2331 = vld [vmem:[#allocation2 + $0x20] sm:$0xff]
        %v2332 = vld [vmem:[#allocation2 + $0x28] sm:$0xff]
        %v2333 = vld [vmem:[#allocation2 + $0x30] sm:$0xff]
        %v2334 = vld [vmem:[#allocation2 + $0x38] sm:$0xff]
        %v2335 = vld [vmem:[#allocation2 + $0x40] sm:$0xff]
        %v2336 = vld [vmem:[#allocation2 + $0x48] sm:$0xff]
        %v2337 = vld [vmem:[#allocation2 + $0x50] sm:$0xff]
        %v2338 = vld [vmem:[#allocation2 + $0x58] sm:$0xff]
        %v2339 = vld [vmem:[#allocation2 + $0x60] sm:$0xff]
        %v2340 = vld [vmem:[#allocation2 + $0x68] sm:$0xff]
        %v2341 = vld [vmem:[#allocation2 + $0x70] sm:$0xff]
        %v2342 = vld [vmem:[#allocation2 + $0x78] sm:$0xff]
        %v2343 = vld [vmem:[#allocation2 + $0x80] sm:$0xff]
        %v2344 = vld [vmem:[#allocation2 + $0x88] sm:$0xff]
        %v2345 = vld [vmem:[#allocation2 + $0x90] sm:$0xff]
        %v2346 = vld [vmem:[#allocation2 + $0x98] sm:$0xff]
        %v2347 = vld [vmem:[#allocation2 + $0xa0] sm:$0xff]
        %v2348 = vld [vmem:[#allocation2 + $0xa8] sm:$0xff]
        %v2349 = vld [vmem:[#allocation2 + $0xb0] sm:$0xf]
        %v2350 = vadd.f32 %v2327, %v2269
        %v2351 = vadd.f32 %v2328, %v2271
        %v2352 = vadd.f32 %v2329, %v2274
        %v2353 = vadd.f32 %v2330, %v2276
        %v2354 = vadd.f32 %v2331, %v2279
        %v2355 = vadd.f32 %v2332, %v2281
        %v2356 = vadd.f32 %v2333, %v2284
        %v2357 = vadd.f32 %v2334, %v2286
        %v2358 = vadd.f32 %v2335, %v2289
        %v2359 = vadd.f32 %v2336, %v2291
        %v2360 = vadd.f32 %v2337, %v2294
        %v2361 = vadd.f32 %v2338, %v2296
        %v2362 = vadd.f32 %v2339, %v2299
        %v2363 = vadd.f32 %v2340, %v2301
        %v2364 = vadd.f32 %v2341, %v2304
        %v2365 = vadd.f32 %v2342, %v2306
        %v2366 = vadd.f32 %v2343, %v2309
        %v2367 = vadd.f32 %v2344, %v2311
        %v2368 = vadd.f32 %v2345, %v2314
        %v2369 = vadd.f32 %v2346, %v2316
        %v2370 = vadd.f32 %v2347, %v2319
        %v2371 = vadd.f32 %v2348, %v2321
        %v2372 = vadd.f32 %v2349, %v2324
        %2373 = vst [vmem:[#allocation2] sm:$0xff] %v2350
        %2374 = vst [vmem:[#allocation2 + $0x8] sm:$0xff] %v2351
        %2375 = vst [vmem:[#allocation2 + $0x10] sm:$0xff] %v2352
        %2376 = vst [vmem:[#allocation2 + $0x18] sm:$0xff] %v2353
        %2377 = vst [vmem:[#allocation2 + $0x20] sm:$0xff] %v2354
        %2378 = vst [vmem:[#allocation2 + $0x28] sm:$0xff] %v2355
        %2379 = vst [vmem:[#allocation2 + $0x30] sm:$0xff] %v2356
        %2380 = vst [vmem:[#allocation2 + $0x38] sm:$0xff] %v2357
        %2381 = vst [vmem:[#allocation2 + $0x40] sm:$0xff] %v2358
        %2382 = vst [vmem:[#allocation2 + $0x48] sm:$0xff] %v2359
        %2383 = vst [vmem:[#allocation2 + $0x50] sm:$0xff] %v2360
        %2384 = vst [vmem:[#allocation2 + $0x58] sm:$0xff] %v2361
        %2385 = vst [vmem:[#allocation2 + $0x60] sm:$0xff] %v2362
        %2386 = vst [vmem:[#allocation2 + $0x68] sm:$0xff] %v2363
        %2387 = vst [vmem:[#allocation2 + $0x70] sm:$0xff] %v2364
        %2388 = vst [vmem:[#allocation2 + $0x78] sm:$0xff] %v2365
        %2389 = vst [vmem:[#allocation2 + $0x80] sm:$0xff] %v2366
        %2390 = vst [vmem:[#allocation2 + $0x88] sm:$0xff] %v2367
        %2391 = vst [vmem:[#allocation2 + $0x90] sm:$0xff] %v2368
        %2392 = vst [vmem:[#allocation2 + $0x98] sm:$0xff] %v2369
        %2393 = vst [vmem:[#allocation2 + $0xa0] sm:$0xff] %v2370
        %2394 = vst [vmem:[#allocation2 + $0xa8] sm:$0xff] %v2371
        %2395 = vst [vmem:[#allocation2 + $0xb0] sm:$0xf] %v2372
        %v2396 = vld [vmem:[%s343 + $0x10] sm:$0xc]
        %v2397 = vld [vmem:[%s343 + $0x14] sm:$0xf]
        %v2398 = vld [vmem:[%s343 + $0x18] sm:$0xf]
        %v2399 = vld [vmem:[%s343 + $0x1c] sm:$0xf]
        %v2400 = vld [vmem:[%s343 + $0x20] sm:$0xf]
        %v2401 = vld [vmem:[%s343 + $0x24] sm:$0xf]
        %v2402 = vld [vmem:[%s343 + $0x28] sm:$0xf]
        %v2403 = vld [vmem:[%s343 + $0x2c] sm:$0xf]
        %v2404 = vld [vmem:[%s343 + $0x30] sm:$0xf]
        %v2405 = vld [vmem:[%s343 + $0x34] sm:$0xf]
        %v2406 = vld [vmem:[%s343 + $0x38] sm:$0xf]
        %v2407 = vld [vmem:[%s343 + $0x3c] sm:$0xf]
        %v2408 = vld [vmem:[%s343 + $0x40] sm:$0xf]
        %v2409 = vld [vmem:[%s343 + $0x44] sm:$0xf]
        %v2410 = vld [vmem:[%s343 + $0x48] sm:$0xf]
        %v2411 = vld [vmem:[%s343 + $0x4c] sm:$0xf]
        %v2412 = vld [vmem:[%s343 + $0x50] sm:$0xf]
        %v2413 = vld [vmem:[%s343 + $0x54] sm:$0xf]
        %v2414 = vld [vmem:[%s343 + $0x58] sm:$0xf]
        %v2415 = vld [vmem:[%s343 + $0x5c] sm:$0xf]
        %v2416 = vld [vmem:[%s343 + $0x60] sm:$0xf]
        %v2417 = vld [vmem:[%s343 + $0x64] sm:$0xf]
        %v2418 = vld [vmem:[%s343 + $0x68] sm:$0xf]
        %s2419 = scalar_lea.vmem [#allocation7], 384
        %v2420 = vld [vmem:[%s2419] sm:$0xf]
        %v2421 = vld [vmem:[%s2419 + $0x4] sm:$0xf]
        %v2422 = vld [vmem:[%s2419 + $0x8] sm:$0xf]
        %v2423 = vld [vmem:[%s2419 + $0xc] sm:$0xf]
        %v2424 = vld [vmem:[%s2419 + $0x10] sm:$0xf]
        %v2425 = vld [vmem:[%s2419 + $0x14] sm:$0xf]
        %v2426 = vld [vmem:[%s2419 + $0x18] sm:$0xf]
        %v2427 = vld [vmem:[%s2419 + $0x1c] sm:$0xf]
        %v2428 = vld [vmem:[%s2419 + $0x20] sm:$0xf]
        %v2429 = vld [vmem:[%s2419 + $0x24] sm:$0xf]
        %v2430 = vld [vmem:[%s2419 + $0x28] sm:$0xf]
        %v2431 = vld [vmem:[%s2419 + $0x2c] sm:$0xf]
        %v2432 = vld [vmem:[%s2419 + $0x30] sm:$0xf]
        %v2433 = vld [vmem:[%s2419 + $0x34] sm:$0xf]
        %v2434 = vld [vmem:[%s2419 + $0x38] sm:$0xf]
        %v2435 = vld [vmem:[%s2419 + $0x3c] sm:$0xf]
        %v2459 = vunpack.c.l.b16 %v2396
        %v2460 = vunpack.c.l.b16 %v2397
        %v2461 = vunpack.c.l.b16 %v2398
        %v2462 = vunpack.c.l.b16 %v2399
        %v2463 = vunpack.c.l.b16 %v2400
        %v2464 = vunpack.c.l.b16 %v2401
        %v2465 = vunpack.c.l.b16 %v2402
        %v2466 = vunpack.c.l.b16 %v2403
        %v2467 = vunpack.c.l.b16 %v2404
        %v2468 = vunpack.c.l.b16 %v2405
        %v2469 = vunpack.c.l.b16 %v2406
        %v2470 = vunpack.c.l.b16 %v2407
        %v2471 = vunpack.c.l.b16 %v2408
        %v2472 = vunpack.c.l.b16 %v2409
        %v2473 = vunpack.c.l.b16 %v2410
        %v2474 = vunpack.c.l.b16 %v2411
        %v2475 = vunpack.c.l.b16 %v2412
        %v2476 = vunpack.c.l.b16 %v2413
        %v2477 = vunpack.c.l.b16 %v2414
        %v2478 = vunpack.c.l.b16 %v2415
        %v2479 = vunpack.c.l.b16 %v2416
        %v2480 = vunpack.c.l.b16 %v2417
        %v2481 = vunpack.c.l.b16 %v2418
        %v2482 = vpack.c.b16 %v2460, %v2459
        %v2483 = vpack.c.b16 %v2462, %v2461
        %v2484 = vpack.c.b16 %v2464, %v2463
        %v2485 = vpack.c.b16 %v2466, %v2465
        %v2486 = vpack.c.b16 %v2468, %v2467
        %v2487 = vpack.c.b16 %v2470, %v2469
        %v2488 = vpack.c.b16 %v2472, %v2471
        %v2489 = vpack.c.b16 %v2474, %v2473
        %v2490 = vpack.c.b16 %v2476, %v2475
        %v2491 = vpack.c.b16 %v2478, %v2477
        %v2492 = vpack.c.b16 %v2480, %v2479
        %v2493 = vpack.c.b16 %v2481, %v2481
        %v2494 = vrot.slane %v2482, 2
        %v2495 = vrot.slane %v2483, 2
        %v2496 = vsel %vm2175, %v2494, %v2495
        %v2497 = vrot.slane %v2484, 2
        %v2498 = vsel %vm2175, %v2495, %v2497
        %v2499 = vrot.slane %v2485, 2
        %v2500 = vsel %vm2175, %v2497, %v2499
        %v2501 = vrot.slane %v2486, 2
        %v2502 = vsel %vm2175, %v2499, %v2501
        %v2503 = vrot.slane %v2487, 2
        %v2504 = vsel %vm2175, %v2501, %v2503
        %v2505 = vrot.slane %v2488, 2
        %v2506 = vsel %vm2175, %v2503, %v2505
        %v2507 = vrot.slane %v2489, 2
        %v2508 = vsel %vm2175, %v2505, %v2507
        %v2509 = vrot.slane %v2490, 2
        %v2510 = vsel %vm2175, %v2507, %v2509
        %v2511 = vrot.slane %v2491, 2
        %v2512 = vsel %vm2175, %v2509, %v2511
        %v2513 = vrot.slane %v2492, 2
        %v2514 = vsel %vm2175, %v2511, %v2513
        %v2515 = vrot.slane %v2493, 2
        %v2516 = vsel %vm2175, %v2513, %v2515
        %v2545 = vunpack.c.l.b16 %v2420
        %v2546 = vunpack.c.l.b16 %v2421
        %v2547 = vunpack.c.l.b16 %v2422
        %v2548 = vunpack.c.l.b16 %v2423
        %v2549 = vunpack.c.l.b16 %v2424
        %v2550 = vunpack.c.l.b16 %v2425
        %v2551 = vunpack.c.l.b16 %v2426
        %v2552 = vunpack.c.l.b16 %v2427
        %v2553 = vunpack.c.l.b16 %v2428
        %v2554 = vunpack.c.l.b16 %v2429
        %v2555 = vunpack.c.l.b16 %v2430
        %v2556 = vunpack.c.l.b16 %v2431
        %v2557 = vunpack.c.l.b16 %v2432
        %v2558 = vunpack.c.l.b16 %v2433
        %v2559 = vunpack.c.l.b16 %v2434
        %v2560 = vunpack.c.l.b16 %v2435
        %v2561 = vpack.c.b16 %v2546, %v2545
        %v2562 = vpack.c.b16 %v2548, %v2547
        %v2563 = vpack.c.b16 %v2550, %v2549
        %v2564 = vpack.c.b16 %v2552, %v2551
        %v2565 = vpack.c.b16 %v2554, %v2553
        %v2566 = vpack.c.b16 %v2556, %v2555
        %v2567 = vpack.c.b16 %v2558, %v2557
        %v2568 = vpack.c.b16 %v2560, %v2559
        %2577 = vmatpush.bf16.msra.mxu0 %v2568
        %2578 = vmatpush.bf16.msra.mxu0 %v2567
        %2579 = vmatpush.bf16.msra.mxu0 %v2566
        %2580 = vmatpush.bf16.msra.mxu0 %v2565
        %2581 = vmatpush.bf16.msra.mxu0 %v2564
        %2582 = vmatpush.bf16.msra.mxu0 %v2563
        %2583 = vmatpush.bf16.msra.mxu0 %v2562
        %2584 = vmatpush.bf16.msra.mxu0 %v2561
        %2585 = vmatmul.bf16.gmra.mxu0 %v2496
        %v2586 = vpop.f32.mrf.mxu0
        %v2587 = vadd.f32 0.0, %v2586
        %v2588 = vpop.f32.mrf.mxu0
        %v2589 = vadd.f32 0.0, %v2588
        %2590 = vmatmul.bf16.gmra.mxu0 %v2498
        %v2591 = vpop.f32.mrf.mxu0
        %v2592 = vadd.f32 0.0, %v2591
        %v2593 = vpop.f32.mrf.mxu0
        %v2594 = vadd.f32 0.0, %v2593
        %2595 = vmatmul.bf16.gmra.mxu0 %v2500
        %v2596 = vpop.f32.mrf.mxu0
        %v2597 = vadd.f32 0.0, %v2596
        %v2598 = vpop.f32.mrf.mxu0
        %v2599 = vadd.f32 0.0, %v2598
        %2600 = vmatmul.bf16.gmra.mxu0 %v2502
        %v2601 = vpop.f32.mrf.mxu0
        %v2602 = vadd.f32 0.0, %v2601
        %v2603 = vpop.f32.mrf.mxu0
        %v2604 = vadd.f32 0.0, %v2603
        %2605 = vmatmul.bf16.gmra.mxu0 %v2504
        %v2606 = vpop.f32.mrf.mxu0
        %v2607 = vadd.f32 0.0, %v2606
        %v2608 = vpop.f32.mrf.mxu0
        %v2609 = vadd.f32 0.0, %v2608
        %2610 = vmatmul.bf16.gmra.mxu0 %v2506
        %v2611 = vpop.f32.mrf.mxu0
        %v2612 = vadd.f32 0.0, %v2611
        %v2613 = vpop.f32.mrf.mxu0
        %v2614 = vadd.f32 0.0, %v2613
        %2615 = vmatmul.bf16.gmra.mxu0 %v2508
        %v2616 = vpop.f32.mrf.mxu0
        %v2617 = vadd.f32 0.0, %v2616
        %v2618 = vpop.f32.mrf.mxu0
        %v2619 = vadd.f32 0.0, %v2618
        %2620 = vmatmul.bf16.gmra.mxu0 %v2510
        %v2621 = vpop.f32.mrf.mxu0
        %v2622 = vadd.f32 0.0, %v2621
        %v2623 = vpop.f32.mrf.mxu0
        %v2624 = vadd.f32 0.0, %v2623
        %2625 = vmatmul.bf16.gmra.mxu0 %v2512
        %v2626 = vpop.f32.mrf.mxu0
        %v2627 = vadd.f32 0.0, %v2626
        %v2628 = vpop.f32.mrf.mxu0
        %v2629 = vadd.f32 0.0, %v2628
        %2630 = vmatmul.bf16.gmra.mxu0 %v2514
        %v2631 = vpop.f32.mrf.mxu0
        %v2632 = vadd.f32 0.0, %v2631
        %v2633 = vpop.f32.mrf.mxu0
        %v2634 = vadd.f32 0.0, %v2633
        %2635 = vmatmul.bf16.gmra.mxu0 %v2516
        %v2636 = vpop.f32.mrf.mxu0
        %v2637 = vadd.f32 0.0, %v2636
        %v2638 = vpop.f32.mrf.mxu0
        %v2639 = vadd.f32 0.0, %v2638
        %2640 = vmatmul.bf16.gmra.mxu0 %v2515
        %v2641 = vpop.f32.mrf.mxu0
        %v2642 = vadd.f32 0.0, %v2641
        %v2643 = vpop.f32.mrf.mxu0
        %2644 = vdwg.mxu0
        %v2645 = vld [vmem:[#allocation2] sm:$0xff]
        %v2646 = vld [vmem:[#allocation2 + $0x8] sm:$0xff]
        %v2647 = vld [vmem:[#allocation2 + $0x10] sm:$0xff]
        %v2648 = vld [vmem:[#allocation2 + $0x18] sm:$0xff]
        %v2649 = vld [vmem:[#allocation2 + $0x20] sm:$0xff]
        %v2650 = vld [vmem:[#allocation2 + $0x28] sm:$0xff]
        %v2651 = vld [vmem:[#allocation2 + $0x30] sm:$0xff]
        %v2652 = vld [vmem:[#allocation2 + $0x38] sm:$0xff]
        %v2653 = vld [vmem:[#allocation2 + $0x40] sm:$0xff]
        %v2654 = vld [vmem:[#allocation2 + $0x48] sm:$0xff]
        %v2655 = vld [vmem:[#allocation2 + $0x50] sm:$0xff]
        %v2656 = vld [vmem:[#allocation2 + $0x58] sm:$0xff]
        %v2657 = vld [vmem:[#allocation2 + $0x60] sm:$0xff]
        %v2658 = vld [vmem:[#allocation2 + $0x68] sm:$0xff]
        %v2659 = vld [vmem:[#allocation2 + $0x70] sm:$0xff]
        %v2660 = vld [vmem:[#allocation2 + $0x78] sm:$0xff]
        %v2661 = vld [vmem:[#allocation2 + $0x80] sm:$0xff]
        %v2662 = vld [vmem:[#allocation2 + $0x88] sm:$0xff]
        %v2663 = vld [vmem:[#allocation2 + $0x90] sm:$0xff]
        %v2664 = vld [vmem:[#allocation2 + $0x98] sm:$0xff]
        %v2665 = vld [vmem:[#allocation2 + $0xa0] sm:$0xff]
        %v2666 = vld [vmem:[#allocation2 + $0xa8] sm:$0xff]
        %v2667 = vld [vmem:[#allocation2 + $0xb0] sm:$0xf]
        %v2668 = vadd.f32 %v2645, %v2587
        %v2669 = vadd.f32 %v2646, %v2589
        %v2670 = vadd.f32 %v2647, %v2592
        %v2671 = vadd.f32 %v2648, %v2594
        %v2672 = vadd.f32 %v2649, %v2597
        %v2673 = vadd.f32 %v2650, %v2599
        %v2674 = vadd.f32 %v2651, %v2602
        %v2675 = vadd.f32 %v2652, %v2604
        %v2676 = vadd.f32 %v2653, %v2607
        %v2677 = vadd.f32 %v2654, %v2609
        %v2678 = vadd.f32 %v2655, %v2612
        %v2679 = vadd.f32 %v2656, %v2614
        %v2680 = vadd.f32 %v2657, %v2617
        %v2681 = vadd.f32 %v2658, %v2619
        %v2682 = vadd.f32 %v2659, %v2622
        %v2683 = vadd.f32 %v2660, %v2624
        %v2684 = vadd.f32 %v2661, %v2627
        %v2685 = vadd.f32 %v2662, %v2629
        %v2686 = vadd.f32 %v2663, %v2632
        %v2687 = vadd.f32 %v2664, %v2634
        %v2688 = vadd.f32 %v2665, %v2637
        %v2689 = vadd.f32 %v2666, %v2639
        %v2690 = vadd.f32 %v2667, %v2642
        %2691 = vst [vmem:[#allocation2] sm:$0xff] %v2668
        %2692 = vst [vmem:[#allocation2 + $0x8] sm:$0xff] %v2669
        %2693 = vst [vmem:[#allocation2 + $0x10] sm:$0xff] %v2670
        %2694 = vst [vmem:[#allocation2 + $0x18] sm:$0xff] %v2671
        %2695 = vst [vmem:[#allocation2 + $0x20] sm:$0xff] %v2672
        %2696 = vst [vmem:[#allocation2 + $0x28] sm:$0xff] %v2673
        %2697 = vst [vmem:[#allocation2 + $0x30] sm:$0xff] %v2674
        %2698 = vst [vmem:[#allocation2 + $0x38] sm:$0xff] %v2675
        %2699 = vst [vmem:[#allocation2 + $0x40] sm:$0xff] %v2676
        %2700 = vst [vmem:[#allocation2 + $0x48] sm:$0xff] %v2677
        %2701 = vst [vmem:[#allocation2 + $0x50] sm:$0xff] %v2678
        %2702 = vst [vmem:[#allocation2 + $0x58] sm:$0xff] %v2679
        %2703 = vst [vmem:[#allocation2 + $0x60] sm:$0xff] %v2680
        %2704 = vst [vmem:[#allocation2 + $0x68] sm:$0xff] %v2681
        %2705 = vst [vmem:[#allocation2 + $0x70] sm:$0xff] %v2682
        %2706 = vst [vmem:[#allocation2 + $0x78] sm:$0xff] %v2683
        %2707 = vst [vmem:[#allocation2 + $0x80] sm:$0xff] %v2684
        %2708 = vst [vmem:[#allocation2 + $0x88] sm:$0xff] %v2685
        %2709 = vst [vmem:[#allocation2 + $0x90] sm:$0xff] %v2686
        %2710 = vst [vmem:[#allocation2 + $0x98] sm:$0xff] %v2687
        %2711 = vst [vmem:[#allocation2 + $0xa0] sm:$0xff] %v2688
        %2712 = vst [vmem:[#allocation2 + $0xa8] sm:$0xff] %v2689
        %2713 = vst [vmem:[#allocation2 + $0xb0] sm:$0xf] %v2690
        %v2714 = vld [vmem:[%s343 + $0x10] sm:$0xc]
        %v2715 = vld [vmem:[%s343 + $0x14] sm:$0xf]
        %v2716 = vld [vmem:[%s343 + $0x18] sm:$0xf]
        %v2717 = vld [vmem:[%s343 + $0x1c] sm:$0xf]
        %v2718 = vld [vmem:[%s343 + $0x20] sm:$0xf]
        %v2719 = vld [vmem:[%s343 + $0x24] sm:$0xf]
        %v2720 = vld [vmem:[%s343 + $0x28] sm:$0xf]
        %v2721 = vld [vmem:[%s343 + $0x2c] sm:$0xf]
        %v2722 = vld [vmem:[%s343 + $0x30] sm:$0xf]
        %v2723 = vld [vmem:[%s343 + $0x34] sm:$0xf]
        %v2724 = vld [vmem:[%s343 + $0x38] sm:$0xf]
        %v2725 = vld [vmem:[%s343 + $0x3c] sm:$0xf]
        %v2726 = vld [vmem:[%s343 + $0x40] sm:$0xf]
        %v2727 = vld [vmem:[%s343 + $0x44] sm:$0xf]
        %v2728 = vld [vmem:[%s343 + $0x48] sm:$0xf]
        %v2729 = vld [vmem:[%s343 + $0x4c] sm:$0xf]
        %v2730 = vld [vmem:[%s343 + $0x50] sm:$0xf]
        %v2731 = vld [vmem:[%s343 + $0x54] sm:$0xf]
        %v2732 = vld [vmem:[%s343 + $0x58] sm:$0xf]
        %v2733 = vld [vmem:[%s343 + $0x5c] sm:$0xf]
        %v2734 = vld [vmem:[%s343 + $0x60] sm:$0xf]
        %v2735 = vld [vmem:[%s343 + $0x64] sm:$0xf]
        %v2736 = vld [vmem:[%s343 + $0x68] sm:$0xf]
        %v2737 = vld [vmem:[%s343 + $0x6c] sm:$0x1]
        %s2738 = scalar_lea.vmem [#allocation7], 448
        %v2739 = vld [vmem:[%s2738] sm:$0xf]
        %v2740 = vld [vmem:[%s2738 + $0x4] sm:$0xf]
        %v2741 = vld [vmem:[%s2738 + $0x8] sm:$0xf]
        %v2742 = vld [vmem:[%s2738 + $0xc] sm:$0xf]
        %v2743 = vld [vmem:[%s2738 + $0x10] sm:$0xf]
        %v2744 = vld [vmem:[%s2738 + $0x14] sm:$0xf]
        %v2745 = vld [vmem:[%s2738 + $0x18] sm:$0xf]
        %v2746 = vld [vmem:[%s2738 + $0x1c] sm:$0xf]
        %v2747 = vld [vmem:[%s2738 + $0x20] sm:$0xf]
        %v2748 = vld [vmem:[%s2738 + $0x24] sm:$0xf]
        %v2749 = vld [vmem:[%s2738 + $0x28] sm:$0xf]
        %v2750 = vld [vmem:[%s2738 + $0x2c] sm:$0xf]
        %v2751 = vld [vmem:[%s2738 + $0x30] sm:$0xf]
        %v2752 = vld [vmem:[%s2738 + $0x34] sm:$0xf]
        %v2753 = vld [vmem:[%s2738 + $0x38] sm:$0xf]
        %v2754 = vld [vmem:[%s2738 + $0x3c] sm:$0xf]
        %v2779 = vunpack.c.l.b16 %v2714
        %v2780 = vunpack.c.l.b16 %v2715
        %v2781 = vunpack.c.l.b16 %v2716
        %v2782 = vunpack.c.l.b16 %v2717
        %v2783 = vunpack.c.l.b16 %v2718
        %v2784 = vunpack.c.l.b16 %v2719
        %v2785 = vunpack.c.l.b16 %v2720
        %v2786 = vunpack.c.l.b16 %v2721
        %v2787 = vunpack.c.l.b16 %v2722
        %v2788 = vunpack.c.l.b16 %v2723
        %v2789 = vunpack.c.l.b16 %v2724
        %v2790 = vunpack.c.l.b16 %v2725
        %v2791 = vunpack.c.l.b16 %v2726
        %v2792 = vunpack.c.l.b16 %v2727
        %v2793 = vunpack.c.l.b16 %v2728
        %v2794 = vunpack.c.l.b16 %v2729
        %v2795 = vunpack.c.l.b16 %v2730
        %v2796 = vunpack.c.l.b16 %v2731
        %v2797 = vunpack.c.l.b16 %v2732
        %v2798 = vunpack.c.l.b16 %v2733
        %v2799 = vunpack.c.l.b16 %v2734
        %v2800 = vunpack.c.l.b16 %v2735
        %v2801 = vunpack.c.l.b16 %v2736
        %v2802 = vunpack.c.l.b16 %v2737
        %v2803 = vpack.c.b16 %v2780, %v2779
        %v2804 = vpack.c.b16 %v2782, %v2781
        %v2805 = vpack.c.b16 %v2784, %v2783
        %v2806 = vpack.c.b16 %v2786, %v2785
        %v2807 = vpack.c.b16 %v2788, %v2787
        %v2808 = vpack.c.b16 %v2790, %v2789
        %v2809 = vpack.c.b16 %v2792, %v2791
        %v2810 = vpack.c.b16 %v2794, %v2793
        %v2811 = vpack.c.b16 %v2796, %v2795
        %v2812 = vpack.c.b16 %v2798, %v2797
        %v2813 = vpack.c.b16 %v2800, %v2799
        %v2814 = vpack.c.b16 %v2802, %v2801
        %vm2815 = vsmask.f32 5376
        %v2817 = vshrl.u32 %v2803, 16
        %v2819 = vrot.slane %v2817, 2
        %v2820 = vshll.u32 %v2803, 16
        %v2822 = vrot.slane %v2820, 3
        %v2823 = vor.u32 %v2819, %v2822
        %v2825 = vshrl.u32 %v2804, 16
        %v2827 = vrot.slane %v2825, 2
        %v2828 = vshll.u32 %v2804, 16
        %v2830 = vrot.slane %v2828, 3
        %v2831 = vor.u32 %v2827, %v2830
        %v2832 = vsel %vm2815, %v2823, %v2831
        %v2834 = vshrl.u32 %v2805, 16
        %v2836 = vrot.slane %v2834, 2
        %v2837 = vshll.u32 %v2805, 16
        %v2839 = vrot.slane %v2837, 3
        %v2840 = vor.u32 %v2836, %v2839
        %v2841 = vsel %vm2815, %v2831, %v2840
        %v2843 = vshrl.u32 %v2806, 16
        %v2845 = vrot.slane %v2843, 2
        %v2846 = vshll.u32 %v2806, 16
        %v2848 = vrot.slane %v2846, 3
        %v2849 = vor.u32 %v2845, %v2848
        %v2850 = vsel %vm2815, %v2840, %v2849
        %v2852 = vshrl.u32 %v2807, 16
        %v2854 = vrot.slane %v2852, 2
        %v2855 = vshll.u32 %v2807, 16
        %v2857 = vrot.slane %v2855, 3
        %v2858 = vor.u32 %v2854, %v2857
        %v2859 = vsel %vm2815, %v2849, %v2858
        %v2861 = vshrl.u32 %v2808, 16
        %v2863 = vrot.slane %v2861, 2
        %v2864 = vshll.u32 %v2808, 16
        %v2866 = vrot.slane %v2864, 3
        %v2867 = vor.u32 %v2863, %v2866
        %v2868 = vsel %vm2815, %v2858, %v2867
        %v2870 = vshrl.u32 %v2809, 16
        %v2872 = vrot.slane %v2870, 2
        %v2873 = vshll.u32 %v2809, 16
        %v2875 = vrot.slane %v2873, 3
        %v2876 = vor.u32 %v2872, %v2875
        %v2877 = vsel %vm2815, %v2867, %v2876
        %v2879 = vshrl.u32 %v2810, 16
        %v2881 = vrot.slane %v2879, 2
        %v2882 = vshll.u32 %v2810, 16
        %v2884 = vrot.slane %v2882, 3
        %v2885 = vor.u32 %v2881, %v2884
        %v2886 = vsel %vm2815, %v2876, %v2885
        %v2888 = vshrl.u32 %v2811, 16
        %v2890 = vrot.slane %v2888, 2
        %v2891 = vshll.u32 %v2811, 16
        %v2893 = vrot.slane %v2891, 3
        %v2894 = vor.u32 %v2890, %v2893
        %v2895 = vsel %vm2815, %v2885, %v2894
        %v2897 = vshrl.u32 %v2812, 16
        %v2899 = vrot.slane %v2897, 2
        %v2900 = vshll.u32 %v2812, 16
        %v2902 = vrot.slane %v2900, 3
        %v2903 = vor.u32 %v2899, %v2902
        %v2904 = vsel %vm2815, %v2894, %v2903
        %v2906 = vshrl.u32 %v2813, 16
        %v2908 = vrot.slane %v2906, 2
        %v2909 = vshll.u32 %v2813, 16
        %v2911 = vrot.slane %v2909, 3
        %v2912 = vor.u32 %v2908, %v2911
        %v2913 = vsel %vm2815, %v2903, %v2912
        %v2915 = vshrl.u32 %v2814, 16
        %v2917 = vrot.slane %v2915, 2
        %v2918 = vshll.u32 %v2814, 16
        %v2920 = vrot.slane %v2918, 3
        %v2921 = vor.u32 %v2917, %v2920
        %v2922 = vsel %vm2815, %v2912, %v2921
        %v2951 = vunpack.c.l.b16 %v2739
        %v2952 = vunpack.c.l.b16 %v2740
        %v2953 = vunpack.c.l.b16 %v2741
        %v2954 = vunpack.c.l.b16 %v2742
        %v2955 = vunpack.c.l.b16 %v2743
        %v2956 = vunpack.c.l.b16 %v2744
        %v2957 = vunpack.c.l.b16 %v2745
        %v2958 = vunpack.c.l.b16 %v2746
        %v2959 = vunpack.c.l.b16 %v2747
        %v2960 = vunpack.c.l.b16 %v2748
        %v2961 = vunpack.c.l.b16 %v2749
        %v2962 = vunpack.c.l.b16 %v2750
        %v2963 = vunpack.c.l.b16 %v2751
        %v2964 = vunpack.c.l.b16 %v2752
        %v2965 = vunpack.c.l.b16 %v2753
        %v2966 = vunpack.c.l.b16 %v2754
        %v2967 = vpack.c.b16 %v2952, %v2951
        %v2968 = vpack.c.b16 %v2954, %v2953
        %v2969 = vpack.c.b16 %v2956, %v2955
        %v2970 = vpack.c.b16 %v2958, %v2957
        %v2971 = vpack.c.b16 %v2960, %v2959
        %v2972 = vpack.c.b16 %v2962, %v2961
        %v2973 = vpack.c.b16 %v2964, %v2963
        %v2974 = vpack.c.b16 %v2966, %v2965
        %2983 = vmatpush.bf16.msra.mxu0 %v2974
        %2984 = vmatpush.bf16.msra.mxu0 %v2973
        %2985 = vmatpush.bf16.msra.mxu0 %v2972
        %2986 = vmatpush.bf16.msra.mxu0 %v2971
        %2987 = vmatpush.bf16.msra.mxu0 %v2970
        %2988 = vmatpush.bf16.msra.mxu0 %v2969
        %2989 = vmatpush.bf16.msra.mxu0 %v2968
        %2990 = vmatpush.bf16.msra.mxu0 %v2967
        %2991 = vmatmul.bf16.gmra.mxu0 %v2832
        %v2992 = vpop.f32.mrf.mxu0
        %v2993 = vadd.f32 0.0, %v2992
        %v2994 = vpop.f32.mrf.mxu0
        %v2995 = vadd.f32 0.0, %v2994
        %2996 = vmatmul.bf16.gmra.mxu0 %v2841
        %v2997 = vpop.f32.mrf.mxu0
        %v2998 = vadd.f32 0.0, %v2997
        %v2999 = vpop.f32.mrf.mxu0
        %v3000 = vadd.f32 0.0, %v2999
        %3001 = vmatmul.bf16.gmra.mxu0 %v2850
        %v3002 = vpop.f32.mrf.mxu0
        %v3003 = vadd.f32 0.0, %v3002
        %v3004 = vpop.f32.mrf.mxu0
        %v3005 = vadd.f32 0.0, %v3004
        %3006 = vmatmul.bf16.gmra.mxu0 %v2859
        %v3007 = vpop.f32.mrf.mxu0
        %v3008 = vadd.f32 0.0, %v3007
        %v3009 = vpop.f32.mrf.mxu0
        %v3010 = vadd.f32 0.0, %v3009
        %3011 = vmatmul.bf16.gmra.mxu0 %v2868
        %v3012 = vpop.f32.mrf.mxu0
        %v3013 = vadd.f32 0.0, %v3012
        %v3014 = vpop.f32.mrf.mxu0
        %v3015 = vadd.f32 0.0, %v3014
        %3016 = vmatmul.bf16.gmra.mxu0 %v2877
        %v3017 = vpop.f32.mrf.mxu0
        %v3018 = vadd.f32 0.0, %v3017
        %v3019 = vpop.f32.mrf.mxu0
        %v3020 = vadd.f32 0.0, %v3019
        %3021 = vmatmul.bf16.gmra.mxu0 %v2886
        %v3022 = vpop.f32.mrf.mxu0
        %v3023 = vadd.f32 0.0, %v3022
        %v3024 = vpop.f32.mrf.mxu0
        %v3025 = vadd.f32 0.0, %v3024
        %3026 = vmatmul.bf16.gmra.mxu0 %v2895
        %v3027 = vpop.f32.mrf.mxu0
        %v3028 = vadd.f32 0.0, %v3027
        %v3029 = vpop.f32.mrf.mxu0
        %v3030 = vadd.f32 0.0, %v3029
        %3031 = vmatmul.bf16.gmra.mxu0 %v2904
        %v3032 = vpop.f32.mrf.mxu0
        %v3033 = vadd.f32 0.0, %v3032
        %v3034 = vpop.f32.mrf.mxu0
        %v3035 = vadd.f32 0.0, %v3034
        %3036 = vmatmul.bf16.gmra.mxu0 %v2913
        %v3037 = vpop.f32.mrf.mxu0
        %v3038 = vadd.f32 0.0, %v3037
        %v3039 = vpop.f32.mrf.mxu0
        %v3040 = vadd.f32 0.0, %v3039
        %3041 = vmatmul.bf16.gmra.mxu0 %v2922
        %v3042 = vpop.f32.mrf.mxu0
        %v3043 = vadd.f32 0.0, %v3042
        %v3044 = vpop.f32.mrf.mxu0
        %v3045 = vadd.f32 0.0, %v3044
        %3046 = vmatmul.bf16.gmra.mxu0 %v2921
        %v3047 = vpop.f32.mrf.mxu0
        %v3048 = vadd.f32 0.0, %v3047
        %v3049 = vpop.f32.mrf.mxu0
        %3050 = vdwg.mxu0
        %v3051 = vld [vmem:[#allocation2] sm:$0xff]
        %v3052 = vld [vmem:[#allocation2 + $0x8] sm:$0xff]
        %v3053 = vld [vmem:[#allocation2 + $0x10] sm:$0xff]
        %v3054 = vld [vmem:[#allocation2 + $0x18] sm:$0xff]
        %v3055 = vld [vmem:[#allocation2 + $0x20] sm:$0xff]
        %v3056 = vld [vmem:[#allocation2 + $0x28] sm:$0xff]
        %v3057 = vld [vmem:[#allocation2 + $0x30] sm:$0xff]
        %v3058 = vld [vmem:[#allocation2 + $0x38] sm:$0xff]
        %v3059 = vld [vmem:[#allocation2 + $0x40] sm:$0xff]
        %v3060 = vld [vmem:[#allocation2 + $0x48] sm:$0xff]
        %v3061 = vld [vmem:[#allocation2 + $0x50] sm:$0xff]
        %v3062 = vld [vmem:[#allocation2 + $0x58] sm:$0xff]
        %v3063 = vld [vmem:[#allocation2 + $0x60] sm:$0xff]
        %v3064 = vld [vmem:[#allocation2 + $0x68] sm:$0xff]
        %v3065 = vld [vmem:[#allocation2 + $0x70] sm:$0xff]
        %v3066 = vld [vmem:[#allocation2 + $0x78] sm:$0xff]
        %v3067 = vld [vmem:[#allocation2 + $0x80] sm:$0xff]
        %v3068 = vld [vmem:[#allocation2 + $0x88] sm:$0xff]
        %v3069 = vld [vmem:[#allocation2 + $0x90] sm:$0xff]
        %v3070 = vld [vmem:[#allocation2 + $0x98] sm:$0xff]
        %v3071 = vld [vmem:[#allocation2 + $0xa0] sm:$0xff]
        %v3072 = vld [vmem:[#allocation2 + $0xa8] sm:$0xff]
        %v3073 = vld [vmem:[#allocation2 + $0xb0] sm:$0xf]
        %v3074 = vadd.f32 %v3051, %v2993
        %v3075 = vadd.f32 %v3052, %v2995
        %v3076 = vadd.f32 %v3053, %v2998
        %v3077 = vadd.f32 %v3054, %v3000
        %v3078 = vadd.f32 %v3055, %v3003
        %v3079 = vadd.f32 %v3056, %v3005
        %v3080 = vadd.f32 %v3057, %v3008
        %v3081 = vadd.f32 %v3058, %v3010
        %v3082 = vadd.f32 %v3059, %v3013
        %v3083 = vadd.f32 %v3060, %v3015
        %v3084 = vadd.f32 %v3061, %v3018
        %v3085 = vadd.f32 %v3062, %v3020
        %v3086 = vadd.f32 %v3063, %v3023
        %v3087 = vadd.f32 %v3064, %v3025
        %v3088 = vadd.f32 %v3065, %v3028
        %v3089 = vadd.f32 %v3066, %v3030
        %v3090 = vadd.f32 %v3067, %v3033
        %v3091 = vadd.f32 %v3068, %v3035
        %v3092 = vadd.f32 %v3069, %v3038
        %v3093 = vadd.f32 %v3070, %v3040
        %v3094 = vadd.f32 %v3071, %v3043
        %v3095 = vadd.f32 %v3072, %v3045
        %v3096 = vadd.f32 %v3073, %v3048
        %3097 = vst [vmem:[#allocation2] sm:$0xff] %v3074
        %3098 = vst [vmem:[#allocation2 + $0x8] sm:$0xff] %v3075
        %3099 = vst [vmem:[#allocation2 + $0x10] sm:$0xff] %v3076
        %3100 = vst [vmem:[#allocation2 + $0x18] sm:$0xff] %v3077
        %3101 = vst [vmem:[#allocation2 + $0x20] sm:$0xff] %v3078
        %3102 = vst [vmem:[#allocation2 + $0x28] sm:$0xff] %v3079
        %3103 = vst [vmem:[#allocation2 + $0x30] sm:$0xff] %v3080
        %3104 = vst [vmem:[#allocation2 + $0x38] sm:$0xff] %v3081
        %3105 = vst [vmem:[#allocation2 + $0x40] sm:$0xff] %v3082
        %3106 = vst [vmem:[#allocation2 + $0x48] sm:$0xff] %v3083
        %3107 = vst [vmem:[#allocation2 + $0x50] sm:$0xff] %v3084
        %3108 = vst [vmem:[#allocation2 + $0x58] sm:$0xff] %v3085
        %3109 = vst [vmem:[#allocation2 + $0x60] sm:$0xff] %v3086
        %3110 = vst [vmem:[#allocation2 + $0x68] sm:$0xff] %v3087
        %3111 = vst [vmem:[#allocation2 + $0x70] sm:$0xff] %v3088
        %3112 = vst [vmem:[#allocation2 + $0x78] sm:$0xff] %v3089
        %3113 = vst [vmem:[#allocation2 + $0x80] sm:$0xff] %v3090
        %3114 = vst [vmem:[#allocation2 + $0x88] sm:$0xff] %v3091
        %3115 = vst [vmem:[#allocation2 + $0x90] sm:$0xff] %v3092
        %3116 = vst [vmem:[#allocation2 + $0x98] sm:$0xff] %v3093
        %3117 = vst [vmem:[#allocation2 + $0xa0] sm:$0xff] %v3094
        %3118 = vst [vmem:[#allocation2 + $0xa8] sm:$0xff] %v3095
        %3119 = vst [vmem:[#allocation2 + $0xb0] sm:$0xf] %v3096
        %v3120 = vld [vmem:[%s343 + $0x10] sm:$0x8]
        %v3121 = vld [vmem:[%s343 + $0x14] sm:$0xf]
        %v3122 = vld [vmem:[%s343 + $0x18] sm:$0xf]
        %v3123 = vld [vmem:[%s343 + $0x1c] sm:$0xf]
        %v3124 = vld [vmem:[%s343 + $0x20] sm:$0xf]
        %v3125 = vld [vmem:[%s343 + $0x24] sm:$0xf]
        %v3126 = vld [vmem:[%s343 + $0x28] sm:$0xf]
        %v3127 = vld [vmem:[%s343 + $0x2c] sm:$0xf]
        %v3128 = vld [vmem:[%s343 + $0x30] sm:$0xf]
        %v3129 = vld [vmem:[%s343 + $0x34] sm:$0xf]
        %v3130 = vld [vmem:[%s343 + $0x38] sm:$0xf]
        %v3131 = vld [vmem:[%s343 + $0x3c] sm:$0xf]
        %v3132 = vld [vmem:[%s343 + $0x40] sm:$0xf]
        %v3133 = vld [vmem:[%s343 + $0x44] sm:$0xf]
        %v3134 = vld [vmem:[%s343 + $0x48] sm:$0xf]
        %v3135 = vld [vmem:[%s343 + $0x4c] sm:$0xf]
        %v3136 = vld [vmem:[%s343 + $0x50] sm:$0xf]
        %v3137 = vld [vmem:[%s343 + $0x54] sm:$0xf]
        %v3138 = vld [vmem:[%s343 + $0x58] sm:$0xf]
        %v3139 = vld [vmem:[%s343 + $0x5c] sm:$0xf]
        %v3140 = vld [vmem:[%s343 + $0x60] sm:$0xf]
        %v3141 = vld [vmem:[%s343 + $0x64] sm:$0xf]
        %v3142 = vld [vmem:[%s343 + $0x68] sm:$0xf]
        %v3143 = vld [vmem:[%s343 + $0x6c] sm:$0x1]
        %s3144 = scalar_lea.vmem [#allocation7], 512
        %v3145 = vld [vmem:[%s3144] sm:$0xf]
        %v3146 = vld [vmem:[%s3144 + $0x4] sm:$0xf]
        %v3147 = vld [vmem:[%s3144 + $0x8] sm:$0xf]
        %v3148 = vld [vmem:[%s3144 + $0xc] sm:$0xf]
        %v3149 = vld [vmem:[%s3144 + $0x10] sm:$0xf]
        %v3150 = vld [vmem:[%s3144 + $0x14] sm:$0xf]
        %v3151 = vld [vmem:[%s3144 + $0x18] sm:$0xf]
        %v3152 = vld [vmem:[%s3144 + $0x1c] sm:$0xf]
        %v3153 = vld [vmem:[%s3144 + $0x20] sm:$0xf]
        %v3154 = vld [vmem:[%s3144 + $0x24] sm:$0xf]
        %v3155 = vld [vmem:[%s3144 + $0x28] sm:$0xf]
        %v3156 = vld [vmem:[%s3144 + $0x2c] sm:$0xf]
        %v3157 = vld [vmem:[%s3144 + $0x30] sm:$0xf]
        %v3158 = vld [vmem:[%s3144 + $0x34] sm:$0xf]
        %v3159 = vld [vmem:[%s3144 + $0x38] sm:$0xf]
        %v3160 = vld [vmem:[%s3144 + $0x3c] sm:$0xf]
        %v3185 = vunpack.c.l.b16 %v3120
        %v3186 = vunpack.c.l.b16 %v3121
        %v3187 = vunpack.c.l.b16 %v3122
        %v3188 = vunpack.c.l.b16 %v3123
        %v3189 = vunpack.c.l.b16 %v3124
        %v3190 = vunpack.c.l.b16 %v3125
        %v3191 = vunpack.c.l.b16 %v3126
        %v3192 = vunpack.c.l.b16 %v3127
        %v3193 = vunpack.c.l.b16 %v3128
        %v3194 = vunpack.c.l.b16 %v3129
        %v3195 = vunpack.c.l.b16 %v3130
        %v3196 = vunpack.c.l.b16 %v3131
        %v3197 = vunpack.c.l.b16 %v3132
        %v3198 = vunpack.c.l.b16 %v3133
        %v3199 = vunpack.c.l.b16 %v3134
        %v3200 = vunpack.c.l.b16 %v3135
        %v3201 = vunpack.c.l.b16 %v3136
        %v3202 = vunpack.c.l.b16 %v3137
        %v3203 = vunpack.c.l.b16 %v3138
        %v3204 = vunpack.c.l.b16 %v3139
        %v3205 = vunpack.c.l.b16 %v3140
        %v3206 = vunpack.c.l.b16 %v3141
        %v3207 = vunpack.c.l.b16 %v3142
        %v3208 = vunpack.c.l.b16 %v3143
        %v3209 = vpack.c.b16 %v3186, %v3185
        %v3210 = vpack.c.b16 %v3188, %v3187
        %v3211 = vpack.c.b16 %v3190, %v3189
        %v3212 = vpack.c.b16 %v3192, %v3191
        %v3213 = vpack.c.b16 %v3194, %v3193
        %v3214 = vpack.c.b16 %v3196, %v3195
        %v3215 = vpack.c.b16 %v3198, %v3197
        %v3216 = vpack.c.b16 %v3200, %v3199
        %v3217 = vpack.c.b16 %v3202, %v3201
        %v3218 = vpack.c.b16 %v3204, %v3203
        %v3219 = vpack.c.b16 %v3206, %v3205
        %v3220 = vpack.c.b16 %v3208, %v3207
        %vm3221 = vcmask 1044480
        %v3222 = vrot.slane %v3209, 3
        %v3223 = vrot.slane %v3210, 3
        %v3224 = vsel %vm3221, %v3222, %v3223
        %v3225 = vrot.slane %v3211, 3
        %v3226 = vsel %vm3221, %v3223, %v3225
        %v3227 = vrot.slane %v3212, 3
        %v3228 = vsel %vm3221, %v3225, %v3227
        %v3229 = vrot.slane %v3213, 3
        %v3230 = vsel %vm3221, %v3227, %v3229
        %v3231 = vrot.slane %v3214, 3
        %v3232 = vsel %vm3221, %v3229, %v3231
        %v3233 = vrot.slane %v3215, 3
        %v3234 = vsel %vm3221, %v3231, %v3233
        %v3235 = vrot.slane %v3216, 3
        %v3236 = vsel %vm3221, %v3233, %v3235
        %v3237 = vrot.slane %v3217, 3
        %v3238 = vsel %vm3221, %v3235, %v3237
        %v3239 = vrot.slane %v3218, 3
        %v3240 = vsel %vm3221, %v3237, %v3239
        %v3241 = vrot.slane %v3219, 3
        %v3242 = vsel %vm3221, %v3239, %v3241
        %v3243 = vrot.slane %v3220, 3
        %v3244 = vsel %vm3221, %v3241, %v3243
        %v3273 = vunpack.c.l.b16 %v3145
        %v3274 = vunpack.c.l.b16 %v3146
        %v3275 = vunpack.c.l.b16 %v3147
        %v3276 = vunpack.c.l.b16 %v3148
        %v3277 = vunpack.c.l.b16 %v3149
        %v3278 = vunpack.c.l.b16 %v3150
        %v3279 = vunpack.c.l.b16 %v3151
        %v3280 = vunpack.c.l.b16 %v3152
        %v3281 = vunpack.c.l.b16 %v3153
        %v3282 = vunpack.c.l.b16 %v3154
        %v3283 = vunpack.c.l.b16 %v3155
        %v3284 = vunpack.c.l.b16 %v3156
        %v3285 = vunpack.c.l.b16 %v3157
        %v3286 = vunpack.c.l.b16 %v3158
        %v3287 = vunpack.c.l.b16 %v3159
        %v3288 = vunpack.c.l.b16 %v3160
        %v3289 = vpack.c.b16 %v3274, %v3273
        %v3290 = vpack.c.b16 %v3276, %v3275
        %v3291 = vpack.c.b16 %v3278, %v3277
        %v3292 = vpack.c.b16 %v3280, %v3279
        %v3293 = vpack.c.b16 %v3282, %v3281
        %v3294 = vpack.c.b16 %v3284, %v3283
        %v3295 = vpack.c.b16 %v3286, %v3285
        %v3296 = vpack.c.b16 %v3288, %v3287
        %3305 = vmatpush.bf16.msra.mxu0 %v3296
        %3306 = vmatpush.bf16.msra.mxu0 %v3295
        %3307 = vmatpush.bf16.msra.mxu0 %v3294
        %3308 = vmatpush.bf16.msra.mxu0 %v3293
        %3309 = vmatpush.bf16.msra.mxu0 %v3292
        %3310 = vmatpush.bf16.msra.mxu0 %v3291
        %3311 = vmatpush.bf16.msra.mxu0 %v3290
        %3312 = vmatpush.bf16.msra.mxu0 %v3289
        %3313 = vmatmul.bf16.gmra.mxu0 %v3224
        %v3314 = vpop.f32.mrf.mxu0
        %v3315 = vadd.f32 0.0, %v3314
        %v3316 = vpop.f32.mrf.mxu0
        %v3317 = vadd.f32 0.0, %v3316
        %3318 = vmatmul.bf16.gmra.mxu0 %v3226
        %v3319 = vpop.f32.mrf.mxu0
        %v3320 = vadd.f32 0.0, %v3319
        %v3321 = vpop.f32.mrf.mxu0
        %v3322 = vadd.f32 0.0, %v3321
        %3323 = vmatmul.bf16.gmra.mxu0 %v3228
        %v3324 = vpop.f32.mrf.mxu0
        %v3325 = vadd.f32 0.0, %v3324
        %v3326 = vpop.f32.mrf.mxu0
        %v3327 = vadd.f32 0.0, %v3326
        %3328 = vmatmul.bf16.gmra.mxu0 %v3230
        %v3329 = vpop.f32.mrf.mxu0
        %v3330 = vadd.f32 0.0, %v3329
        %v3331 = vpop.f32.mrf.mxu0
        %v3332 = vadd.f32 0.0, %v3331
        %3333 = vmatmul.bf16.gmra.mxu0 %v3232
        %v3334 = vpop.f32.mrf.mxu0
        %v3335 = vadd.f32 0.0, %v3334
        %v3336 = vpop.f32.mrf.mxu0
        %v3337 = vadd.f32 0.0, %v3336
        %3338 = vmatmul.bf16.gmra.mxu0 %v3234
        %v3339 = vpop.f32.mrf.mxu0
        %v3340 = vadd.f32 0.0, %v3339
        %v3341 = vpop.f32.mrf.mxu0
        %v3342 = vadd.f32 0.0, %v3341
        %3343 = vmatmul.bf16.gmra.mxu0 %v3236
        %v3344 = vpop.f32.mrf.mxu0
        %v3345 = vadd.f32 0.0, %v3344
        %v3346 = vpop.f32.mrf.mxu0
        %v3347 = vadd.f32 0.0, %v3346
        %3348 = vmatmul.bf16.gmra.mxu0 %v3238
        %v3349 = vpop.f32.mrf.mxu0
        %v3350 = vadd.f32 0.0, %v3349
        %v3351 = vpop.f32.mrf.mxu0
        %v3352 = vadd.f32 0.0, %v3351
        %3353 = vmatmul.bf16.gmra.mxu0 %v3240
        %v3354 = vpop.f32.mrf.mxu0
        %v3355 = vadd.f32 0.0, %v3354
        %v3356 = vpop.f32.mrf.mxu0
        %v3357 = vadd.f32 0.0, %v3356
        %3358 = vmatmul.bf16.gmra.mxu0 %v3242
        %v3359 = vpop.f32.mrf.mxu0
        %v3360 = vadd.f32 0.0, %v3359
        %v3361 = vpop.f32.mrf.mxu0
        %v3362 = vadd.f32 0.0, %v3361
        %3363 = vmatmul.bf16.gmra.mxu0 %v3244
        %v3364 = vpop.f32.mrf.mxu0
        %v3365 = vadd.f32 0.0, %v3364
        %v3366 = vpop.f32.mrf.mxu0
        %v3367 = vadd.f32 0.0, %v3366
        %3368 = vmatmul.bf16.gmra.mxu0 %v3243
        %v3369 = vpop.f32.mrf.mxu0
        %v3370 = vadd.f32 0.0, %v3369
        %v3371 = vpop.f32.mrf.mxu0
        %3372 = vdwg.mxu0
        %v3373 = vld [vmem:[#allocation2] sm:$0xff]
        %v3374 = vld [vmem:[#allocation2 + $0x8] sm:$0xff]
        %v3375 = vld [vmem:[#allocation2 + $0x10] sm:$0xff]
        %v3376 = vld [vmem:[#allocation2 + $0x18] sm:$0xff]
        %v3377 = vld [vmem:[#allocation2 + $0x20] sm:$0xff]
        %v3378 = vld [vmem:[#allocation2 + $0x28] sm:$0xff]
        %v3379 = vld [vmem:[#allocation2 + $0x30] sm:$0xff]
        %v3380 = vld [vmem:[#allocation2 + $0x38] sm:$0xff]
        %v3381 = vld [vmem:[#allocation2 + $0x40] sm:$0xff]
        %v3382 = vld [vmem:[#allocation2 + $0x48] sm:$0xff]
        %v3383 = vld [vmem:[#allocation2 + $0x50] sm:$0xff]
        %v3384 = vld [vmem:[#allocation2 + $0x58] sm:$0xff]
        %v3385 = vld [vmem:[#allocation2 + $0x60] sm:$0xff]
        %v3386 = vld [vmem:[#allocation2 + $0x68] sm:$0xff]
        %v3387 = vld [vmem:[#allocation2 + $0x70] sm:$0xff]
        %v3388 = vld [vmem:[#allocation2 + $0x78] sm:$0xff]
        %v3389 = vld [vmem:[#allocation2 + $0x80] sm:$0xff]
        %v3390 = vld [vmem:[#allocation2 + $0x88] sm:$0xff]
        %v3391 = vld [vmem:[#allocation2 + $0x90] sm:$0xff]
        %v3392 = vld [vmem:[#allocation2 + $0x98] sm:$0xff]
        %v3393 = vld [vmem:[#allocation2 + $0xa0] sm:$0xff]
        %v3394 = vld [vmem:[#allocation2 + $0xa8] sm:$0xff]
        %v3395 = vld [vmem:[#allocation2 + $0xb0] sm:$0xf]
        %v3396 = vadd.f32 %v3373, %v3315
        %v3397 = vadd.f32 %v3374, %v3317
        %v3398 = vadd.f32 %v3375, %v3320
        %v3399 = vadd.f32 %v3376, %v3322
        %v3400 = vadd.f32 %v3377, %v3325
        %v3401 = vadd.f32 %v3378, %v3327
        %v3402 = vadd.f32 %v3379, %v3330
        %v3403 = vadd.f32 %v3380, %v3332
        %v3404 = vadd.f32 %v3381, %v3335
        %v3405 = vadd.f32 %v3382, %v3337
        %v3406 = vadd.f32 %v3383, %v3340
        %v3407 = vadd.f32 %v3384, %v3342
        %v3408 = vadd.f32 %v3385, %v3345
        %v3409 = vadd.f32 %v3386, %v3347
        %v3410 = vadd.f32 %v3387, %v3350
        %v3411 = vadd.f32 %v3388, %v3352
        %v3412 = vadd.f32 %v3389, %v3355
        %v3413 = vadd.f32 %v3390, %v3357
        %v3414 = vadd.f32 %v3391, %v3360
        %v3415 = vadd.f32 %v3392, %v3362
        %v3416 = vadd.f32 %v3393, %v3365
        %v3417 = vadd.f32 %v3394, %v3367
        %v3418 = vadd.f32 %v3395, %v3370
        %3419 = vst [vmem:[#allocation2] sm:$0xff] %v3396
        %3420 = vst [vmem:[#allocation2 + $0x8] sm:$0xff] %v3397
        %3421 = vst [vmem:[#allocation2 + $0x10] sm:$0xff] %v3398
        %3422 = vst [vmem:[#allocation2 + $0x18] sm:$0xff] %v3399
        %3423 = vst [vmem:[#allocation2 + $0x20] sm:$0xff] %v3400
        %3424 = vst [vmem:[#allocation2 + $0x28] sm:$0xff] %v3401
        %3425 = vst [vmem:[#allocation2 + $0x30] sm:$0xff] %v3402
        %3426 = vst [vmem:[#allocation2 + $0x38] sm:$0xff] %v3403
        %3427 = vst [vmem:[#allocation2 + $0x40] sm:$0xff] %v3404
        %3428 = vst [vmem:[#allocation2 + $0x48] sm:$0xff] %v3405
        %3429 = vst [vmem:[#allocation2 + $0x50] sm:$0xff] %v3406
        %3430 = vst [vmem:[#allocation2 + $0x58] sm:$0xff] %v3407
        %3431 = vst [vmem:[#allocation2 + $0x60] sm:$0xff] %v3408
        %3432 = vst [vmem:[#allocation2 + $0x68] sm:$0xff] %v3409
        %3433 = vst [vmem:[#allocation2 + $0x70] sm:$0xff] %v3410
        %3434 = vst [vmem:[#allocation2 + $0x78] sm:$0xff] %v3411
        %3435 = vst [vmem:[#allocation2 + $0x80] sm:$0xff] %v3412
        %3436 = vst [vmem:[#allocation2 + $0x88] sm:$0xff] %v3413
        %3437 = vst [vmem:[#allocation2 + $0x90] sm:$0xff] %v3414
        %3438 = vst [vmem:[#allocation2 + $0x98] sm:$0xff] %v3415
        %3439 = vst [vmem:[#allocation2 + $0xa0] sm:$0xff] %v3416
        %3440 = vst [vmem:[#allocation2 + $0xa8] sm:$0xff] %v3417
        %3441 = vst [vmem:[#allocation2 + $0xb0] sm:$0xf] %v3418
        %v3442 = vld [vmem:[#allocation2] sm:$0xff]
        %v3443 = vld [vmem:[#allocation2 + $0x8] sm:$0xff]
        %v3444 = vld [vmem:[#allocation2 + $0x10] sm:$0xff]
        %v3445 = vld [vmem:[#allocation2 + $0x18] sm:$0xff]
        %v3446 = vld [vmem:[#allocation2 + $0x20] sm:$0xff]
        %v3447 = vld [vmem:[#allocation2 + $0x28] sm:$0xff]
        %v3448 = vld [vmem:[#allocation2 + $0x30] sm:$0xff]
        %v3449 = vld [vmem:[#allocation2 + $0x38] sm:$0xff]
        %v3450 = vld [vmem:[#allocation2 + $0x40] sm:$0xff]
        %v3451 = vld [vmem:[#allocation2 + $0x48] sm:$0xff]
        %v3452 = vld [vmem:[#allocation2 + $0x50] sm:$0xff]
        %v3453 = vld [vmem:[#allocation2 + $0x58] sm:$0xff]
        %v3454 = vld [vmem:[#allocation2 + $0x60] sm:$0xff]
        %v3455 = vld [vmem:[#allocation2 + $0x68] sm:$0xff]
        %v3456 = vld [vmem:[#allocation2 + $0x70] sm:$0xff]
        %v3457 = vld [vmem:[#allocation2 + $0x78] sm:$0xff]
        %v3458 = vld [vmem:[#allocation2 + $0x80] sm:$0xff]
        %v3459 = vld [vmem:[#allocation2 + $0x88] sm:$0xff]
        %v3460 = vld [vmem:[#allocation2 + $0x90] sm:$0xff]
        %v3461 = vld [vmem:[#allocation2 + $0x98] sm:$0xff]
        %v3462 = vld [vmem:[#allocation2 + $0xa0] sm:$0xff]
        %v3463 = vld [vmem:[#allocation2 + $0xa8] sm:$0xff]
        %v3464 = vld [vmem:[#allocation2 + $0xb0] sm:$0xf]
        %v3465 = vld [vmem:[%s3] sm:$0x1]
        %v3467 = vperm.slane %v3465, 0
        %v3469 = vmul.f32 %v3442, %v3467
        %v3470 = vmul.f32 %v3443, %v3467
        %v3471 = vmul.f32 %v3444, %v3467
        %v3472 = vmul.f32 %v3445, %v3467
        %v3473 = vmul.f32 %v3446, %v3467
        %v3474 = vmul.f32 %v3447, %v3467
        %v3475 = vmul.f32 %v3448, %v3467
        %v3476 = vmul.f32 %v3449, %v3467
        %v3477 = vmul.f32 %v3450, %v3467
        %v3478 = vmul.f32 %v3451, %v3467
        %v3479 = vmul.f32 %v3452, %v3467
        %v3480 = vmul.f32 %v3453, %v3467
        %v3481 = vmul.f32 %v3454, %v3467
        %v3482 = vmul.f32 %v3455, %v3467
        %v3483 = vmul.f32 %v3456, %v3467
        %v3484 = vmul.f32 %v3457, %v3467
        %v3485 = vmul.f32 %v3458, %v3467
        %v3486 = vmul.f32 %v3459, %v3467
        %v3487 = vmul.f32 %v3460, %v3467
        %v3488 = vmul.f32 %v3461, %v3467
        %v3489 = vmul.f32 %v3462, %v3467
        %v3490 = vmul.f32 %v3463, %v3467
        %v3491 = vmul.f32 %v3464, %v3467
        %v3492 = vld [vmem:[%s4] sm:$0x1]
        %v3494 = vperm.slane %v3492, 0
        %v3496 = vadd.f32 %v3469, %v3494
        %v3497 = vadd.f32 %v3470, %v3494
        %v3498 = vadd.f32 %v3471, %v3494
        %v3499 = vadd.f32 %v3472, %v3494
        %v3500 = vadd.f32 %v3473, %v3494
        %v3501 = vadd.f32 %v3474, %v3494
        %v3502 = vadd.f32 %v3475, %v3494
        %v3503 = vadd.f32 %v3476, %v3494
        %v3504 = vadd.f32 %v3477, %v3494
        %v3505 = vadd.f32 %v3478, %v3494
        %v3506 = vadd.f32 %v3479, %v3494
        %v3507 = vadd.f32 %v3480, %v3494
        %v3508 = vadd.f32 %v3481, %v3494
        %v3509 = vadd.f32 %v3482, %v3494
        %v3510 = vadd.f32 %v3483, %v3494
        %v3511 = vadd.f32 %v3484, %v3494
        %v3512 = vadd.f32 %v3485, %v3494
        %v3513 = vadd.f32 %v3486, %v3494
        %v3514 = vadd.f32 %v3487, %v3494
        %v3515 = vadd.f32 %v3488, %v3494
        %v3516 = vadd.f32 %v3489, %v3494
        %v3517 = vadd.f32 %v3490, %v3494
        %v3518 = vadd.f32 %v3491, %v3494
        %v3519 = vmax.f32 %v3496, 0.0
        %v3520 = vmax.f32 %v3497, 0.0
        %v3521 = vmax.f32 %v3498, 0.0
        %v3522 = vmax.f32 %v3499, 0.0
        %v3523 = vmax.f32 %v3500, 0.0
        %v3524 = vmax.f32 %v3501, 0.0
        %v3525 = vmax.f32 %v3502, 0.0
        %v3526 = vmax.f32 %v3503, 0.0
        %v3527 = vmax.f32 %v3504, 0.0
        %v3528 = vmax.f32 %v3505, 0.0
        %v3529 = vmax.f32 %v3506, 0.0
        %v3530 = vmax.f32 %v3507, 0.0
        %v3531 = vmax.f32 %v3508, 0.0
        %v3532 = vmax.f32 %v3509, 0.0
        %v3533 = vmax.f32 %v3510, 0.0
        %v3534 = vmax.f32 %v3511, 0.0
        %v3535 = vmax.f32 %v3512, 0.0
        %v3536 = vmax.f32 %v3513, 0.0
        %v3537 = vmax.f32 %v3514, 0.0
        %v3538 = vmax.f32 %v3515, 0.0
        %v3539 = vmax.f32 %v3516, 0.0
        %v3540 = vmax.f32 %v3517, 0.0
        %v3541 = vmax.f32 %v3518, 0.0
        %v3542 = vld [vmem:[%s396] sm:$0xff]
        %v3543 = vld [vmem:[%s396 + $0x8] sm:$0xff]
        %v3544 = vld [vmem:[%s396 + $0x10] sm:$0xff]
        %v3545 = vld [vmem:[%s396 + $0x18] sm:$0xff]
        %v3546 = vld [vmem:[%s396 + $0x20] sm:$0xff]
        %v3547 = vld [vmem:[%s396 + $0x28] sm:$0xff]
        %v3548 = vld [vmem:[%s396 + $0x30] sm:$0xff]
        %v3549 = vld [vmem:[%s396 + $0x38] sm:$0xff]
        %v3550 = vld [vmem:[%s396 + $0x40] sm:$0xff]
        %v3551 = vld [vmem:[%s396 + $0x48] sm:$0xff]
        %v3552 = vld [vmem:[%s396 + $0x50] sm:$0xff]
        %v3553 = vld [vmem:[%s396 + $0x58] sm:$0xff]
        %v3554 = vld [vmem:[%s396 + $0x60] sm:$0xff]
        %v3555 = vld [vmem:[%s396 + $0x68] sm:$0xff]
        %v3556 = vld [vmem:[%s396 + $0x70] sm:$0xff]
        %v3557 = vld [vmem:[%s396 + $0x78] sm:$0xff]
        %v3558 = vld [vmem:[%s396 + $0x80] sm:$0xff]
        %v3559 = vld [vmem:[%s396 + $0x88] sm:$0xff]
        %v3560 = vld [vmem:[%s396 + $0x90] sm:$0xff]
        %v3561 = vld [vmem:[%s396 + $0x98] sm:$0xff]
        %v3562 = vld [vmem:[%s396 + $0xa0] sm:$0xff]
        %v3563 = vld [vmem:[%s396 + $0xa8] sm:$0xff]
        %v3564 = vld [vmem:[%s396 + $0xb0] sm:$0xf]
        %3566 = vset.pattern.permute.xlu0 0
        %3567 = vperm.xlu0 %3566, %v3542
        %v3568 = vpop.permute.xlu0 %3567
        %3571 = vset.pattern.permute.xlu0 0
        %3572 = vperm.xlu0 %3571, %v3543
        %v3573 = vpop.permute.xlu0 %3572
        %3576 = vset.pattern.permute.xlu0 0
        %3577 = vperm.xlu0 %3576, %v3544
        %v3578 = vpop.permute.xlu0 %3577
        %3581 = vset.pattern.permute.xlu0 0
        %3582 = vperm.xlu0 %3581, %v3545
        %v3583 = vpop.permute.xlu0 %3582
        %3586 = vset.pattern.permute.xlu0 0
        %3587 = vperm.xlu0 %3586, %v3546
        %v3588 = vpop.permute.xlu0 %3587
        %3591 = vset.pattern.permute.xlu0 0
        %3592 = vperm.xlu0 %3591, %v3547
        %v3593 = vpop.permute.xlu0 %3592
        %3596 = vset.pattern.permute.xlu0 0
        %3597 = vperm.xlu0 %3596, %v3548
        %v3598 = vpop.permute.xlu0 %3597
        %3601 = vset.pattern.permute.xlu0 0
        %3602 = vperm.xlu0 %3601, %v3549
        %v3603 = vpop.permute.xlu0 %3602
        %3606 = vset.pattern.permute.xlu0 0
        %3607 = vperm.xlu0 %3606, %v3550
        %v3608 = vpop.permute.xlu0 %3607
        %3611 = vset.pattern.permute.xlu0 0
        %3612 = vperm.xlu0 %3611, %v3551
        %v3613 = vpop.permute.xlu0 %3612
        %3616 = vset.pattern.permute.xlu0 0
        %3617 = vperm.xlu0 %3616, %v3552
        %v3618 = vpop.permute.xlu0 %3617
        %3621 = vset.pattern.permute.xlu0 0
        %3622 = vperm.xlu0 %3621, %v3553
        %v3623 = vpop.permute.xlu0 %3622
        %3626 = vset.pattern.permute.xlu0 0
        %3627 = vperm.xlu0 %3626, %v3554
        %v3628 = vpop.permute.xlu0 %3627
        %3631 = vset.pattern.permute.xlu0 0
        %3632 = vperm.xlu0 %3631, %v3555
        %v3633 = vpop.permute.xlu0 %3632
        %3636 = vset.pattern.permute.xlu0 0
        %3637 = vperm.xlu0 %3636, %v3556
        %v3638 = vpop.permute.xlu0 %3637
        %3641 = vset.pattern.permute.xlu0 0
        %3642 = vperm.xlu0 %3641, %v3557
        %v3643 = vpop.permute.xlu0 %3642
        %3646 = vset.pattern.permute.xlu0 0
        %3647 = vperm.xlu0 %3646, %v3558
        %v3648 = vpop.permute.xlu0 %3647
        %3651 = vset.pattern.permute.xlu0 0
        %3652 = vperm.xlu0 %3651, %v3559
        %v3653 = vpop.permute.xlu0 %3652
        %3656 = vset.pattern.permute.xlu0 0
        %3657 = vperm.xlu0 %3656, %v3560
        %v3658 = vpop.permute.xlu0 %3657
        %3661 = vset.pattern.permute.xlu0 0
        %3662 = vperm.xlu0 %3661, %v3561
        %v3663 = vpop.permute.xlu0 %3662
        %3666 = vset.pattern.permute.xlu0 0
        %3667 = vperm.xlu0 %3666, %v3562
        %v3668 = vpop.permute.xlu0 %3667
        %3671 = vset.pattern.permute.xlu0 0
        %3672 = vperm.xlu0 %3671, %v3563
        %v3673 = vpop.permute.xlu0 %3672
        %3676 = vset.pattern.permute.xlu0 0
        %3677 = vperm.xlu0 %3676, %v3564
        %v3678 = vpop.permute.xlu0 %3677
        %v3680 = vmul.f32 %v3519, %v3568
        %v3681 = vmul.f32 %v3520, %v3573
        %v3682 = vmul.f32 %v3521, %v3578
        %v3683 = vmul.f32 %v3522, %v3583
        %v3684 = vmul.f32 %v3523, %v3588
        %v3685 = vmul.f32 %v3524, %v3593
        %v3686 = vmul.f32 %v3525, %v3598
        %v3687 = vmul.f32 %v3526, %v3603
        %v3688 = vmul.f32 %v3527, %v3608
        %v3689 = vmul.f32 %v3528, %v3613
        %v3690 = vmul.f32 %v3529, %v3618
        %v3691 = vmul.f32 %v3530, %v3623
        %v3692 = vmul.f32 %v3531, %v3628
        %v3693 = vmul.f32 %v3532, %v3633
        %v3694 = vmul.f32 %v3533, %v3638
        %v3695 = vmul.f32 %v3534, %v3643
        %v3696 = vmul.f32 %v3535, %v3648
        %v3697 = vmul.f32 %v3536, %v3653
        %v3698 = vmul.f32 %v3537, %v3658
        %v3699 = vmul.f32 %v3538, %v3663
        %v3700 = vmul.f32 %v3539, %v3668
        %v3701 = vmul.f32 %v3540, %v3673
        %v3702 = vmul.f32 %v3541, %v3678
        %v3703 = vpack.c.bf16 %v3680, %v3680
        %v3704 = vpack.c.bf16 %v3681, %v3681
        %v3705 = vpack.c.bf16 %v3682, %v3682
        %v3706 = vpack.c.bf16 %v3683, %v3683
        %v3707 = vpack.c.bf16 %v3684, %v3684
        %v3708 = vpack.c.bf16 %v3685, %v3685
        %v3709 = vpack.c.bf16 %v3686, %v3686
        %v3710 = vpack.c.bf16 %v3687, %v3687
        %v3711 = vpack.c.bf16 %v3688, %v3688
        %v3712 = vpack.c.bf16 %v3689, %v3689
        %v3713 = vpack.c.bf16 %v3690, %v3690
        %v3714 = vpack.c.bf16 %v3691, %v3691
        %v3715 = vpack.c.bf16 %v3692, %v3692
        %v3716 = vpack.c.bf16 %v3693, %v3693
        %v3717 = vpack.c.bf16 %v3694, %v3694
        %v3718 = vpack.c.bf16 %v3695, %v3695
        %v3719 = vpack.c.bf16 %v3696, %v3696
        %v3720 = vpack.c.bf16 %v3697, %v3697
        %v3721 = vpack.c.bf16 %v3698, %v3698
        %v3722 = vpack.c.bf16 %v3699, %v3699
        %v3723 = vpack.c.bf16 %v3700, %v3700
        %v3724 = vpack.c.bf16 %v3701, %v3701
        %v3725 = vpack.c.bf16 %v3702, %v3702
        %3726 = vst [vmem:[#allocation3] sm:$0xf] %v3703
        %3727 = vst [vmem:[#allocation3 + $0x4] sm:$0xf] %v3704
        %3728 = vst [vmem:[#allocation3 + $0x8] sm:$0xf] %v3705
        %3729 = vst [vmem:[#allocation3 + $0xc] sm:$0xf] %v3706
        %3730 = vst [vmem:[#allocation3 + $0x10] sm:$0xf] %v3707
        %3731 = vst [vmem:[#allocation3 + $0x14] sm:$0xf] %v3708
        %3732 = vst [vmem:[#allocation3 + $0x18] sm:$0xf] %v3709
        %3733 = vst [vmem:[#allocation3 + $0x1c] sm:$0xf] %v3710
        %3734 = vst [vmem:[#allocation3 + $0x20] sm:$0xf] %v3711
        %3735 = vst [vmem:[#allocation3 + $0x24] sm:$0xf] %v3712
        %3736 = vst [vmem:[#allocation3 + $0x28] sm:$0xf] %v3713
        %3737 = vst [vmem:[#allocation3 + $0x2c] sm:$0xf] %v3714
        %3738 = vst [vmem:[#allocation3 + $0x30] sm:$0xf] %v3715
        %3739 = vst [vmem:[#allocation3 + $0x34] sm:$0xf] %v3716
        %3740 = vst [vmem:[#allocation3 + $0x38] sm:$0xf] %v3717
        %3741 = vst [vmem:[#allocation3 + $0x3c] sm:$0xf] %v3718
        %3742 = vst [vmem:[#allocation3 + $0x40] sm:$0xf] %v3719
        %3743 = vst [vmem:[#allocation3 + $0x44] sm:$0xf] %v3720
        %3744 = vst [vmem:[#allocation3 + $0x48] sm:$0xf] %v3721
        %3745 = vst [vmem:[#allocation3 + $0x4c] sm:$0xf] %v3722
        %3746 = vst [vmem:[#allocation3 + $0x50] sm:$0xf] %v3723
        %3747 = vst [vmem:[#allocation3 + $0x54] sm:$0xf] %v3724
        %3748 = vst [vmem:[#allocation3 + $0x58] sm:$0x3] %v3725
        %3749 = vst [vmem:[#allocation3 + $0x58] sm:$0xc] 0
        %3750 = vst [vmem:[#allocation3 + $0x5c] sm:$0xf] 0
        %v3751 = vld [vmem:[#allocation3] sm:$0xf]
        %v3752 = vld [vmem:[#allocation3 + $0x4] sm:$0xf]
        %v3753 = vld [vmem:[#allocation3 + $0x8] sm:$0xf]
        %v3754 = vld [vmem:[#allocation3 + $0xc] sm:$0xf]
        %v3755 = vld [vmem:[#allocation3 + $0x10] sm:$0xf]
        %v3756 = vld [vmem:[#allocation3 + $0x14] sm:$0xf]
        %v3757 = vld [vmem:[#allocation3 + $0x18] sm:$0xf]
        %v3758 = vld [vmem:[#allocation3 + $0x1c] sm:$0xf]
        %v3759 = vld [vmem:[#allocation3 + $0x20] sm:$0xf]
        %v3760 = vld [vmem:[#allocation3 + $0x24] sm:$0xf]
        %v3761 = vld [vmem:[#allocation3 + $0x28] sm:$0xf]
        %v3762 = vld [vmem:[#allocation3 + $0x2c] sm:$0xf]
        %v3763 = vld [vmem:[#allocation3 + $0x30] sm:$0xf]
        %v3764 = vld [vmem:[#allocation3 + $0x34] sm:$0xf]
        %v3765 = vld [vmem:[#allocation3 + $0x38] sm:$0xf]
        %v3766 = vld [vmem:[#allocation3 + $0x3c] sm:$0xf]
        %v3767 = vld [vmem:[#allocation3 + $0x40] sm:$0xf]
        %v3768 = vld [vmem:[#allocation3 + $0x44] sm:$0xf]
        %v3769 = vld [vmem:[#allocation9] sm:$0xf]
        %v3770 = vld [vmem:[#allocation9 + $0x4] sm:$0xf]
        %v3771 = vld [vmem:[#allocation9 + $0x8] sm:$0xf]
        %v3772 = vld [vmem:[#allocation9 + $0xc] sm:$0xf]
        %v3773 = vld [vmem:[#allocation9 + $0x10] sm:$0xf]
        %v3774 = vld [vmem:[#allocation9 + $0x14] sm:$0xf]
        %v3775 = vld [vmem:[#allocation9 + $0x18] sm:$0xf]
        %v3776 = vld [vmem:[#allocation9 + $0x1c] sm:$0xf]
        %v3777 = vld [vmem:[#allocation9 + $0x20] sm:$0xf]
        %v3778 = vld [vmem:[#allocation9 + $0x24] sm:$0xf]
        %v3779 = vld [vmem:[#allocation9 + $0x28] sm:$0xf]
        %v3780 = vld [vmem:[#allocation9 + $0x2c] sm:$0xf]
        %v3781 = vld [vmem:[#allocation9 + $0x30] sm:$0xf]
        %v3782 = vld [vmem:[#allocation9 + $0x34] sm:$0xf]
        %v3783 = vld [vmem:[#allocation9 + $0x38] sm:$0xf]
        %v3784 = vld [vmem:[#allocation9 + $0x3c] sm:$0xf]
        %v3803 = vunpack.c.l.b16 %v3751
        %v3804 = vunpack.c.l.b16 %v3752
        %v3805 = vunpack.c.l.b16 %v3753
        %v3806 = vunpack.c.l.b16 %v3754
        %v3807 = vunpack.c.l.b16 %v3755
        %v3808 = vunpack.c.l.b16 %v3756
        %v3809 = vunpack.c.l.b16 %v3757
        %v3810 = vunpack.c.l.b16 %v3758
        %v3811 = vunpack.c.l.b16 %v3759
        %v3812 = vunpack.c.l.b16 %v3760
        %v3813 = vunpack.c.l.b16 %v3761
        %v3814 = vunpack.c.l.b16 %v3762
        %v3815 = vunpack.c.l.b16 %v3763
        %v3816 = vunpack.c.l.b16 %v3764
        %v3817 = vunpack.c.l.b16 %v3765
        %v3818 = vunpack.c.l.b16 %v3766
        %v3819 = vunpack.c.l.b16 %v3767
        %v3820 = vunpack.c.l.b16 %v3768
        %v3821 = vpack.c.b16 %v3804, %v3803
        %v3822 = vpack.c.b16 %v3806, %v3805
        %v3823 = vpack.c.b16 %v3808, %v3807
        %v3824 = vpack.c.b16 %v3810, %v3809
        %v3825 = vpack.c.b16 %v3812, %v3811
        %v3826 = vpack.c.b16 %v3814, %v3813
        %v3827 = vpack.c.b16 %v3816, %v3815
        %v3828 = vpack.c.b16 %v3818, %v3817
        %v3829 = vpack.c.b16 %v3820, %v3819
        %v3855 = vunpack.c.l.b16 %v3769
        %v3856 = vunpack.c.l.b16 %v3770
        %v3857 = vunpack.c.l.b16 %v3771
        %v3858 = vunpack.c.l.b16 %v3772
        %v3859 = vunpack.c.l.b16 %v3773
        %v3860 = vunpack.c.l.b16 %v3774
        %v3861 = vunpack.c.l.b16 %v3775
        %v3862 = vunpack.c.l.b16 %v3776
        %v3863 = vunpack.c.l.b16 %v3777
        %v3864 = vunpack.c.l.b16 %v3778
        %v3865 = vunpack.c.l.b16 %v3779
        %v3866 = vunpack.c.l.b16 %v3780
        %v3867 = vunpack.c.l.b16 %v3781
        %v3868 = vunpack.c.l.b16 %v3782
        %v3869 = vunpack.c.l.b16 %v3783
        %v3870 = vunpack.c.l.b16 %v3784
        %v3871 = vpack.c.b16 %v3856, %v3855
        %v3872 = vpack.c.b16 %v3858, %v3857
        %v3873 = vpack.c.b16 %v3860, %v3859
        %v3874 = vpack.c.b16 %v3862, %v3861
        %v3875 = vpack.c.b16 %v3864, %v3863
        %v3876 = vpack.c.b16 %v3866, %v3865
        %v3877 = vpack.c.b16 %v3868, %v3867
        %v3878 = vpack.c.b16 %v3870, %v3869
        %3887 = vmatpush.bf16.msra.mxu0 %v3878
        %3888 = vmatpush.bf16.msra.mxu0 %v3877
        %3889 = vmatpush.bf16.msra.mxu0 %v3876
        %3890 = vmatpush.bf16.msra.mxu0 %v3875
        %3891 = vmatpush.bf16.msra.mxu0 %v3874
        %3892 = vmatpush.bf16.msra.mxu0 %v3873
        %3893 = vmatpush.bf16.msra.mxu0 %v3872
        %3894 = vmatpush.bf16.msra.mxu0 %v3871
        %3895 = vmatmul.bf16.gmra.mxu0 %v3821
        %v3896 = vpop.f32.mrf.mxu0
        %v3897 = vadd.f32 0.0, %v3896
        %v3898 = vpop.f32.mrf.mxu0
        %v3899 = vadd.f32 0.0, %v3898
        %3900 = vmatmul.bf16.gmra.mxu0 %v3822
        %v3901 = vpop.f32.mrf.mxu0
        %v3902 = vadd.f32 0.0, %v3901
        %v3903 = vpop.f32.mrf.mxu0
        %v3904 = vadd.f32 0.0, %v3903
        %3905 = vmatmul.bf16.gmra.mxu0 %v3823
        %v3906 = vpop.f32.mrf.mxu0
        %v3907 = vadd.f32 0.0, %v3906
        %v3908 = vpop.f32.mrf.mxu0
        %v3909 = vadd.f32 0.0, %v3908
        %3910 = vmatmul.bf16.gmra.mxu0 %v3824
        %v3911 = vpop.f32.mrf.mxu0
        %v3912 = vadd.f32 0.0, %v3911
        %v3913 = vpop.f32.mrf.mxu0
        %v3914 = vadd.f32 0.0, %v3913
        %3915 = vmatmul.bf16.gmra.mxu0 %v3825
        %v3916 = vpop.f32.mrf.mxu0
        %v3917 = vadd.f32 0.0, %v3916
        %v3918 = vpop.f32.mrf.mxu0
        %v3919 = vadd.f32 0.0, %v3918
        %3920 = vmatmul.bf16.gmra.mxu0 %v3826
        %v3921 = vpop.f32.mrf.mxu0
        %v3922 = vadd.f32 0.0, %v3921
        %v3923 = vpop.f32.mrf.mxu0
        %v3924 = vadd.f32 0.0, %v3923
        %3925 = vmatmul.bf16.gmra.mxu0 %v3827
        %v3926 = vpop.f32.mrf.mxu0
        %v3927 = vadd.f32 0.0, %v3926
        %v3928 = vpop.f32.mrf.mxu0
        %v3929 = vadd.f32 0.0, %v3928
        %3930 = vmatmul.bf16.gmra.mxu0 %v3828
        %v3931 = vpop.f32.mrf.mxu0
        %v3932 = vadd.f32 0.0, %v3931
        %v3933 = vpop.f32.mrf.mxu0
        %v3934 = vadd.f32 0.0, %v3933
        %3935 = vmatmul.bf16.gmra.mxu0 %v3829
        %v3936 = vpop.f32.mrf.mxu0
        %v3937 = vadd.f32 0.0, %v3936
        %v3938 = vpop.f32.mrf.mxu0
        %v3939 = vadd.f32 0.0, %v3938
        %3940 = vdwg.mxu0
        %3941 = vst [vmem:[#allocation2] sm:$0xff] %v3897
        %3942 = vst [vmem:[#allocation2 + $0x8] sm:$0xff] %v3899
        %3943 = vst [vmem:[#allocation2 + $0x10] sm:$0xff] %v3902
        %3944 = vst [vmem:[#allocation2 + $0x18] sm:$0xff] %v3904
        %3945 = vst [vmem:[#allocation2 + $0x20] sm:$0xff] %v3907
        %3946 = vst [vmem:[#allocation2 + $0x28] sm:$0xff] %v3909
        %3947 = vst [vmem:[#allocation2 + $0x30] sm:$0xff] %v3912
        %3948 = vst [vmem:[#allocation2 + $0x38] sm:$0xff] %v3914
        %3949 = vst [vmem:[#allocation2 + $0x40] sm:$0xff] %v3917
        %3950 = vst [vmem:[#allocation2 + $0x48] sm:$0xff] %v3919
        %3951 = vst [vmem:[#allocation2 + $0x50] sm:$0xff] %v3922
        %3952 = vst [vmem:[#allocation2 + $0x58] sm:$0xff] %v3924
        %3953 = vst [vmem:[#allocation2 + $0x60] sm:$0xff] %v3927
        %3954 = vst [vmem:[#allocation2 + $0x68] sm:$0xff] %v3929
        %3955 = vst [vmem:[#allocation2 + $0x70] sm:$0xff] %v3932
        %3956 = vst [vmem:[#allocation2 + $0x78] sm:$0xff] %v3934
        %3957 = vst [vmem:[#allocation2 + $0x80] sm:$0xff] %v3937
        %3958 = vst [vmem:[#allocation2 + $0x88] sm:$0xff] %v3939
        %v3959 = vld [vmem:[#allocation3] sm:$0xf]
        %v3960 = vld [vmem:[#allocation3 + $0x4] sm:$0xf]
        %v3961 = vld [vmem:[#allocation3 + $0x8] sm:$0xf]
        %v3962 = vld [vmem:[#allocation3 + $0xc] sm:$0xf]
        %v3963 = vld [vmem:[#allocation3 + $0x10] sm:$0xf]
        %v3964 = vld [vmem:[#allocation3 + $0x14] sm:$0xf]
        %v3965 = vld [vmem:[#allocation3 + $0x18] sm:$0xf]
        %v3966 = vld [vmem:[#allocation3 + $0x1c] sm:$0xf]
        %v3967 = vld [vmem:[#allocation3 + $0x20] sm:$0xf]
        %v3968 = vld [vmem:[#allocation3 + $0x24] sm:$0xf]
        %v3969 = vld [vmem:[#allocation3 + $0x28] sm:$0xf]
        %v3970 = vld [vmem:[#allocation3 + $0x2c] sm:$0xf]
        %v3971 = vld [vmem:[#allocation3 + $0x30] sm:$0xf]
        %v3972 = vld [vmem:[#allocation3 + $0x34] sm:$0xf]
        %v3973 = vld [vmem:[#allocation3 + $0x38] sm:$0xf]
        %v3974 = vld [vmem:[#allocation3 + $0x3c] sm:$0xf]
        %v3975 = vld [vmem:[#allocation3 + $0x40] sm:$0xf]
        %v3976 = vld [vmem:[#allocation3 + $0x44] sm:$0xf]
        %v3977 = vld [vmem:[#allocation3 + $0x48] sm:$0x1]
        %s3978 = scalar_lea.vmem [#allocation9], 64
        %v3979 = vld [vmem:[%s3978] sm:$0xf]
        %v3980 = vld [vmem:[%s3978 + $0x4] sm:$0xf]
        %v3981 = vld [vmem:[%s3978 + $0x8] sm:$0xf]
        %v3982 = vld [vmem:[%s3978 + $0xc] sm:$0xf]
        %v3983 = vld [vmem:[%s3978 + $0x10] sm:$0xf]
        %v3984 = vld [vmem:[%s3978 + $0x14] sm:$0xf]
        %v3985 = vld [vmem:[%s3978 + $0x18] sm:$0xf]
        %v3986 = vld [vmem:[%s3978 + $0x1c] sm:$0xf]
        %v3987 = vld [vmem:[%s3978 + $0x20] sm:$0xf]
        %v3988 = vld [vmem:[%s3978 + $0x24] sm:$0xf]
        %v3989 = vld [vmem:[%s3978 + $0x28] sm:$0xf]
        %v3990 = vld [vmem:[%s3978 + $0x2c] sm:$0xf]
        %v3991 = vld [vmem:[%s3978 + $0x30] sm:$0xf]
        %v3992 = vld [vmem:[%s3978 + $0x34] sm:$0xf]
        %v3993 = vld [vmem:[%s3978 + $0x38] sm:$0xf]
        %v3994 = vld [vmem:[%s3978 + $0x3c] sm:$0xf]
        %v4014 = vunpack.c.l.b16 %v3959
        %v4015 = vunpack.c.l.b16 %v3960
        %v4016 = vunpack.c.l.b16 %v3961
        %v4017 = vunpack.c.l.b16 %v3962
        %v4018 = vunpack.c.l.b16 %v3963
        %v4019 = vunpack.c.l.b16 %v3964
        %v4020 = vunpack.c.l.b16 %v3965
        %v4021 = vunpack.c.l.b16 %v3966
        %v4022 = vunpack.c.l.b16 %v3967
        %v4023 = vunpack.c.l.b16 %v3968
        %v4024 = vunpack.c.l.b16 %v3969
        %v4025 = vunpack.c.l.b16 %v3970
        %v4026 = vunpack.c.l.b16 %v3971
        %v4027 = vunpack.c.l.b16 %v3972
        %v4028 = vunpack.c.l.b16 %v3973
        %v4029 = vunpack.c.l.b16 %v3974
        %v4030 = vunpack.c.l.b16 %v3975
        %v4031 = vunpack.c.l.b16 %v3976
        %v4032 = vunpack.c.l.b16 %v3977
        %v4033 = vpack.c.b16 %v4015, %v4014
        %v4034 = vpack.c.b16 %v4017, %v4016
        %v4035 = vpack.c.b16 %v4019, %v4018
        %v4036 = vpack.c.b16 %v4021, %v4020
        %v4037 = vpack.c.b16 %v4023, %v4022
        %v4038 = vpack.c.b16 %v4025, %v4024
        %v4039 = vpack.c.b16 %v4027, %v4026
        %v4040 = vpack.c.b16 %v4029, %v4028
        %v4041 = vpack.c.b16 %v4031, %v4030
        %v4042 = vpack.c.b16 %v4032, %v4032
        %v4044 = vshrl.u32 %v4033, 16
        %v4046 = vshll.u32 %v4033, 16
        %v4048 = vrot.slane %v4046, 1
        %v4049 = vor.u32 %v4044, %v4048
        %v4051 = vshll.u32 %v4034, 16
        %v4053 = vrot.slane %v4051, 1
        %v4054 = vsel %vm744, %v4049, %v4053
        %v4055 = vshrl.u32 %v4034, 16
        %v4057 = vor.u32 %v4055, %v4053
        %v4059 = vshll.u32 %v4035, 16
        %v4061 = vrot.slane %v4059, 1
        %v4062 = vsel %vm744, %v4057, %v4061
        %v4063 = vshrl.u32 %v4035, 16
        %v4065 = vor.u32 %v4063, %v4061
        %v4067 = vshll.u32 %v4036, 16
        %v4069 = vrot.slane %v4067, 1
        %v4070 = vsel %vm744, %v4065, %v4069
        %v4071 = vshrl.u32 %v4036, 16
        %v4073 = vor.u32 %v4071, %v4069
        %v4075 = vshll.u32 %v4037, 16
        %v4077 = vrot.slane %v4075, 1
        %v4078 = vsel %vm744, %v4073, %v4077
        %v4079 = vshrl.u32 %v4037, 16
        %v4081 = vor.u32 %v4079, %v4077
        %v4083 = vshll.u32 %v4038, 16
        %v4085 = vrot.slane %v4083, 1
        %v4086 = vsel %vm744, %v4081, %v4085
        %v4087 = vshrl.u32 %v4038, 16
        %v4089 = vor.u32 %v4087, %v4085
        %v4091 = vshll.u32 %v4039, 16
        %v4093 = vrot.slane %v4091, 1
        %v4094 = vsel %vm744, %v4089, %v4093
        %v4095 = vshrl.u32 %v4039, 16
        %v4097 = vor.u32 %v4095, %v4093
        %v4099 = vshll.u32 %v4040, 16
        %v4101 = vrot.slane %v4099, 1
        %v4102 = vsel %vm744, %v4097, %v4101
        %v4103 = vshrl.u32 %v4040, 16
        %v4105 = vor.u32 %v4103, %v4101
        %v4107 = vshll.u32 %v4041, 16
        %v4109 = vrot.slane %v4107, 1
        %v4110 = vsel %vm744, %v4105, %v4109
        %v4111 = vshrl.u32 %v4041, 16
        %v4113 = vor.u32 %v4111, %v4109
        %v4115 = vshll.u32 %v4042, 16
        %v4117 = vrot.slane %v4115, 1
        %v4118 = vsel %vm744, %v4113, %v4117
        %v4144 = vunpack.c.l.b16 %v3979
        %v4145 = vunpack.c.l.b16 %v3980
        %v4146 = vunpack.c.l.b16 %v3981
        %v4147 = vunpack.c.l.b16 %v3982
        %v4148 = vunpack.c.l.b16 %v3983
        %v4149 = vunpack.c.l.b16 %v3984
        %v4150 = vunpack.c.l.b16 %v3985
        %v4151 = vunpack.c.l.b16 %v3986
        %v4152 = vunpack.c.l.b16 %v3987
        %v4153 = vunpack.c.l.b16 %v3988
        %v4154 = vunpack.c.l.b16 %v3989
        %v4155 = vunpack.c.l.b16 %v3990
        %v4156 = vunpack.c.l.b16 %v3991
        %v4157 = vunpack.c.l.b16 %v3992
        %v4158 = vunpack.c.l.b16 %v3993
        %v4159 = vunpack.c.l.b16 %v3994
        %v4160 = vpack.c.b16 %v4145, %v4144
        %v4161 = vpack.c.b16 %v4147, %v4146
        %v4162 = vpack.c.b16 %v4149, %v4148
        %v4163 = vpack.c.b16 %v4151, %v4150
        %v4164 = vpack.c.b16 %v4153, %v4152
        %v4165 = vpack.c.b16 %v4155, %v4154
        %v4166 = vpack.c.b16 %v4157, %v4156
        %v4167 = vpack.c.b16 %v4159, %v4158
        %4176 = vmatpush.bf16.msra.mxu0 %v4167
        %4177 = vmatpush.bf16.msra.mxu0 %v4166
        %4178 = vmatpush.bf16.msra.mxu0 %v4165
        %4179 = vmatpush.bf16.msra.mxu0 %v4164
        %4180 = vmatpush.bf16.msra.mxu0 %v4163
        %4181 = vmatpush.bf16.msra.mxu0 %v4162
        %4182 = vmatpush.bf16.msra.mxu0 %v4161
        %4183 = vmatpush.bf16.msra.mxu0 %v4160
        %4184 = vmatmul.bf16.gmra.mxu0 %v4054
        %v4185 = vpop.f32.mrf.mxu0
        %v4186 = vadd.f32 0.0, %v4185
        %v4187 = vpop.f32.mrf.mxu0
        %v4188 = vadd.f32 0.0, %v4187
        %4189 = vmatmul.bf16.gmra.mxu0 %v4062
        %v4190 = vpop.f32.mrf.mxu0
        %v4191 = vadd.f32 0.0, %v4190
        %v4192 = vpop.f32.mrf.mxu0
        %v4193 = vadd.f32 0.0, %v4192
        %4194 = vmatmul.bf16.gmra.mxu0 %v4070
        %v4195 = vpop.f32.mrf.mxu0
        %v4196 = vadd.f32 0.0, %v4195
        %v4197 = vpop.f32.mrf.mxu0
        %v4198 = vadd.f32 0.0, %v4197
        %4199 = vmatmul.bf16.gmra.mxu0 %v4078
        %v4200 = vpop.f32.mrf.mxu0
        %v4201 = vadd.f32 0.0, %v4200
        %v4202 = vpop.f32.mrf.mxu0
        %v4203 = vadd.f32 0.0, %v4202
        %4204 = vmatmul.bf16.gmra.mxu0 %v4086
        %v4205 = vpop.f32.mrf.mxu0
        %v4206 = vadd.f32 0.0, %v4205
        %v4207 = vpop.f32.mrf.mxu0
        %v4208 = vadd.f32 0.0, %v4207
        %4209 = vmatmul.bf16.gmra.mxu0 %v4094
        %v4210 = vpop.f32.mrf.mxu0
        %v4211 = vadd.f32 0.0, %v4210
        %v4212 = vpop.f32.mrf.mxu0
        %v4213 = vadd.f32 0.0, %v4212
        %4214 = vmatmul.bf16.gmra.mxu0 %v4102
        %v4215 = vpop.f32.mrf.mxu0
        %v4216 = vadd.f32 0.0, %v4215
        %v4217 = vpop.f32.mrf.mxu0
        %v4218 = vadd.f32 0.0, %v4217
        %4219 = vmatmul.bf16.gmra.mxu0 %v4110
        %v4220 = vpop.f32.mrf.mxu0
        %v4221 = vadd.f32 0.0, %v4220
        %v4222 = vpop.f32.mrf.mxu0
        %v4223 = vadd.f32 0.0, %v4222
        %4224 = vmatmul.bf16.gmra.mxu0 %v4118
        %v4225 = vpop.f32.mrf.mxu0
        %v4226 = vadd.f32 0.0, %v4225
        %v4227 = vpop.f32.mrf.mxu0
        %v4228 = vadd.f32 0.0, %v4227
        %4229 = vdwg.mxu0
        %v4230 = vld [vmem:[#allocation2] sm:$0xff]
        %v4231 = vld [vmem:[#allocation2 + $0x8] sm:$0xff]
        %v4232 = vld [vmem:[#allocation2 + $0x10] sm:$0xff]
        %v4233 = vld [vmem:[#allocation2 + $0x18] sm:$0xff]
        %v4234 = vld [vmem:[#allocation2 + $0x20] sm:$0xff]
        %v4235 = vld [vmem:[#allocation2 + $0x28] sm:$0xff]
        %v4236 = vld [vmem:[#allocation2 + $0x30] sm:$0xff]
        %v4237 = vld [vmem:[#allocation2 + $0x38] sm:$0xff]
        %v4238 = vld [vmem:[#allocation2 + $0x40] sm:$0xff]
        %v4239 = vld [vmem:[#allocation2 + $0x48] sm:$0xff]
        %v4240 = vld [vmem:[#allocation2 + $0x50] sm:$0xff]
        %v4241 = vld [vmem:[#allocation2 + $0x58] sm:$0xff]
        %v4242 = vld [vmem:[#allocation2 + $0x60] sm:$0xff]
        %v4243 = vld [vmem:[#allocation2 + $0x68] sm:$0xff]
        %v4244 = vld [vmem:[#allocation2 + $0x70] sm:$0xff]
        %v4245 = vld [vmem:[#allocation2 + $0x78] sm:$0xff]
        %v4246 = vld [vmem:[#allocation2 + $0x80] sm:$0xff]
        %v4247 = vld [vmem:[#allocation2 + $0x88] sm:$0xff]
        %v4248 = vadd.f32 %v4230, %v4186
        %v4249 = vadd.f32 %v4231, %v4188
        %v4250 = vadd.f32 %v4232, %v4191
        %v4251 = vadd.f32 %v4233, %v4193
        %v4252 = vadd.f32 %v4234, %v4196
        %v4253 = vadd.f32 %v4235, %v4198
        %v4254 = vadd.f32 %v4236, %v4201
        %v4255 = vadd.f32 %v4237, %v4203
        %v4256 = vadd.f32 %v4238, %v4206
        %v4257 = vadd.f32 %v4239, %v4208
        %v4258 = vadd.f32 %v4240, %v4211
        %v4259 = vadd.f32 %v4241, %v4213
        %v4260 = vadd.f32 %v4242, %v4216
        %v4261 = vadd.f32 %v4243, %v4218
        %v4262 = vadd.f32 %v4244, %v4221
        %v4263 = vadd.f32 %v4245, %v4223
        %v4264 = vadd.f32 %v4246, %v4226
        %v4265 = vadd.f32 %v4247, %v4228
        %4266 = vst [vmem:[#allocation2] sm:$0xff] %v4248
        %4267 = vst [vmem:[#allocation2 + $0x8] sm:$0xff] %v4249
        %4268 = vst [vmem:[#allocation2 + $0x10] sm:$0xff] %v4250
        %4269 = vst [vmem:[#allocation2 + $0x18] sm:$0xff] %v4251
        %4270 = vst [vmem:[#allocation2 + $0x20] sm:$0xff] %v4252
        %4271 = vst [vmem:[#allocation2 + $0x28] sm:$0xff] %v4253
        %4272 = vst [vmem:[#allocation2 + $0x30] sm:$0xff] %v4254
        %4273 = vst [vmem:[#allocation2 + $0x38] sm:$0xff] %v4255
        %4274 = vst [vmem:[#allocation2 + $0x40] sm:$0xff] %v4256
        %4275 = vst [vmem:[#allocation2 + $0x48] sm:$0xff] %v4257
        %4276 = vst [vmem:[#allocation2 + $0x50] sm:$0xff] %v4258
        %4277 = vst [vmem:[#allocation2 + $0x58] sm:$0xff] %v4259
        %4278 = vst [vmem:[#allocation2 + $0x60] sm:$0xff] %v4260
        %4279 = vst [vmem:[#allocation2 + $0x68] sm:$0xff] %v4261
        %4280 = vst [vmem:[#allocation2 + $0x70] sm:$0xff] %v4262
        %4281 = vst [vmem:[#allocation2 + $0x78] sm:$0xff] %v4263
        %4282 = vst [vmem:[#allocation2 + $0x80] sm:$0xff] %v4264
        %4283 = vst [vmem:[#allocation2 + $0x88] sm:$0xff] %v4265
        %v4284 = vld [vmem:[#allocation3] sm:$0xe]
        %v4285 = vld [vmem:[#allocation3 + $0x4] sm:$0xf]
        %v4286 = vld [vmem:[#allocation3 + $0x8] sm:$0xf]
        %v4287 = vld [vmem:[#allocation3 + $0xc] sm:$0xf]
        %v4288 = vld [vmem:[#allocation3 + $0x10] sm:$0xf]
        %v4289 = vld [vmem:[#allocation3 + $0x14] sm:$0xf]
        %v4290 = vld [vmem:[#allocation3 + $0x18] sm:$0xf]
        %v4291 = vld [vmem:[#allocation3 + $0x1c] sm:$0xf]
        %v4292 = vld [vmem:[#allocation3 + $0x20] sm:$0xf]
        %v4293 = vld [vmem:[#allocation3 + $0x24] sm:$0xf]
        %v4294 = vld [vmem:[#allocation3 + $0x28] sm:$0xf]
        %v4295 = vld [vmem:[#allocation3 + $0x2c] sm:$0xf]
        %v4296 = vld [vmem:[#allocation3 + $0x30] sm:$0xf]
        %v4297 = vld [vmem:[#allocation3 + $0x34] sm:$0xf]
        %v4298 = vld [vmem:[#allocation3 + $0x38] sm:$0xf]
        %v4299 = vld [vmem:[#allocation3 + $0x3c] sm:$0xf]
        %v4300 = vld [vmem:[#allocation3 + $0x40] sm:$0xf]
        %v4301 = vld [vmem:[#allocation3 + $0x44] sm:$0xf]
        %v4302 = vld [vmem:[#allocation3 + $0x48] sm:$0x1]
        %s4303 = scalar_lea.vmem [#allocation9], 128
        %v4304 = vld [vmem:[%s4303] sm:$0xf]
        %v4305 = vld [vmem:[%s4303 + $0x4] sm:$0xf]
        %v4306 = vld [vmem:[%s4303 + $0x8] sm:$0xf]
        %v4307 = vld [vmem:[%s4303 + $0xc] sm:$0xf]
        %v4308 = vld [vmem:[%s4303 + $0x10] sm:$0xf]
        %v4309 = vld [vmem:[%s4303 + $0x14] sm:$0xf]
        %v4310 = vld [vmem:[%s4303 + $0x18] sm:$0xf]
        %v4311 = vld [vmem:[%s4303 + $0x1c] sm:$0xf]
        %v4312 = vld [vmem:[%s4303 + $0x20] sm:$0xf]
        %v4313 = vld [vmem:[%s4303 + $0x24] sm:$0xf]
        %v4314 = vld [vmem:[%s4303 + $0x28] sm:$0xf]
        %v4315 = vld [vmem:[%s4303 + $0x2c] sm:$0xf]
        %v4316 = vld [vmem:[%s4303 + $0x30] sm:$0xf]
        %v4317 = vld [vmem:[%s4303 + $0x34] sm:$0xf]
        %v4318 = vld [vmem:[%s4303 + $0x38] sm:$0xf]
        %v4319 = vld [vmem:[%s4303 + $0x3c] sm:$0xf]
        %v4339 = vunpack.c.l.b16 %v4284
        %v4340 = vunpack.c.l.b16 %v4285
        %v4341 = vunpack.c.l.b16 %v4286
        %v4342 = vunpack.c.l.b16 %v4287
        %v4343 = vunpack.c.l.b16 %v4288
        %v4344 = vunpack.c.l.b16 %v4289
        %v4345 = vunpack.c.l.b16 %v4290
        %v4346 = vunpack.c.l.b16 %v4291
        %v4347 = vunpack.c.l.b16 %v4292
        %v4348 = vunpack.c.l.b16 %v4293
        %v4349 = vunpack.c.l.b16 %v4294
        %v4350 = vunpack.c.l.b16 %v4295
        %v4351 = vunpack.c.l.b16 %v4296
        %v4352 = vunpack.c.l.b16 %v4297
        %v4353 = vunpack.c.l.b16 %v4298
        %v4354 = vunpack.c.l.b16 %v4299
        %v4355 = vunpack.c.l.b16 %v4300
        %v4356 = vunpack.c.l.b16 %v4301
        %v4357 = vunpack.c.l.b16 %v4302
        %v4358 = vpack.c.b16 %v4340, %v4339
        %v4359 = vpack.c.b16 %v4342, %v4341
        %v4360 = vpack.c.b16 %v4344, %v4343
        %v4361 = vpack.c.b16 %v4346, %v4345
        %v4362 = vpack.c.b16 %v4348, %v4347
        %v4363 = vpack.c.b16 %v4350, %v4349
        %v4364 = vpack.c.b16 %v4352, %v4351
        %v4365 = vpack.c.b16 %v4354, %v4353
        %v4366 = vpack.c.b16 %v4356, %v4355
        %v4367 = vpack.c.b16 %v4357, %v4357
        %v4368 = vrot.slane %v4358, 1
        %v4369 = vrot.slane %v4359, 1
        %v4370 = vsel %vm1135, %v4368, %v4369
        %v4371 = vrot.slane %v4360, 1
        %v4372 = vsel %vm1135, %v4369, %v4371
        %v4373 = vrot.slane %v4361, 1
        %v4374 = vsel %vm1135, %v4371, %v4373
        %v4375 = vrot.slane %v4362, 1
        %v4376 = vsel %vm1135, %v4373, %v4375
        %v4377 = vrot.slane %v4363, 1
        %v4378 = vsel %vm1135, %v4375, %v4377
        %v4379 = vrot.slane %v4364, 1
        %v4380 = vsel %vm1135, %v4377, %v4379
        %v4381 = vrot.slane %v4365, 1
        %v4382 = vsel %vm1135, %v4379, %v4381
        %v4383 = vrot.slane %v4366, 1
        %v4384 = vsel %vm1135, %v4381, %v4383
        %v4385 = vrot.slane %v4367, 1
        %v4386 = vsel %vm1135, %v4383, %v4385
        %v4412 = vunpack.c.l.b16 %v4304
        %v4413 = vunpack.c.l.b16 %v4305
        %v4414 = vunpack.c.l.b16 %v4306
        %v4415 = vunpack.c.l.b16 %v4307
        %v4416 = vunpack.c.l.b16 %v4308
        %v4417 = vunpack.c.l.b16 %v4309
        %v4418 = vunpack.c.l.b16 %v4310
        %v4419 = vunpack.c.l.b16 %v4311
        %v4420 = vunpack.c.l.b16 %v4312
        %v4421 = vunpack.c.l.b16 %v4313
        %v4422 = vunpack.c.l.b16 %v4314
        %v4423 = vunpack.c.l.b16 %v4315
        %v4424 = vunpack.c.l.b16 %v4316
        %v4425 = vunpack.c.l.b16 %v4317
        %v4426 = vunpack.c.l.b16 %v4318
        %v4427 = vunpack.c.l.b16 %v4319
        %v4428 = vpack.c.b16 %v4413, %v4412
        %v4429 = vpack.c.b16 %v4415, %v4414
        %v4430 = vpack.c.b16 %v4417, %v4416
        %v4431 = vpack.c.b16 %v4419, %v4418
        %v4432 = vpack.c.b16 %v4421, %v4420
        %v4433 = vpack.c.b16 %v4423, %v4422
        %v4434 = vpack.c.b16 %v4425, %v4424
        %v4435 = vpack.c.b16 %v4427, %v4426
        %4444 = vmatpush.bf16.msra.mxu0 %v4435
        %4445 = vmatpush.bf16.msra.mxu0 %v4434
        %4446 = vmatpush.bf16.msra.mxu0 %v4433
        %4447 = vmatpush.bf16.msra.mxu0 %v4432
        %4448 = vmatpush.bf16.msra.mxu0 %v4431
        %4449 = vmatpush.bf16.msra.mxu0 %v4430
        %4450 = vmatpush.bf16.msra.mxu0 %v4429
        %4451 = vmatpush.bf16.msra.mxu0 %v4428
        %4452 = vmatmul.bf16.gmra.mxu0 %v4370
        %v4453 = vpop.f32.mrf.mxu0
        %v4454 = vadd.f32 0.0, %v4453
        %v4455 = vpop.f32.mrf.mxu0
        %v4456 = vadd.f32 0.0, %v4455
        %4457 = vmatmul.bf16.gmra.mxu0 %v4372
        %v4458 = vpop.f32.mrf.mxu0
        %v4459 = vadd.f32 0.0, %v4458
        %v4460 = vpop.f32.mrf.mxu0
        %v4461 = vadd.f32 0.0, %v4460
        %4462 = vmatmul.bf16.gmra.mxu0 %v4374
        %v4463 = vpop.f32.mrf.mxu0
        %v4464 = vadd.f32 0.0, %v4463
        %v4465 = vpop.f32.mrf.mxu0
        %v4466 = vadd.f32 0.0, %v4465
        %4467 = vmatmul.bf16.gmra.mxu0 %v4376
        %v4468 = vpop.f32.mrf.mxu0
        %v4469 = vadd.f32 0.0, %v4468
        %v4470 = vpop.f32.mrf.mxu0
        %v4471 = vadd.f32 0.0, %v4470
        %4472 = vmatmul.bf16.gmra.mxu0 %v4378
        %v4473 = vpop.f32.mrf.mxu0
        %v4474 = vadd.f32 0.0, %v4473
        %v4475 = vpop.f32.mrf.mxu0
        %v4476 = vadd.f32 0.0, %v4475
        %4477 = vmatmul.bf16.gmra.mxu0 %v4380
        %v4478 = vpop.f32.mrf.mxu0
        %v4479 = vadd.f32 0.0, %v4478
        %v4480 = vpop.f32.mrf.mxu0
        %v4481 = vadd.f32 0.0, %v4480
        %4482 = vmatmul.bf16.gmra.mxu0 %v4382
        %v4483 = vpop.f32.mrf.mxu0
        %v4484 = vadd.f32 0.0, %v4483
        %v4485 = vpop.f32.mrf.mxu0
        %v4486 = vadd.f32 0.0, %v4485
        %4487 = vmatmul.bf16.gmra.mxu0 %v4384
        %v4488 = vpop.f32.mrf.mxu0
        %v4489 = vadd.f32 0.0, %v4488
        %v4490 = vpop.f32.mrf.mxu0
        %v4491 = vadd.f32 0.0, %v4490
        %4492 = vmatmul.bf16.gmra.mxu0 %v4386
        %v4493 = vpop.f32.mrf.mxu0
        %v4494 = vadd.f32 0.0, %v4493
        %v4495 = vpop.f32.mrf.mxu0
        %v4496 = vadd.f32 0.0, %v4495
        %4497 = vdwg.mxu0
        %v4498 = vld [vmem:[#allocation2] sm:$0xff]
        %v4499 = vld [vmem:[#allocation2 + $0x8] sm:$0xff]
        %v4500 = vld [vmem:[#allocation2 + $0x10] sm:$0xff]
        %v4501 = vld [vmem:[#allocation2 + $0x18] sm:$0xff]
        %v4502 = vld [vmem:[#allocation2 + $0x20] sm:$0xff]
        %v4503 = vld [vmem:[#allocation2 + $0x28] sm:$0xff]
        %v4504 = vld [vmem:[#allocation2 + $0x30] sm:$0xff]
        %v4505 = vld [vmem:[#allocation2 + $0x38] sm:$0xff]
        %v4506 = vld [vmem:[#allocation2 + $0x40] sm:$0xff]
        %v4507 = vld [vmem:[#allocation2 + $0x48] sm:$0xff]
        %v4508 = vld [vmem:[#allocation2 + $0x50] sm:$0xff]
        %v4509 = vld [vmem:[#allocation2 + $0x58] sm:$0xff]
        %v4510 = vld [vmem:[#allocation2 + $0x60] sm:$0xff]
        %v4511 = vld [vmem:[#allocation2 + $0x68] sm:$0xff]
        %v4512 = vld [vmem:[#allocation2 + $0x70] sm:$0xff]
        %v4513 = vld [vmem:[#allocation2 + $0x78] sm:$0xff]
        %v4514 = vld [vmem:[#allocation2 + $0x80] sm:$0xff]
        %v4515 = vld [vmem:[#allocation2 + $0x88] sm:$0xff]
        %v4516 = vadd.f32 %v4498, %v4454
        %v4517 = vadd.f32 %v4499, %v4456
        %v4518 = vadd.f32 %v4500, %v4459
        %v4519 = vadd.f32 %v4501, %v4461
        %v4520 = vadd.f32 %v4502, %v4464
        %v4521 = vadd.f32 %v4503, %v4466
        %v4522 = vadd.f32 %v4504, %v4469
        %v4523 = vadd.f32 %v4505, %v4471
        %v4524 = vadd.f32 %v4506, %v4474
        %v4525 = vadd.f32 %v4507, %v4476
        %v4526 = vadd.f32 %v4508, %v4479
        %v4527 = vadd.f32 %v4509, %v4481
        %v4528 = vadd.f32 %v4510, %v4484
        %v4529 = vadd.f32 %v4511, %v4486
        %v4530 = vadd.f32 %v4512, %v4489
        %v4531 = vadd.f32 %v4513, %v4491
        %v4532 = vadd.f32 %v4514, %v4494
        %v4533 = vadd.f32 %v4515, %v4496
        %4534 = vst [vmem:[#allocation2] sm:$0xff] %v4516
        %4535 = vst [vmem:[#allocation2 + $0x8] sm:$0xff] %v4517
        %4536 = vst [vmem:[#allocation2 + $0x10] sm:$0xff] %v4518
        %4537 = vst [vmem:[#allocation2 + $0x18] sm:$0xff] %v4519
        %4538 = vst [vmem:[#allocation2 + $0x20] sm:$0xff] %v4520
        %4539 = vst [vmem:[#allocation2 + $0x28] sm:$0xff] %v4521
        %4540 = vst [vmem:[#allocation2 + $0x30] sm:$0xff] %v4522
        %4541 = vst [vmem:[#allocation2 + $0x38] sm:$0xff] %v4523
        %4542 = vst [vmem:[#allocation2 + $0x40] sm:$0xff] %v4524
        %4543 = vst [vmem:[#allocation2 + $0x48] sm:$0xff] %v4525
        %4544 = vst [vmem:[#allocation2 + $0x50] sm:$0xff] %v4526
        %4545 = vst [vmem:[#allocation2 + $0x58] sm:$0xff] %v4527
        %4546 = vst [vmem:[#allocation2 + $0x60] sm:$0xff] %v4528
        %4547 = vst [vmem:[#allocation2 + $0x68] sm:$0xff] %v4529
        %4548 = vst [vmem:[#allocation2 + $0x70] sm:$0xff] %v4530
        %4549 = vst [vmem:[#allocation2 + $0x78] sm:$0xff] %v4531
        %4550 = vst [vmem:[#allocation2 + $0x80] sm:$0xff] %v4532
        %4551 = vst [vmem:[#allocation2 + $0x88] sm:$0xff] %v4533
        %v4552 = vld [vmem:[#allocation3 + $0x8] sm:$0xe]
        %v4553 = vld [vmem:[#allocation3 + $0xc] sm:$0xf]
        %v4554 = vld [vmem:[#allocation3 + $0x10] sm:$0xf]
        %v4555 = vld [vmem:[#allocation3 + $0x14] sm:$0xf]
        %v4556 = vld [vmem:[#allocation3 + $0x18] sm:$0xf]
        %v4557 = vld [vmem:[#allocation3 + $0x1c] sm:$0xf]
        %v4558 = vld [vmem:[#allocation3 + $0x20] sm:$0xf]
        %v4559 = vld [vmem:[#allocation3 + $0x24] sm:$0xf]
        %v4560 = vld [vmem:[#allocation3 + $0x28] sm:$0xf]
        %v4561 = vld [vmem:[#allocation3 + $0x2c] sm:$0xf]
        %v4562 = vld [vmem:[#allocation3 + $0x30] sm:$0xf]
        %v4563 = vld [vmem:[#allocation3 + $0x34] sm:$0xf]
        %v4564 = vld [vmem:[#allocation3 + $0x38] sm:$0xf]
        %v4565 = vld [vmem:[#allocation3 + $0x3c] sm:$0xf]
        %v4566 = vld [vmem:[#allocation3 + $0x40] sm:$0xf]
        %v4567 = vld [vmem:[#allocation3 + $0x44] sm:$0xf]
        %v4568 = vld [vmem:[#allocation3 + $0x48] sm:$0xf]
        %v4569 = vld [vmem:[#allocation3 + $0x4c] sm:$0xf]
        %v4570 = vld [vmem:[#allocation3 + $0x50] sm:$0x1]
        %s4571 = scalar_lea.vmem [#allocation9], 192
        %v4572 = vld [vmem:[%s4571] sm:$0xf]
        %v4573 = vld [vmem:[%s4571 + $0x4] sm:$0xf]
        %v4574 = vld [vmem:[%s4571 + $0x8] sm:$0xf]
        %v4575 = vld [vmem:[%s4571 + $0xc] sm:$0xf]
        %v4576 = vld [vmem:[%s4571 + $0x10] sm:$0xf]
        %v4577 = vld [vmem:[%s4571 + $0x14] sm:$0xf]
        %v4578 = vld [vmem:[%s4571 + $0x18] sm:$0xf]
        %v4579 = vld [vmem:[%s4571 + $0x1c] sm:$0xf]
        %v4580 = vld [vmem:[%s4571 + $0x20] sm:$0xf]
        %v4581 = vld [vmem:[%s4571 + $0x24] sm:$0xf]
        %v4582 = vld [vmem:[%s4571 + $0x28] sm:$0xf]
        %v4583 = vld [vmem:[%s4571 + $0x2c] sm:$0xf]
        %v4584 = vld [vmem:[%s4571 + $0x30] sm:$0xf]
        %v4585 = vld [vmem:[%s4571 + $0x34] sm:$0xf]
        %v4586 = vld [vmem:[%s4571 + $0x38] sm:$0xf]
        %v4587 = vld [vmem:[%s4571 + $0x3c] sm:$0xf]
        %v4607 = vunpack.c.l.b16 %v4552
        %v4608 = vunpack.c.l.b16 %v4553
        %v4609 = vunpack.c.l.b16 %v4554
        %v4610 = vunpack.c.l.b16 %v4555
        %v4611 = vunpack.c.l.b16 %v4556
        %v4612 = vunpack.c.l.b16 %v4557
        %v4613 = vunpack.c.l.b16 %v4558
        %v4614 = vunpack.c.l.b16 %v4559
        %v4615 = vunpack.c.l.b16 %v4560
        %v4616 = vunpack.c.l.b16 %v4561
        %v4617 = vunpack.c.l.b16 %v4562
        %v4618 = vunpack.c.l.b16 %v4563
        %v4619 = vunpack.c.l.b16 %v4564
        %v4620 = vunpack.c.l.b16 %v4565
        %v4621 = vunpack.c.l.b16 %v4566
        %v4622 = vunpack.c.l.b16 %v4567
        %v4623 = vunpack.c.l.b16 %v4568
        %v4624 = vunpack.c.l.b16 %v4569
        %v4625 = vunpack.c.l.b16 %v4570
        %v4626 = vpack.c.b16 %v4608, %v4607
        %v4627 = vpack.c.b16 %v4610, %v4609
        %v4628 = vpack.c.b16 %v4612, %v4611
        %v4629 = vpack.c.b16 %v4614, %v4613
        %v4630 = vpack.c.b16 %v4616, %v4615
        %v4631 = vpack.c.b16 %v4618, %v4617
        %v4632 = vpack.c.b16 %v4620, %v4619
        %v4633 = vpack.c.b16 %v4622, %v4621
        %v4634 = vpack.c.b16 %v4624, %v4623
        %v4635 = vpack.c.b16 %v4625, %v4625
        %v4636 = vrot.slane %v4626, 1
        %v4637 = vrot.slane %v4627, 1
        %v4638 = vsel %vm1135, %v4636, %v4637
        %v4639 = vrot.slane %v4628, 1
        %v4640 = vsel %vm1135, %v4637, %v4639
        %v4641 = vrot.slane %v4629, 1
        %v4642 = vsel %vm1135, %v4639, %v4641
        %v4643 = vrot.slane %v4630, 1
        %v4644 = vsel %vm1135, %v4641, %v4643
        %v4645 = vrot.slane %v4631, 1
        %v4646 = vsel %vm1135, %v4643, %v4645
        %v4647 = vrot.slane %v4632, 1
        %v4648 = vsel %vm1135, %v4645, %v4647
        %v4649 = vrot.slane %v4633, 1
        %v4650 = vsel %vm1135, %v4647, %v4649
        %v4651 = vrot.slane %v4634, 1
        %v4652 = vsel %vm1135, %v4649, %v4651
        %v4653 = vrot.slane %v4635, 1
        %v4654 = vsel %vm1135, %v4651, %v4653
        %v4680 = vunpack.c.l.b16 %v4572
        %v4681 = vunpack.c.l.b16 %v4573
        %v4682 = vunpack.c.l.b16 %v4574
        %v4683 = vunpack.c.l.b16 %v4575
        %v4684 = vunpack.c.l.b16 %v4576
        %v4685 = vunpack.c.l.b16 %v4577
        %v4686 = vunpack.c.l.b16 %v4578
        %v4687 = vunpack.c.l.b16 %v4579
        %v4688 = vunpack.c.l.b16 %v4580
        %v4689 = vunpack.c.l.b16 %v4581
        %v4690 = vunpack.c.l.b16 %v4582
        %v4691 = vunpack.c.l.b16 %v4583
        %v4692 = vunpack.c.l.b16 %v4584
        %v4693 = vunpack.c.l.b16 %v4585
        %v4694 = vunpack.c.l.b16 %v4586
        %v4695 = vunpack.c.l.b16 %v4587
        %v4696 = vpack.c.b16 %v4681, %v4680
        %v4697 = vpack.c.b16 %v4683, %v4682
        %v4698 = vpack.c.b16 %v4685, %v4684
        %v4699 = vpack.c.b16 %v4687, %v4686
        %v4700 = vpack.c.b16 %v4689, %v4688
        %v4701 = vpack.c.b16 %v4691, %v4690
        %v4702 = vpack.c.b16 %v4693, %v4692
        %v4703 = vpack.c.b16 %v4695, %v4694
        %4712 = vmatpush.bf16.msra.mxu0 %v4703
        %4713 = vmatpush.bf16.msra.mxu0 %v4702
        %4714 = vmatpush.bf16.msra.mxu0 %v4701
        %4715 = vmatpush.bf16.msra.mxu0 %v4700
        %4716 = vmatpush.bf16.msra.mxu0 %v4699
        %4717 = vmatpush.bf16.msra.mxu0 %v4698
        %4718 = vmatpush.bf16.msra.mxu0 %v4697
        %4719 = vmatpush.bf16.msra.mxu0 %v4696
        %4720 = vmatmul.bf16.gmra.mxu0 %v4638
        %v4721 = vpop.f32.mrf.mxu0
        %v4722 = vadd.f32 0.0, %v4721
        %v4723 = vpop.f32.mrf.mxu0
        %v4724 = vadd.f32 0.0, %v4723
        %4725 = vmatmul.bf16.gmra.mxu0 %v4640
        %v4726 = vpop.f32.mrf.mxu0
        %v4727 = vadd.f32 0.0, %v4726
        %v4728 = vpop.f32.mrf.mxu0
        %v4729 = vadd.f32 0.0, %v4728
        %4730 = vmatmul.bf16.gmra.mxu0 %v4642
        %v4731 = vpop.f32.mrf.mxu0
        %v4732 = vadd.f32 0.0, %v4731
        %v4733 = vpop.f32.mrf.mxu0
        %v4734 = vadd.f32 0.0, %v4733
        %4735 = vmatmul.bf16.gmra.mxu0 %v4644
        %v4736 = vpop.f32.mrf.mxu0
        %v4737 = vadd.f32 0.0, %v4736
        %v4738 = vpop.f32.mrf.mxu0
        %v4739 = vadd.f32 0.0, %v4738
        %4740 = vmatmul.bf16.gmra.mxu0 %v4646
        %v4741 = vpop.f32.mrf.mxu0
        %v4742 = vadd.f32 0.0, %v4741
        %v4743 = vpop.f32.mrf.mxu0
        %v4744 = vadd.f32 0.0, %v4743
        %4745 = vmatmul.bf16.gmra.mxu0 %v4648
        %v4746 = vpop.f32.mrf.mxu0
        %v4747 = vadd.f32 0.0, %v4746
        %v4748 = vpop.f32.mrf.mxu0
        %v4749 = vadd.f32 0.0, %v4748
        %4750 = vmatmul.bf16.gmra.mxu0 %v4650
        %v4751 = vpop.f32.mrf.mxu0
        %v4752 = vadd.f32 0.0, %v4751
        %v4753 = vpop.f32.mrf.mxu0
        %v4754 = vadd.f32 0.0, %v4753
        %4755 = vmatmul.bf16.gmra.mxu0 %v4652
        %v4756 = vpop.f32.mrf.mxu0
        %v4757 = vadd.f32 0.0, %v4756
        %v4758 = vpop.f32.mrf.mxu0
        %v4759 = vadd.f32 0.0, %v4758
        %4760 = vmatmul.bf16.gmra.mxu0 %v4654
        %v4761 = vpop.f32.mrf.mxu0
        %v4762 = vadd.f32 0.0, %v4761
        %v4763 = vpop.f32.mrf.mxu0
        %v4764 = vadd.f32 0.0, %v4763
        %4765 = vdwg.mxu0
        %v4766 = vld [vmem:[#allocation2] sm:$0xff]
        %v4767 = vld [vmem:[#allocation2 + $0x8] sm:$0xff]
        %v4768 = vld [vmem:[#allocation2 + $0x10] sm:$0xff]
        %v4769 = vld [vmem:[#allocation2 + $0x18] sm:$0xff]
        %v4770 = vld [vmem:[#allocation2 + $0x20] sm:$0xff]
        %v4771 = vld [vmem:[#allocation2 + $0x28] sm:$0xff]
        %v4772 = vld [vmem:[#allocation2 + $0x30] sm:$0xff]
        %v4773 = vld [vmem:[#allocation2 + $0x38] sm:$0xff]
        %v4774 = vld [vmem:[#allocation2 + $0x40] sm:$0xff]
        %v4775 = vld [vmem:[#allocation2 + $0x48] sm:$0xff]
        %v4776 = vld [vmem:[#allocation2 + $0x50] sm:$0xff]
        %v4777 = vld [vmem:[#allocation2 + $0x58] sm:$0xff]
        %v4778 = vld [vmem:[#allocation2 + $0x60] sm:$0xff]
        %v4779 = vld [vmem:[#allocation2 + $0x68] sm:$0xff]
        %v4780 = vld [vmem:[#allocation2 + $0x70] sm:$0xff]
        %v4781 = vld [vmem:[#allocation2 + $0x78] sm:$0xff]
        %v4782 = vld [vmem:[#allocation2 + $0x80] sm:$0xff]
        %v4783 = vld [vmem:[#allocation2 + $0x88] sm:$0xff]
        %v4784 = vadd.f32 %v4766, %v4722
        %v4785 = vadd.f32 %v4767, %v4724
        %v4786 = vadd.f32 %v4768, %v4727
        %v4787 = vadd.f32 %v4769, %v4729
        %v4788 = vadd.f32 %v4770, %v4732
        %v4789 = vadd.f32 %v4771, %v4734
        %v4790 = vadd.f32 %v4772, %v4737
        %v4791 = vadd.f32 %v4773, %v4739
        %v4792 = vadd.f32 %v4774, %v4742
        %v4793 = vadd.f32 %v4775, %v4744
        %v4794 = vadd.f32 %v4776, %v4747
        %v4795 = vadd.f32 %v4777, %v4749
        %v4796 = vadd.f32 %v4778, %v4752
        %v4797 = vadd.f32 %v4779, %v4754
        %v4798 = vadd.f32 %v4780, %v4757
        %v4799 = vadd.f32 %v4781, %v4759
        %v4800 = vadd.f32 %v4782, %v4762
        %v4801 = vadd.f32 %v4783, %v4764
        %4802 = vst [vmem:[#allocation2] sm:$0xff] %v4784
        %4803 = vst [vmem:[#allocation2 + $0x8] sm:$0xff] %v4785
        %4804 = vst [vmem:[#allocation2 + $0x10] sm:$0xff] %v4786
        %4805 = vst [vmem:[#allocation2 + $0x18] sm:$0xff] %v4787
        %4806 = vst [vmem:[#allocation2 + $0x20] sm:$0xff] %v4788
        %4807 = vst [vmem:[#allocation2 + $0x28] sm:$0xff] %v4789
        %4808 = vst [vmem:[#allocation2 + $0x30] sm:$0xff] %v4790
        %4809 = vst [vmem:[#allocation2 + $0x38] sm:$0xff] %v4791
        %4810 = vst [vmem:[#allocation2 + $0x40] sm:$0xff] %v4792
        %4811 = vst [vmem:[#allocation2 + $0x48] sm:$0xff] %v4793
        %4812 = vst [vmem:[#allocation2 + $0x50] sm:$0xff] %v4794
        %4813 = vst [vmem:[#allocation2 + $0x58] sm:$0xff] %v4795
        %4814 = vst [vmem:[#allocation2 + $0x60] sm:$0xff] %v4796
        %4815 = vst [vmem:[#allocation2 + $0x68] sm:$0xff] %v4797
        %4816 = vst [vmem:[#allocation2 + $0x70] sm:$0xff] %v4798
        %4817 = vst [vmem:[#allocation2 + $0x78] sm:$0xff] %v4799
        %4818 = vst [vmem:[#allocation2 + $0x80] sm:$0xff] %v4800
        %4819 = vst [vmem:[#allocation2 + $0x88] sm:$0xff] %v4801
        %v4820 = vld [vmem:[#allocation3 + $0x8] sm:$0xe]
        %v4821 = vld [vmem:[#allocation3 + $0xc] sm:$0xf]
        %v4822 = vld [vmem:[#allocation3 + $0x10] sm:$0xf]
        %v4823 = vld [vmem:[#allocation3 + $0x14] sm:$0xf]
        %v4824 = vld [vmem:[#allocation3 + $0x18] sm:$0xf]
        %v4825 = vld [vmem:[#allocation3 + $0x1c] sm:$0xf]
        %v4826 = vld [vmem:[#allocation3 + $0x20] sm:$0xf]
        %v4827 = vld [vmem:[#allocation3 + $0x24] sm:$0xf]
        %v4828 = vld [vmem:[#allocation3 + $0x28] sm:$0xf]
        %v4829 = vld [vmem:[#allocation3 + $0x2c] sm:$0xf]
        %v4830 = vld [vmem:[#allocation3 + $0x30] sm:$0xf]
        %v4831 = vld [vmem:[#allocation3 + $0x34] sm:$0xf]
        %v4832 = vld [vmem:[#allocation3 + $0x38] sm:$0xf]
        %v4833 = vld [vmem:[#allocation3 + $0x3c] sm:$0xf]
        %v4834 = vld [vmem:[#allocation3 + $0x40] sm:$0xf]
        %v4835 = vld [vmem:[#allocation3 + $0x44] sm:$0xf]
        %v4836 = vld [vmem:[#allocation3 + $0x48] sm:$0xf]
        %v4837 = vld [vmem:[#allocation3 + $0x4c] sm:$0xf]
        %v4838 = vld [vmem:[#allocation3 + $0x50] sm:$0x3]
        %s4839 = scalar_lea.vmem [#allocation9], 256
        %v4840 = vld [vmem:[%s4839] sm:$0xf]
        %v4841 = vld [vmem:[%s4839 + $0x4] sm:$0xf]
        %v4842 = vld [vmem:[%s4839 + $0x8] sm:$0xf]
        %v4843 = vld [vmem:[%s4839 + $0xc] sm:$0xf]
        %v4844 = vld [vmem:[%s4839 + $0x10] sm:$0xf]
        %v4845 = vld [vmem:[%s4839 + $0x14] sm:$0xf]
        %v4846 = vld [vmem:[%s4839 + $0x18] sm:$0xf]
        %v4847 = vld [vmem:[%s4839 + $0x1c] sm:$0xf]
        %v4848 = vld [vmem:[%s4839 + $0x20] sm:$0xf]
        %v4849 = vld [vmem:[%s4839 + $0x24] sm:$0xf]
        %v4850 = vld [vmem:[%s4839 + $0x28] sm:$0xf]
        %v4851 = vld [vmem:[%s4839 + $0x2c] sm:$0xf]
        %v4852 = vld [vmem:[%s4839 + $0x30] sm:$0xf]
        %v4853 = vld [vmem:[%s4839 + $0x34] sm:$0xf]
        %v4854 = vld [vmem:[%s4839 + $0x38] sm:$0xf]
        %v4855 = vld [vmem:[%s4839 + $0x3c] sm:$0xf]
        %v4875 = vunpack.c.l.b16 %v4820
        %v4876 = vunpack.c.l.b16 %v4821
        %v4877 = vunpack.c.l.b16 %v4822
        %v4878 = vunpack.c.l.b16 %v4823
        %v4879 = vunpack.c.l.b16 %v4824
        %v4880 = vunpack.c.l.b16 %v4825
        %v4881 = vunpack.c.l.b16 %v4826
        %v4882 = vunpack.c.l.b16 %v4827
        %v4883 = vunpack.c.l.b16 %v4828
        %v4884 = vunpack.c.l.b16 %v4829
        %v4885 = vunpack.c.l.b16 %v4830
        %v4886 = vunpack.c.l.b16 %v4831
        %v4887 = vunpack.c.l.b16 %v4832
        %v4888 = vunpack.c.l.b16 %v4833
        %v4889 = vunpack.c.l.b16 %v4834
        %v4890 = vunpack.c.l.b16 %v4835
        %v4891 = vunpack.c.l.b16 %v4836
        %v4892 = vunpack.c.l.b16 %v4837
        %v4893 = vunpack.c.l.b16 %v4838
        %v4894 = vpack.c.b16 %v4876, %v4875
        %v4895 = vpack.c.b16 %v4878, %v4877
        %v4896 = vpack.c.b16 %v4880, %v4879
        %v4897 = vpack.c.b16 %v4882, %v4881
        %v4898 = vpack.c.b16 %v4884, %v4883
        %v4899 = vpack.c.b16 %v4886, %v4885
        %v4900 = vpack.c.b16 %v4888, %v4887
        %v4901 = vpack.c.b16 %v4890, %v4889
        %v4902 = vpack.c.b16 %v4892, %v4891
        %v4903 = vpack.c.b16 %v4893, %v4893
        %v4905 = vshrl.u32 %v4894, 16
        %v4907 = vrot.slane %v4905, 1
        %v4908 = vshll.u32 %v4894, 16
        %v4910 = vrot.slane %v4908, 2
        %v4911 = vor.u32 %v4907, %v4910
        %v4913 = vshrl.u32 %v4895, 16
        %v4915 = vrot.slane %v4913, 1
        %v4916 = vshll.u32 %v4895, 16
        %v4918 = vrot.slane %v4916, 2
        %v4919 = vor.u32 %v4915, %v4918
        %v4920 = vsel %vm1772, %v4911, %v4919
        %v4922 = vshrl.u32 %v4896, 16
        %v4924 = vrot.slane %v4922, 1
        %v4925 = vshll.u32 %v4896, 16
        %v4927 = vrot.slane %v4925, 2
        %v4928 = vor.u32 %v4924, %v4927
        %v4929 = vsel %vm1772, %v4919, %v4928
        %v4931 = vshrl.u32 %v4897, 16
        %v4933 = vrot.slane %v4931, 1
        %v4934 = vshll.u32 %v4897, 16
        %v4936 = vrot.slane %v4934, 2
        %v4937 = vor.u32 %v4933, %v4936
        %v4938 = vsel %vm1772, %v4928, %v4937
        %v4940 = vshrl.u32 %v4898, 16
        %v4942 = vrot.slane %v4940, 1
        %v4943 = vshll.u32 %v4898, 16
        %v4945 = vrot.slane %v4943, 2
        %v4946 = vor.u32 %v4942, %v4945
        %v4947 = vsel %vm1772, %v4937, %v4946
        %v4949 = vshrl.u32 %v4899, 16
        %v4951 = vrot.slane %v4949, 1
        %v4952 = vshll.u32 %v4899, 16
        %v4954 = vrot.slane %v4952, 2
        %v4955 = vor.u32 %v4951, %v4954
        %v4956 = vsel %vm1772, %v4946, %v4955
        %v4958 = vshrl.u32 %v4900, 16
        %v4960 = vrot.slane %v4958, 1
        %v4961 = vshll.u32 %v4900, 16
        %v4963 = vrot.slane %v4961, 2
        %v4964 = vor.u32 %v4960, %v4963
        %v4965 = vsel %vm1772, %v4955, %v4964
        %v4967 = vshrl.u32 %v4901, 16
        %v4969 = vrot.slane %v4967, 1
        %v4970 = vshll.u32 %v4901, 16
        %v4972 = vrot.slane %v4970, 2
        %v4973 = vor.u32 %v4969, %v4972
        %v4974 = vsel %vm1772, %v4964, %v4973
        %v4976 = vshrl.u32 %v4902, 16
        %v4978 = vrot.slane %v4976, 1
        %v4979 = vshll.u32 %v4902, 16
        %v4981 = vrot.slane %v4979, 2
        %v4982 = vor.u32 %v4978, %v4981
        %v4983 = vsel %vm1772, %v4973, %v4982
        %v4985 = vshrl.u32 %v4903, 16
        %v4987 = vrot.slane %v4985, 1
        %v4988 = vshll.u32 %v4903, 16
        %v4990 = vrot.slane %v4988, 2
        %v4991 = vor.u32 %v4987, %v4990
        %v4992 = vsel %vm1772, %v4982, %v4991
        %v5018 = vunpack.c.l.b16 %v4840
        %v5019 = vunpack.c.l.b16 %v4841
        %v5020 = vunpack.c.l.b16 %v4842
        %v5021 = vunpack.c.l.b16 %v4843
        %v5022 = vunpack.c.l.b16 %v4844
        %v5023 = vunpack.c.l.b16 %v4845
        %v5024 = vunpack.c.l.b16 %v4846
        %v5025 = vunpack.c.l.b16 %v4847
        %v5026 = vunpack.c.l.b16 %v4848
        %v5027 = vunpack.c.l.b16 %v4849
        %v5028 = vunpack.c.l.b16 %v4850
        %v5029 = vunpack.c.l.b16 %v4851
        %v5030 = vunpack.c.l.b16 %v4852
        %v5031 = vunpack.c.l.b16 %v4853
        %v5032 = vunpack.c.l.b16 %v4854
        %v5033 = vunpack.c.l.b16 %v4855
        %v5034 = vpack.c.b16 %v5019, %v5018
        %v5035 = vpack.c.b16 %v5021, %v5020
        %v5036 = vpack.c.b16 %v5023, %v5022
        %v5037 = vpack.c.b16 %v5025, %v5024
        %v5038 = vpack.c.b16 %v5027, %v5026
        %v5039 = vpack.c.b16 %v5029, %v5028
        %v5040 = vpack.c.b16 %v5031, %v5030
        %v5041 = vpack.c.b16 %v5033, %v5032
        %5050 = vmatpush.bf16.msra.mxu0 %v5041
        %5051 = vmatpush.bf16.msra.mxu0 %v5040
        %5052 = vmatpush.bf16.msra.mxu0 %v5039
        %5053 = vmatpush.bf16.msra.mxu0 %v5038
        %5054 = vmatpush.bf16.msra.mxu0 %v5037
        %5055 = vmatpush.bf16.msra.mxu0 %v5036
        %5056 = vmatpush.bf16.msra.mxu0 %v5035
        %5057 = vmatpush.bf16.msra.mxu0 %v5034
        %5058 = vmatmul.bf16.gmra.mxu0 %v4920
        %v5059 = vpop.f32.mrf.mxu0
        %v5060 = vadd.f32 0.0, %v5059
        %v5061 = vpop.f32.mrf.mxu0
        %v5062 = vadd.f32 0.0, %v5061
        %5063 = vmatmul.bf16.gmra.mxu0 %v4929
        %v5064 = vpop.f32.mrf.mxu0
        %v5065 = vadd.f32 0.0, %v5064
        %v5066 = vpop.f32.mrf.mxu0
        %v5067 = vadd.f32 0.0, %v5066
        %5068 = vmatmul.bf16.gmra.mxu0 %v4938
        %v5069 = vpop.f32.mrf.mxu0
        %v5070 = vadd.f32 0.0, %v5069
        %v5071 = vpop.f32.mrf.mxu0
        %v5072 = vadd.f32 0.0, %v5071
        %5073 = vmatmul.bf16.gmra.mxu0 %v4947
        %v5074 = vpop.f32.mrf.mxu0
        %v5075 = vadd.f32 0.0, %v5074
        %v5076 = vpop.f32.mrf.mxu0
        %v5077 = vadd.f32 0.0, %v5076
        %5078 = vmatmul.bf16.gmra.mxu0 %v4956
        %v5079 = vpop.f32.mrf.mxu0
        %v5080 = vadd.f32 0.0, %v5079
        %v5081 = vpop.f32.mrf.mxu0
        %v5082 = vadd.f32 0.0, %v5081
        %5083 = vmatmul.bf16.gmra.mxu0 %v4965
        %v5084 = vpop.f32.mrf.mxu0
        %v5085 = vadd.f32 0.0, %v5084
        %v5086 = vpop.f32.mrf.mxu0
        %v5087 = vadd.f32 0.0, %v5086
        %5088 = vmatmul.bf16.gmra.mxu0 %v4974
        %v5089 = vpop.f32.mrf.mxu0
        %v5090 = vadd.f32 0.0, %v5089
        %v5091 = vpop.f32.mrf.mxu0
        %v5092 = vadd.f32 0.0, %v5091
        %5093 = vmatmul.bf16.gmra.mxu0 %v4983
        %v5094 = vpop.f32.mrf.mxu0
        %v5095 = vadd.f32 0.0, %v5094
        %v5096 = vpop.f32.mrf.mxu0
        %v5097 = vadd.f32 0.0, %v5096
        %5098 = vmatmul.bf16.gmra.mxu0 %v4992
        %v5099 = vpop.f32.mrf.mxu0
        %v5100 = vadd.f32 0.0, %v5099
        %v5101 = vpop.f32.mrf.mxu0
        %v5102 = vadd.f32 0.0, %v5101
        %5103 = vdwg.mxu0
        %v5104 = vld [vmem:[#allocation2] sm:$0xff]
        %v5105 = vld [vmem:[#allocation2 + $0x8] sm:$0xff]
        %v5106 = vld [vmem:[#allocation2 + $0x10] sm:$0xff]
        %v5107 = vld [vmem:[#allocation2 + $0x18] sm:$0xff]
        %v5108 = vld [vmem:[#allocation2 + $0x20] sm:$0xff]
        %v5109 = vld [vmem:[#allocation2 + $0x28] sm:$0xff]
        %v5110 = vld [vmem:[#allocation2 + $0x30] sm:$0xff]
        %v5111 = vld [vmem:[#allocation2 + $0x38] sm:$0xff]
        %v5112 = vld [vmem:[#allocation2 + $0x40] sm:$0xff]
        %v5113 = vld [vmem:[#allocation2 + $0x48] sm:$0xff]
        %v5114 = vld [vmem:[#allocation2 + $0x50] sm:$0xff]
        %v5115 = vld [vmem:[#allocation2 + $0x58] sm:$0xff]
        %v5116 = vld [vmem:[#allocation2 + $0x60] sm:$0xff]
        %v5117 = vld [vmem:[#allocation2 + $0x68] sm:$0xff]
        %v5118 = vld [vmem:[#allocation2 + $0x70] sm:$0xff]
        %v5119 = vld [vmem:[#allocation2 + $0x78] sm:$0xff]
        %v5120 = vld [vmem:[#allocation2 + $0x80] sm:$0xff]
        %v5121 = vld [vmem:[#allocation2 + $0x88] sm:$0xff]
        %v5122 = vadd.f32 %v5104, %v5060
        %v5123 = vadd.f32 %v5105, %v5062
        %v5124 = vadd.f32 %v5106, %v5065
        %v5125 = vadd.f32 %v5107, %v5067
        %v5126 = vadd.f32 %v5108, %v5070
        %v5127 = vadd.f32 %v5109, %v5072
        %v5128 = vadd.f32 %v5110, %v5075
        %v5129 = vadd.f32 %v5111, %v5077
        %v5130 = vadd.f32 %v5112, %v5080
        %v5131 = vadd.f32 %v5113, %v5082
        %v5132 = vadd.f32 %v5114, %v5085
        %v5133 = vadd.f32 %v5115, %v5087
        %v5134 = vadd.f32 %v5116, %v5090
        %v5135 = vadd.f32 %v5117, %v5092
        %v5136 = vadd.f32 %v5118, %v5095
        %v5137 = vadd.f32 %v5119, %v5097
        %v5138 = vadd.f32 %v5120, %v5100
        %v5139 = vadd.f32 %v5121, %v5102
        %5140 = vst [vmem:[#allocation2] sm:$0xff] %v5122
        %5141 = vst [vmem:[#allocation2 + $0x8] sm:$0xff] %v5123
        %5142 = vst [vmem:[#allocation2 + $0x10] sm:$0xff] %v5124
        %5143 = vst [vmem:[#allocation2 + $0x18] sm:$0xff] %v5125
        %5144 = vst [vmem:[#allocation2 + $0x20] sm:$0xff] %v5126
        %5145 = vst [vmem:[#allocation2 + $0x28] sm:$0xff] %v5127
        %5146 = vst [vmem:[#allocation2 + $0x30] sm:$0xff] %v5128
        %5147 = vst [vmem:[#allocation2 + $0x38] sm:$0xff] %v5129
        %5148 = vst [vmem:[#allocation2 + $0x40] sm:$0xff] %v5130
        %5149 = vst [vmem:[#allocation2 + $0x48] sm:$0xff] %v5131
        %5150 = vst [vmem:[#allocation2 + $0x50] sm:$0xff] %v5132
        %5151 = vst [vmem:[#allocation2 + $0x58] sm:$0xff] %v5133
        %5152 = vst [vmem:[#allocation2 + $0x60] sm:$0xff] %v5134
        %5153 = vst [vmem:[#allocation2 + $0x68] sm:$0xff] %v5135
        %5154 = vst [vmem:[#allocation2 + $0x70] sm:$0xff] %v5136
        %5155 = vst [vmem:[#allocation2 + $0x78] sm:$0xff] %v5137
        %5156 = vst [vmem:[#allocation2 + $0x80] sm:$0xff] %v5138
        %5157 = vst [vmem:[#allocation2 + $0x88] sm:$0xff] %v5139
        %v5158 = vld [vmem:[#allocation3 + $0x8] sm:$0xc]
        %v5159 = vld [vmem:[#allocation3 + $0xc] sm:$0xf]
        %v5160 = vld [vmem:[#allocation3 + $0x10] sm:$0xf]
        %v5161 = vld [vmem:[#allocation3 + $0x14] sm:$0xf]
        %v5162 = vld [vmem:[#allocation3 + $0x18] sm:$0xf]
        %v5163 = vld [vmem:[#allocation3 + $0x1c] sm:$0xf]
        %v5164 = vld [vmem:[#allocation3 + $0x20] sm:$0xf]
        %v5165 = vld [vmem:[#allocation3 + $0x24] sm:$0xf]
        %v5166 = vld [vmem:[#allocation3 + $0x28] sm:$0xf]
        %v5167 = vld [vmem:[#allocation3 + $0x2c] sm:$0xf]
        %v5168 = vld [vmem:[#allocation3 + $0x30] sm:$0xf]
        %v5169 = vld [vmem:[#allocation3 + $0x34] sm:$0xf]
        %v5170 = vld [vmem:[#allocation3 + $0x38] sm:$0xf]
        %v5171 = vld [vmem:[#allocation3 + $0x3c] sm:$0xf]
        %v5172 = vld [vmem:[#allocation3 + $0x40] sm:$0xf]
        %v5173 = vld [vmem:[#allocation3 + $0x44] sm:$0xf]
        %v5174 = vld [vmem:[#allocation3 + $0x48] sm:$0xf]
        %v5175 = vld [vmem:[#allocation3 + $0x4c] sm:$0xf]
        %v5176 = vld [vmem:[#allocation3 + $0x50] sm:$0x3]
        %s5177 = scalar_lea.vmem [#allocation9], 320
        %v5178 = vld [vmem:[%s5177] sm:$0xf]
        %v5179 = vld [vmem:[%s5177 + $0x4] sm:$0xf]
        %v5180 = vld [vmem:[%s5177 + $0x8] sm:$0xf]
        %v5181 = vld [vmem:[%s5177 + $0xc] sm:$0xf]
        %v5182 = vld [vmem:[%s5177 + $0x10] sm:$0xf]
        %v5183 = vld [vmem:[%s5177 + $0x14] sm:$0xf]
        %v5184 = vld [vmem:[%s5177 + $0x18] sm:$0xf]
        %v5185 = vld [vmem:[%s5177 + $0x1c] sm:$0xf]
        %v5186 = vld [vmem:[%s5177 + $0x20] sm:$0xf]
        %v5187 = vld [vmem:[%s5177 + $0x24] sm:$0xf]
        %v5188 = vld [vmem:[%s5177 + $0x28] sm:$0xf]
        %v5189 = vld [vmem:[%s5177 + $0x2c] sm:$0xf]
        %v5190 = vld [vmem:[%s5177 + $0x30] sm:$0xf]
        %v5191 = vld [vmem:[%s5177 + $0x34] sm:$0xf]
        %v5192 = vld [vmem:[%s5177 + $0x38] sm:$0xf]
        %v5193 = vld [vmem:[%s5177 + $0x3c] sm:$0xf]
        %v5213 = vunpack.c.l.b16 %v5158
        %v5214 = vunpack.c.l.b16 %v5159
        %v5215 = vunpack.c.l.b16 %v5160
        %v5216 = vunpack.c.l.b16 %v5161
        %v5217 = vunpack.c.l.b16 %v5162
        %v5218 = vunpack.c.l.b16 %v5163
        %v5219 = vunpack.c.l.b16 %v5164
        %v5220 = vunpack.c.l.b16 %v5165
        %v5221 = vunpack.c.l.b16 %v5166
        %v5222 = vunpack.c.l.b16 %v5167
        %v5223 = vunpack.c.l.b16 %v5168
        %v5224 = vunpack.c.l.b16 %v5169
        %v5225 = vunpack.c.l.b16 %v5170
        %v5226 = vunpack.c.l.b16 %v5171
        %v5227 = vunpack.c.l.b16 %v5172
        %v5228 = vunpack.c.l.b16 %v5173
        %v5229 = vunpack.c.l.b16 %v5174
        %v5230 = vunpack.c.l.b16 %v5175
        %v5231 = vunpack.c.l.b16 %v5176
        %v5232 = vpack.c.b16 %v5214, %v5213
        %v5233 = vpack.c.b16 %v5216, %v5215
        %v5234 = vpack.c.b16 %v5218, %v5217
        %v5235 = vpack.c.b16 %v5220, %v5219
        %v5236 = vpack.c.b16 %v5222, %v5221
        %v5237 = vpack.c.b16 %v5224, %v5223
        %v5238 = vpack.c.b16 %v5226, %v5225
        %v5239 = vpack.c.b16 %v5228, %v5227
        %v5240 = vpack.c.b16 %v5230, %v5229
        %v5241 = vpack.c.b16 %v5231, %v5231
        %v5242 = vrot.slane %v5232, 2
        %v5243 = vrot.slane %v5233, 2
        %v5244 = vsel %vm2175, %v5242, %v5243
        %v5245 = vrot.slane %v5234, 2
        %v5246 = vsel %vm2175, %v5243, %v5245
        %v5247 = vrot.slane %v5235, 2
        %v5248 = vsel %vm2175, %v5245, %v5247
        %v5249 = vrot.slane %v5236, 2
        %v5250 = vsel %vm2175, %v5247, %v5249
        %v5251 = vrot.slane %v5237, 2
        %v5252 = vsel %vm2175, %v5249, %v5251
        %v5253 = vrot.slane %v5238, 2
        %v5254 = vsel %vm2175, %v5251, %v5253
        %v5255 = vrot.slane %v5239, 2
        %v5256 = vsel %vm2175, %v5253, %v5255
        %v5257 = vrot.slane %v5240, 2
        %v5258 = vsel %vm2175, %v5255, %v5257
        %v5259 = vrot.slane %v5241, 2
        %v5260 = vsel %vm2175, %v5257, %v5259
        %v5286 = vunpack.c.l.b16 %v5178
        %v5287 = vunpack.c.l.b16 %v5179
        %v5288 = vunpack.c.l.b16 %v5180
        %v5289 = vunpack.c.l.b16 %v5181
        %v5290 = vunpack.c.l.b16 %v5182
        %v5291 = vunpack.c.l.b16 %v5183
        %v5292 = vunpack.c.l.b16 %v5184
        %v5293 = vunpack.c.l.b16 %v5185
        %v5294 = vunpack.c.l.b16 %v5186
        %v5295 = vunpack.c.l.b16 %v5187
        %v5296 = vunpack.c.l.b16 %v5188
        %v5297 = vunpack.c.l.b16 %v5189
        %v5298 = vunpack.c.l.b16 %v5190
        %v5299 = vunpack.c.l.b16 %v5191
        %v5300 = vunpack.c.l.b16 %v5192
        %v5301 = vunpack.c.l.b16 %v5193
        %v5302 = vpack.c.b16 %v5287, %v5286
        %v5303 = vpack.c.b16 %v5289, %v5288
        %v5304 = vpack.c.b16 %v5291, %v5290
        %v5305 = vpack.c.b16 %v5293, %v5292
        %v5306 = vpack.c.b16 %v5295, %v5294
        %v5307 = vpack.c.b16 %v5297, %v5296
        %v5308 = vpack.c.b16 %v5299, %v5298
        %v5309 = vpack.c.b16 %v5301, %v5300
        %5318 = vmatpush.bf16.msra.mxu0 %v5309
        %5319 = vmatpush.bf16.msra.mxu0 %v5308
        %5320 = vmatpush.bf16.msra.mxu0 %v5307
        %5321 = vmatpush.bf16.msra.mxu0 %v5306
        %5322 = vmatpush.bf16.msra.mxu0 %v5305
        %5323 = vmatpush.bf16.msra.mxu0 %v5304
        %5324 = vmatpush.bf16.msra.mxu0 %v5303
        %5325 = vmatpush.bf16.msra.mxu0 %v5302
        %5326 = vmatmul.bf16.gmra.mxu0 %v5244
        %v5327 = vpop.f32.mrf.mxu0
        %v5328 = vadd.f32 0.0, %v5327
        %v5329 = vpop.f32.mrf.mxu0
        %v5330 = vadd.f32 0.0, %v5329
        %5331 = vmatmul.bf16.gmra.mxu0 %v5246
        %v5332 = vpop.f32.mrf.mxu0
        %v5333 = vadd.f32 0.0, %v5332
        %v5334 = vpop.f32.mrf.mxu0
        %v5335 = vadd.f32 0.0, %v5334
        %5336 = vmatmul.bf16.gmra.mxu0 %v5248
        %v5337 = vpop.f32.mrf.mxu0
        %v5338 = vadd.f32 0.0, %v5337
        %v5339 = vpop.f32.mrf.mxu0
        %v5340 = vadd.f32 0.0, %v5339
        %5341 = vmatmul.bf16.gmra.mxu0 %v5250
        %v5342 = vpop.f32.mrf.mxu0
        %v5343 = vadd.f32 0.0, %v5342
        %v5344 = vpop.f32.mrf.mxu0
        %v5345 = vadd.f32 0.0, %v5344
        %5346 = vmatmul.bf16.gmra.mxu0 %v5252
        %v5347 = vpop.f32.mrf.mxu0
        %v5348 = vadd.f32 0.0, %v5347
        %v5349 = vpop.f32.mrf.mxu0
        %v5350 = vadd.f32 0.0, %v5349
        %5351 = vmatmul.bf16.gmra.mxu0 %v5254
        %v5352 = vpop.f32.mrf.mxu0
        %v5353 = vadd.f32 0.0, %v5352
        %v5354 = vpop.f32.mrf.mxu0
        %v5355 = vadd.f32 0.0, %v5354
        %5356 = vmatmul.bf16.gmra.mxu0 %v5256
        %v5357 = vpop.f32.mrf.mxu0
        %v5358 = vadd.f32 0.0, %v5357
        %v5359 = vpop.f32.mrf.mxu0
        %v5360 = vadd.f32 0.0, %v5359
        %5361 = vmatmul.bf16.gmra.mxu0 %v5258
        %v5362 = vpop.f32.mrf.mxu0
        %v5363 = vadd.f32 0.0, %v5362
        %v5364 = vpop.f32.mrf.mxu0
        %v5365 = vadd.f32 0.0, %v5364
        %5366 = vmatmul.bf16.gmra.mxu0 %v5260
        %v5367 = vpop.f32.mrf.mxu0
        %v5368 = vadd.f32 0.0, %v5367
        %v5369 = vpop.f32.mrf.mxu0
        %v5370 = vadd.f32 0.0, %v5369
        %5371 = vdwg.mxu0
        %v5372 = vld [vmem:[#allocation2] sm:$0xff]
        %v5373 = vld [vmem:[#allocation2 + $0x8] sm:$0xff]
        %v5374 = vld [vmem:[#allocation2 + $0x10] sm:$0xff]
        %v5375 = vld [vmem:[#allocation2 + $0x18] sm:$0xff]
        %v5376 = vld [vmem:[#allocation2 + $0x20] sm:$0xff]
        %v5377 = vld [vmem:[#allocation2 + $0x28] sm:$0xff]
        %v5378 = vld [vmem:[#allocation2 + $0x30] sm:$0xff]
        %v5379 = vld [vmem:[#allocation2 + $0x38] sm:$0xff]
        %v5380 = vld [vmem:[#allocation2 + $0x40] sm:$0xff]
        %v5381 = vld [vmem:[#allocation2 + $0x48] sm:$0xff]
        %v5382 = vld [vmem:[#allocation2 + $0x50] sm:$0xff]
        %v5383 = vld [vmem:[#allocation2 + $0x58] sm:$0xff]
        %v5384 = vld [vmem:[#allocation2 + $0x60] sm:$0xff]
        %v5385 = vld [vmem:[#allocation2 + $0x68] sm:$0xff]
        %v5386 = vld [vmem:[#allocation2 + $0x70] sm:$0xff]
        %v5387 = vld [vmem:[#allocation2 + $0x78] sm:$0xff]
        %v5388 = vld [vmem:[#allocation2 + $0x80] sm:$0xff]
        %v5389 = vld [vmem:[#allocation2 + $0x88] sm:$0xff]
        %v5390 = vadd.f32 %v5372, %v5328
        %v5391 = vadd.f32 %v5373, %v5330
        %v5392 = vadd.f32 %v5374, %v5333
        %v5393 = vadd.f32 %v5375, %v5335
        %v5394 = vadd.f32 %v5376, %v5338
        %v5395 = vadd.f32 %v5377, %v5340
        %v5396 = vadd.f32 %v5378, %v5343
        %v5397 = vadd.f32 %v5379, %v5345
        %v5398 = vadd.f32 %v5380, %v5348
        %v5399 = vadd.f32 %v5381, %v5350
        %v5400 = vadd.f32 %v5382, %v5353
        %v5401 = vadd.f32 %v5383, %v5355
        %v5402 = vadd.f32 %v5384, %v5358
        %v5403 = vadd.f32 %v5385, %v5360
        %v5404 = vadd.f32 %v5386, %v5363
        %v5405 = vadd.f32 %v5387, %v5365
        %v5406 = vadd.f32 %v5388, %v5368
        %v5407 = vadd.f32 %v5389, %v5370
        %5408 = vst [vmem:[#allocation2] sm:$0xff] %v5390
        %5409 = vst [vmem:[#allocation2 + $0x8] sm:$0xff] %v5391
        %5410 = vst [vmem:[#allocation2 + $0x10] sm:$0xff] %v5392
        %5411 = vst [vmem:[#allocation2 + $0x18] sm:$0xff] %v5393
        %5412 = vst [vmem:[#allocation2 + $0x20] sm:$0xff] %v5394
        %5413 = vst [vmem:[#allocation2 + $0x28] sm:$0xff] %v5395
        %5414 = vst [vmem:[#allocation2 + $0x30] sm:$0xff] %v5396
        %5415 = vst [vmem:[#allocation2 + $0x38] sm:$0xff] %v5397
        %5416 = vst [vmem:[#allocation2 + $0x40] sm:$0xff] %v5398
        %5417 = vst [vmem:[#allocation2 + $0x48] sm:$0xff] %v5399
        %5418 = vst [vmem:[#allocation2 + $0x50] sm:$0xff] %v5400
        %5419 = vst [vmem:[#allocation2 + $0x58] sm:$0xff] %v5401
        %5420 = vst [vmem:[#allocation2 + $0x60] sm:$0xff] %v5402
        %5421 = vst [vmem:[#allocation2 + $0x68] sm:$0xff] %v5403
        %5422 = vst [vmem:[#allocation2 + $0x70] sm:$0xff] %v5404
        %5423 = vst [vmem:[#allocation2 + $0x78] sm:$0xff] %v5405
        %5424 = vst [vmem:[#allocation2 + $0x80] sm:$0xff] %v5406
        %5425 = vst [vmem:[#allocation2 + $0x88] sm:$0xff] %v5407
        %v5426 = vld [vmem:[#allocation3 + $0x10] sm:$0xc]
        %v5427 = vld [vmem:[#allocation3 + $0x14] sm:$0xf]
        %v5428 = vld [vmem:[#allocation3 + $0x18] sm:$0xf]
        %v5429 = vld [vmem:[#allocation3 + $0x1c] sm:$0xf]
        %v5430 = vld [vmem:[#allocation3 + $0x20] sm:$0xf]
        %v5431 = vld [vmem:[#allocation3 + $0x24] sm:$0xf]
        %v5432 = vld [vmem:[#allocation3 + $0x28] sm:$0xf]
        %v5433 = vld [vmem:[#allocation3 + $0x2c] sm:$0xf]
        %v5434 = vld [vmem:[#allocation3 + $0x30] sm:$0xf]
        %v5435 = vld [vmem:[#allocation3 + $0x34] sm:$0xf]
        %v5436 = vld [vmem:[#allocation3 + $0x38] sm:$0xf]
        %v5437 = vld [vmem:[#allocation3 + $0x3c] sm:$0xf]
        %v5438 = vld [vmem:[#allocation3 + $0x40] sm:$0xf]
        %v5439 = vld [vmem:[#allocation3 + $0x44] sm:$0xf]
        %v5440 = vld [vmem:[#allocation3 + $0x48] sm:$0xf]
        %v5441 = vld [vmem:[#allocation3 + $0x4c] sm:$0xf]
        %v5442 = vld [vmem:[#allocation3 + $0x50] sm:$0xf]
        %v5443 = vld [vmem:[#allocation3 + $0x54] sm:$0xf]
        %v5444 = vld [vmem:[#allocation3 + $0x58] sm:$0x3]
        %s5445 = scalar_lea.vmem [#allocation9], 384
        %v5446 = vld [vmem:[%s5445] sm:$0xf]
        %v5447 = vld [vmem:[%s5445 + $0x4] sm:$0xf]
        %v5448 = vld [vmem:[%s5445 + $0x8] sm:$0xf]
        %v5449 = vld [vmem:[%s5445 + $0xc] sm:$0xf]
        %v5450 = vld [vmem:[%s5445 + $0x10] sm:$0xf]
        %v5451 = vld [vmem:[%s5445 + $0x14] sm:$0xf]
        %v5452 = vld [vmem:[%s5445 + $0x18] sm:$0xf]
        %v5453 = vld [vmem:[%s5445 + $0x1c] sm:$0xf]
        %v5454 = vld [vmem:[%s5445 + $0x20] sm:$0xf]
        %v5455 = vld [vmem:[%s5445 + $0x24] sm:$0xf]
        %v5456 = vld [vmem:[%s5445 + $0x28] sm:$0xf]
        %v5457 = vld [vmem:[%s5445 + $0x2c] sm:$0xf]
        %v5458 = vld [vmem:[%s5445 + $0x30] sm:$0xf]
        %v5459 = vld [vmem:[%s5445 + $0x34] sm:$0xf]
        %v5460 = vld [vmem:[%s5445 + $0x38] sm:$0xf]
        %v5461 = vld [vmem:[%s5445 + $0x3c] sm:$0xf]
        %v5481 = vunpack.c.l.b16 %v5426
        %v5482 = vunpack.c.l.b16 %v5427
        %v5483 = vunpack.c.l.b16 %v5428
        %v5484 = vunpack.c.l.b16 %v5429
        %v5485 = vunpack.c.l.b16 %v5430
        %v5486 = vunpack.c.l.b16 %v5431
        %v5487 = vunpack.c.l.b16 %v5432
        %v5488 = vunpack.c.l.b16 %v5433
        %v5489 = vunpack.c.l.b16 %v5434
        %v5490 = vunpack.c.l.b16 %v5435
        %v5491 = vunpack.c.l.b16 %v5436
        %v5492 = vunpack.c.l.b16 %v5437
        %v5493 = vunpack.c.l.b16 %v5438
        %v5494 = vunpack.c.l.b16 %v5439
        %v5495 = vunpack.c.l.b16 %v5440
        %v5496 = vunpack.c.l.b16 %v5441
        %v5497 = vunpack.c.l.b16 %v5442
        %v5498 = vunpack.c.l.b16 %v5443
        %v5499 = vunpack.c.l.b16 %v5444
        %v5500 = vpack.c.b16 %v5482, %v5481
        %v5501 = vpack.c.b16 %v5484, %v5483
        %v5502 = vpack.c.b16 %v5486, %v5485
        %v5503 = vpack.c.b16 %v5488, %v5487
        %v5504 = vpack.c.b16 %v5490, %v5489
        %v5505 = vpack.c.b16 %v5492, %v5491
        %v5506 = vpack.c.b16 %v5494, %v5493
        %v5507 = vpack.c.b16 %v5496, %v5495
        %v5508 = vpack.c.b16 %v5498, %v5497
        %v5509 = vpack.c.b16 %v5499, %v5499
        %v5510 = vrot.slane %v5500, 2
        %v5511 = vrot.slane %v5501, 2
        %v5512 = vsel %vm2175, %v5510, %v5511
        %v5513 = vrot.slane %v5502, 2
        %v5514 = vsel %vm2175, %v5511, %v5513
        %v5515 = vrot.slane %v5503, 2
        %v5516 = vsel %vm2175, %v5513, %v5515
        %v5517 = vrot.slane %v5504, 2
        %v5518 = vsel %vm2175, %v5515, %v5517
        %v5519 = vrot.slane %v5505, 2
        %v5520 = vsel %vm2175, %v5517, %v5519
        %v5521 = vrot.slane %v5506, 2
        %v5522 = vsel %vm2175, %v5519, %v5521
        %v5523 = vrot.slane %v5507, 2
        %v5524 = vsel %vm2175, %v5521, %v5523
        %v5525 = vrot.slane %v5508, 2
        %v5526 = vsel %vm2175, %v5523, %v5525
        %v5527 = vrot.slane %v5509, 2
        %v5528 = vsel %vm2175, %v5525, %v5527
        %v5554 = vunpack.c.l.b16 %v5446
        %v5555 = vunpack.c.l.b16 %v5447
        %v5556 = vunpack.c.l.b16 %v5448
        %v5557 = vunpack.c.l.b16 %v5449
        %v5558 = vunpack.c.l.b16 %v5450
        %v5559 = vunpack.c.l.b16 %v5451
        %v5560 = vunpack.c.l.b16 %v5452
        %v5561 = vunpack.c.l.b16 %v5453
        %v5562 = vunpack.c.l.b16 %v5454
        %v5563 = vunpack.c.l.b16 %v5455
        %v5564 = vunpack.c.l.b16 %v5456
        %v5565 = vunpack.c.l.b16 %v5457
        %v5566 = vunpack.c.l.b16 %v5458
        %v5567 = vunpack.c.l.b16 %v5459
        %v5568 = vunpack.c.l.b16 %v5460
        %v5569 = vunpack.c.l.b16 %v5461
        %v5570 = vpack.c.b16 %v5555, %v5554
        %v5571 = vpack.c.b16 %v5557, %v5556
        %v5572 = vpack.c.b16 %v5559, %v5558
        %v5573 = vpack.c.b16 %v5561, %v5560
        %v5574 = vpack.c.b16 %v5563, %v5562
        %v5575 = vpack.c.b16 %v5565, %v5564
        %v5576 = vpack.c.b16 %v5567, %v5566
        %v5577 = vpack.c.b16 %v5569, %v5568
        %5586 = vmatpush.bf16.msra.mxu0 %v5577
        %5587 = vmatpush.bf16.msra.mxu0 %v5576
        %5588 = vmatpush.bf16.msra.mxu0 %v5575
        %5589 = vmatpush.bf16.msra.mxu0 %v5574
        %5590 = vmatpush.bf16.msra.mxu0 %v5573
        %5591 = vmatpush.bf16.msra.mxu0 %v5572
        %5592 = vmatpush.bf16.msra.mxu0 %v5571
        %5593 = vmatpush.bf16.msra.mxu0 %v5570
        %5594 = vmatmul.bf16.gmra.mxu0 %v5512
        %v5595 = vpop.f32.mrf.mxu0
        %v5596 = vadd.f32 0.0, %v5595
        %v5597 = vpop.f32.mrf.mxu0
        %v5598 = vadd.f32 0.0, %v5597
        %5599 = vmatmul.bf16.gmra.mxu0 %v5514
        %v5600 = vpop.f32.mrf.mxu0
        %v5601 = vadd.f32 0.0, %v5600
        %v5602 = vpop.f32.mrf.mxu0
        %v5603 = vadd.f32 0.0, %v5602
        %5604 = vmatmul.bf16.gmra.mxu0 %v5516
        %v5605 = vpop.f32.mrf.mxu0
        %v5606 = vadd.f32 0.0, %v5605
        %v5607 = vpop.f32.mrf.mxu0
        %v5608 = vadd.f32 0.0, %v5607
        %5609 = vmatmul.bf16.gmra.mxu0 %v5518
        %v5610 = vpop.f32.mrf.mxu0
        %v5611 = vadd.f32 0.0, %v5610
        %v5612 = vpop.f32.mrf.mxu0
        %v5613 = vadd.f32 0.0, %v5612
        %5614 = vmatmul.bf16.gmra.mxu0 %v5520
        %v5615 = vpop.f32.mrf.mxu0
        %v5616 = vadd.f32 0.0, %v5615
        %v5617 = vpop.f32.mrf.mxu0
        %v5618 = vadd.f32 0.0, %v5617
        %5619 = vmatmul.bf16.gmra.mxu0 %v5522
        %v5620 = vpop.f32.mrf.mxu0
        %v5621 = vadd.f32 0.0, %v5620
        %v5622 = vpop.f32.mrf.mxu0
        %v5623 = vadd.f32 0.0, %v5622
        %5624 = vmatmul.bf16.gmra.mxu0 %v5524
        %v5625 = vpop.f32.mrf.mxu0
        %v5626 = vadd.f32 0.0, %v5625
        %v5627 = vpop.f32.mrf.mxu0
        %v5628 = vadd.f32 0.0, %v5627
        %5629 = vmatmul.bf16.gmra.mxu0 %v5526
        %v5630 = vpop.f32.mrf.mxu0
        %v5631 = vadd.f32 0.0, %v5630
        %v5632 = vpop.f32.mrf.mxu0
        %v5633 = vadd.f32 0.0, %v5632
        %5634 = vmatmul.bf16.gmra.mxu0 %v5528
        %v5635 = vpop.f32.mrf.mxu0
        %v5636 = vadd.f32 0.0, %v5635
        %v5637 = vpop.f32.mrf.mxu0
        %v5638 = vadd.f32 0.0, %v5637
        %5639 = vdwg.mxu0
        %v5640 = vld [vmem:[#allocation2] sm:$0xff]
        %v5641 = vld [vmem:[#allocation2 + $0x8] sm:$0xff]
        %v5642 = vld [vmem:[#allocation2 + $0x10] sm:$0xff]
        %v5643 = vld [vmem:[#allocation2 + $0x18] sm:$0xff]
        %v5644 = vld [vmem:[#allocation2 + $0x20] sm:$0xff]
        %v5645 = vld [vmem:[#allocation2 + $0x28] sm:$0xff]
        %v5646 = vld [vmem:[#allocation2 + $0x30] sm:$0xff]
        %v5647 = vld [vmem:[#allocation2 + $0x38] sm:$0xff]
        %v5648 = vld [vmem:[#allocation2 + $0x40] sm:$0xff]
        %v5649 = vld [vmem:[#allocation2 + $0x48] sm:$0xff]
        %v5650 = vld [vmem:[#allocation2 + $0x50] sm:$0xff]
        %v5651 = vld [vmem:[#allocation2 + $0x58] sm:$0xff]
        %v5652 = vld [vmem:[#allocation2 + $0x60] sm:$0xff]
        %v5653 = vld [vmem:[#allocation2 + $0x68] sm:$0xff]
        %v5654 = vld [vmem:[#allocation2 + $0x70] sm:$0xff]
        %v5655 = vld [vmem:[#allocation2 + $0x78] sm:$0xff]
        %v5656 = vld [vmem:[#allocation2 + $0x80] sm:$0xff]
        %v5657 = vld [vmem:[#allocation2 + $0x88] sm:$0xff]
        %v5658 = vadd.f32 %v5640, %v5596
        %v5659 = vadd.f32 %v5641, %v5598
        %v5660 = vadd.f32 %v5642, %v5601
        %v5661 = vadd.f32 %v5643, %v5603
        %v5662 = vadd.f32 %v5644, %v5606
        %v5663 = vadd.f32 %v5645, %v5608
        %v5664 = vadd.f32 %v5646, %v5611
        %v5665 = vadd.f32 %v5647, %v5613
        %v5666 = vadd.f32 %v5648, %v5616
        %v5667 = vadd.f32 %v5649, %v5618
        %v5668 = vadd.f32 %v5650, %v5621
        %v5669 = vadd.f32 %v5651, %v5623
        %v5670 = vadd.f32 %v5652, %v5626
        %v5671 = vadd.f32 %v5653, %v5628
        %v5672 = vadd.f32 %v5654, %v5631
        %v5673 = vadd.f32 %v5655, %v5633
        %v5674 = vadd.f32 %v5656, %v5636
        %v5675 = vadd.f32 %v5657, %v5638
        %5676 = vst [vmem:[#allocation2] sm:$0xff] %v5658
        %5677 = vst [vmem:[#allocation2 + $0x8] sm:$0xff] %v5659
        %5678 = vst [vmem:[#allocation2 + $0x10] sm:$0xff] %v5660
        %5679 = vst [vmem:[#allocation2 + $0x18] sm:$0xff] %v5661
        %5680 = vst [vmem:[#allocation2 + $0x20] sm:$0xff] %v5662
        %5681 = vst [vmem:[#allocation2 + $0x28] sm:$0xff] %v5663
        %5682 = vst [vmem:[#allocation2 + $0x30] sm:$0xff] %v5664
        %5683 = vst [vmem:[#allocation2 + $0x38] sm:$0xff] %v5665
        %5684 = vst [vmem:[#allocation2 + $0x40] sm:$0xff] %v5666
        %5685 = vst [vmem:[#allocation2 + $0x48] sm:$0xff] %v5667
        %5686 = vst [vmem:[#allocation2 + $0x50] sm:$0xff] %v5668
        %5687 = vst [vmem:[#allocation2 + $0x58] sm:$0xff] %v5669
        %5688 = vst [vmem:[#allocation2 + $0x60] sm:$0xff] %v5670
        %5689 = vst [vmem:[#allocation2 + $0x68] sm:$0xff] %v5671
        %5690 = vst [vmem:[#allocation2 + $0x70] sm:$0xff] %v5672
        %5691 = vst [vmem:[#allocation2 + $0x78] sm:$0xff] %v5673
        %5692 = vst [vmem:[#allocation2 + $0x80] sm:$0xff] %v5674
        %5693 = vst [vmem:[#allocation2 + $0x88] sm:$0xff] %v5675
        %v5694 = vld [vmem:[#allocation3 + $0x10] sm:$0xc]
        %v5695 = vld [vmem:[#allocation3 + $0x14] sm:$0xf]
        %v5696 = vld [vmem:[#allocation3 + $0x18] sm:$0xf]
        %v5697 = vld [vmem:[#allocation3 + $0x1c] sm:$0xf]
        %v5698 = vld [vmem:[#allocation3 + $0x20] sm:$0xf]
        %v5699 = vld [vmem:[#allocation3 + $0x24] sm:$0xf]
        %v5700 = vld [vmem:[#allocation3 + $0x28] sm:$0xf]
        %v5701 = vld [vmem:[#allocation3 + $0x2c] sm:$0xf]
        %v5702 = vld [vmem:[#allocation3 + $0x30] sm:$0xf]
        %v5703 = vld [vmem:[#allocation3 + $0x34] sm:$0xf]
        %v5704 = vld [vmem:[#allocation3 + $0x38] sm:$0xf]
        %v5705 = vld [vmem:[#allocation3 + $0x3c] sm:$0xf]
        %v5706 = vld [vmem:[#allocation3 + $0x40] sm:$0xf]
        %v5707 = vld [vmem:[#allocation3 + $0x44] sm:$0xf]
        %v5708 = vld [vmem:[#allocation3 + $0x48] sm:$0xf]
        %v5709 = vld [vmem:[#allocation3 + $0x4c] sm:$0xf]
        %v5710 = vld [vmem:[#allocation3 + $0x50] sm:$0xf]
        %v5711 = vld [vmem:[#allocation3 + $0x54] sm:$0xf]
        %v5712 = vld [vmem:[#allocation3 + $0x58] sm:$0x7]
        %s5713 = scalar_lea.vmem [#allocation9], 448
        %v5714 = vld [vmem:[%s5713] sm:$0xf]
        %v5715 = vld [vmem:[%s5713 + $0x4] sm:$0xf]
        %v5716 = vld [vmem:[%s5713 + $0x8] sm:$0xf]
        %v5717 = vld [vmem:[%s5713 + $0xc] sm:$0xf]
        %v5718 = vld [vmem:[%s5713 + $0x10] sm:$0xf]
        %v5719 = vld [vmem:[%s5713 + $0x14] sm:$0xf]
        %v5720 = vld [vmem:[%s5713 + $0x18] sm:$0xf]
        %v5721 = vld [vmem:[%s5713 + $0x1c] sm:$0xf]
        %v5722 = vld [vmem:[%s5713 + $0x20] sm:$0xf]
        %v5723 = vld [vmem:[%s5713 + $0x24] sm:$0xf]
        %v5724 = vld [vmem:[%s5713 + $0x28] sm:$0xf]
        %v5725 = vld [vmem:[%s5713 + $0x2c] sm:$0xf]
        %v5726 = vld [vmem:[%s5713 + $0x30] sm:$0xf]
        %v5727 = vld [vmem:[%s5713 + $0x34] sm:$0xf]
        %v5728 = vld [vmem:[%s5713 + $0x38] sm:$0xf]
        %v5729 = vld [vmem:[%s5713 + $0x3c] sm:$0xf]
        %v5749 = vunpack.c.l.b16 %v5694
        %v5750 = vunpack.c.l.b16 %v5695
        %v5751 = vunpack.c.l.b16 %v5696
        %v5752 = vunpack.c.l.b16 %v5697
        %v5753 = vunpack.c.l.b16 %v5698
        %v5754 = vunpack.c.l.b16 %v5699
        %v5755 = vunpack.c.l.b16 %v5700
        %v5756 = vunpack.c.l.b16 %v5701
        %v5757 = vunpack.c.l.b16 %v5702
        %v5758 = vunpack.c.l.b16 %v5703
        %v5759 = vunpack.c.l.b16 %v5704
        %v5760 = vunpack.c.l.b16 %v5705
        %v5761 = vunpack.c.l.b16 %v5706
        %v5762 = vunpack.c.l.b16 %v5707
        %v5763 = vunpack.c.l.b16 %v5708
        %v5764 = vunpack.c.l.b16 %v5709
        %v5765 = vunpack.c.l.b16 %v5710
        %v5766 = vunpack.c.l.b16 %v5711
        %v5767 = vunpack.c.l.b16 %v5712
        %v5768 = vpack.c.b16 %v5750, %v5749
        %v5769 = vpack.c.b16 %v5752, %v5751
        %v5770 = vpack.c.b16 %v5754, %v5753
        %v5771 = vpack.c.b16 %v5756, %v5755
        %v5772 = vpack.c.b16 %v5758, %v5757
        %v5773 = vpack.c.b16 %v5760, %v5759
        %v5774 = vpack.c.b16 %v5762, %v5761
        %v5775 = vpack.c.b16 %v5764, %v5763
        %v5776 = vpack.c.b16 %v5766, %v5765
        %v5777 = vpack.c.b16 %v5767, %v5767
        %v5779 = vshrl.u32 %v5768, 16
        %v5781 = vrot.slane %v5779, 2
        %v5782 = vshll.u32 %v5768, 16
        %v5784 = vrot.slane %v5782, 3
        %v5785 = vor.u32 %v5781, %v5784
        %v5787 = vshrl.u32 %v5769, 16
        %v5789 = vrot.slane %v5787, 2
        %v5790 = vshll.u32 %v5769, 16
        %v5792 = vrot.slane %v5790, 3
        %v5793 = vor.u32 %v5789, %v5792
        %v5794 = vsel %vm2815, %v5785, %v5793
        %v5796 = vshrl.u32 %v5770, 16
        %v5798 = vrot.slane %v5796, 2
        %v5799 = vshll.u32 %v5770, 16
        %v5801 = vrot.slane %v5799, 3
        %v5802 = vor.u32 %v5798, %v5801
        %v5803 = vsel %vm2815, %v5793, %v5802
        %v5805 = vshrl.u32 %v5771, 16
        %v5807 = vrot.slane %v5805, 2
        %v5808 = vshll.u32 %v5771, 16
        %v5810 = vrot.slane %v5808, 3
        %v5811 = vor.u32 %v5807, %v5810
        %v5812 = vsel %vm2815, %v5802, %v5811
        %v5814 = vshrl.u32 %v5772, 16
        %v5816 = vrot.slane %v5814, 2
        %v5817 = vshll.u32 %v5772, 16
        %v5819 = vrot.slane %v5817, 3
        %v5820 = vor.u32 %v5816, %v5819
        %v5821 = vsel %vm2815, %v5811, %v5820
        %v5823 = vshrl.u32 %v5773, 16
        %v5825 = vrot.slane %v5823, 2
        %v5826 = vshll.u32 %v5773, 16
        %v5828 = vrot.slane %v5826, 3
        %v5829 = vor.u32 %v5825, %v5828
        %v5830 = vsel %vm2815, %v5820, %v5829
        %v5832 = vshrl.u32 %v5774, 16
        %v5834 = vrot.slane %v5832, 2
        %v5835 = vshll.u32 %v5774, 16
        %v5837 = vrot.slane %v5835, 3
        %v5838 = vor.u32 %v5834, %v5837
        %v5839 = vsel %vm2815, %v5829, %v5838
        %v5841 = vshrl.u32 %v5775, 16
        %v5843 = vrot.slane %v5841, 2
        %v5844 = vshll.u32 %v5775, 16
        %v5846 = vrot.slane %v5844, 3
        %v5847 = vor.u32 %v5843, %v5846
        %v5848 = vsel %vm2815, %v5838, %v5847
        %v5850 = vshrl.u32 %v5776, 16
        %v5852 = vrot.slane %v5850, 2
        %v5853 = vshll.u32 %v5776, 16
        %v5855 = vrot.slane %v5853, 3
        %v5856 = vor.u32 %v5852, %v5855
        %v5857 = vsel %vm2815, %v5847, %v5856
        %v5859 = vshrl.u32 %v5777, 16
        %v5861 = vrot.slane %v5859, 2
        %v5862 = vshll.u32 %v5777, 16
        %v5864 = vrot.slane %v5862, 3
        %v5865 = vor.u32 %v5861, %v5864
        %v5866 = vsel %vm2815, %v5856, %v5865
        %v5892 = vunpack.c.l.b16 %v5714
        %v5893 = vunpack.c.l.b16 %v5715
        %v5894 = vunpack.c.l.b16 %v5716
        %v5895 = vunpack.c.l.b16 %v5717
        %v5896 = vunpack.c.l.b16 %v5718
        %v5897 = vunpack.c.l.b16 %v5719
        %v5898 = vunpack.c.l.b16 %v5720
        %v5899 = vunpack.c.l.b16 %v5721
        %v5900 = vunpack.c.l.b16 %v5722
        %v5901 = vunpack.c.l.b16 %v5723
        %v5902 = vunpack.c.l.b16 %v5724
        %v5903 = vunpack.c.l.b16 %v5725
        %v5904 = vunpack.c.l.b16 %v5726
        %v5905 = vunpack.c.l.b16 %v5727
        %v5906 = vunpack.c.l.b16 %v5728
        %v5907 = vunpack.c.l.b16 %v5729
        %v5908 = vpack.c.b16 %v5893, %v5892
        %v5909 = vpack.c.b16 %v5895, %v5894
        %v5910 = vpack.c.b16 %v5897, %v5896
        %v5911 = vpack.c.b16 %v5899, %v5898
        %v5912 = vpack.c.b16 %v5901, %v5900
        %v5913 = vpack.c.b16 %v5903, %v5902
        %v5914 = vpack.c.b16 %v5905, %v5904
        %v5915 = vpack.c.b16 %v5907, %v5906
        %5924 = vmatpush.bf16.msra.mxu0 %v5915
        %5925 = vmatpush.bf16.msra.mxu0 %v5914
        %5926 = vmatpush.bf16.msra.mxu0 %v5913
        %5927 = vmatpush.bf16.msra.mxu0 %v5912
        %5928 = vmatpush.bf16.msra.mxu0 %v5911
        %5929 = vmatpush.bf16.msra.mxu0 %v5910
        %5930 = vmatpush.bf16.msra.mxu0 %v5909
        %5931 = vmatpush.bf16.msra.mxu0 %v5908
        %5932 = vmatmul.bf16.gmra.mxu0 %v5794
        %v5933 = vpop.f32.mrf.mxu0
        %v5934 = vadd.f32 0.0, %v5933
        %v5935 = vpop.f32.mrf.mxu0
        %v5936 = vadd.f32 0.0, %v5935
        %5937 = vmatmul.bf16.gmra.mxu0 %v5803
        %v5938 = vpop.f32.mrf.mxu0
        %v5939 = vadd.f32 0.0, %v5938
        %v5940 = vpop.f32.mrf.mxu0
        %v5941 = vadd.f32 0.0, %v5940
        %5942 = vmatmul.bf16.gmra.mxu0 %v5812
        %v5943 = vpop.f32.mrf.mxu0
        %v5944 = vadd.f32 0.0, %v5943
        %v5945 = vpop.f32.mrf.mxu0
        %v5946 = vadd.f32 0.0, %v5945
        %5947 = vmatmul.bf16.gmra.mxu0 %v5821
        %v5948 = vpop.f32.mrf.mxu0
        %v5949 = vadd.f32 0.0, %v5948
        %v5950 = vpop.f32.mrf.mxu0
        %v5951 = vadd.f32 0.0, %v5950
        %5952 = vmatmul.bf16.gmra.mxu0 %v5830
        %v5953 = vpop.f32.mrf.mxu0
        %v5954 = vadd.f32 0.0, %v5953
        %v5955 = vpop.f32.mrf.mxu0
        %v5956 = vadd.f32 0.0, %v5955
        %5957 = vmatmul.bf16.gmra.mxu0 %v5839
        %v5958 = vpop.f32.mrf.mxu0
        %v5959 = vadd.f32 0.0, %v5958
        %v5960 = vpop.f32.mrf.mxu0
        %v5961 = vadd.f32 0.0, %v5960
        %5962 = vmatmul.bf16.gmra.mxu0 %v5848
        %v5963 = vpop.f32.mrf.mxu0
        %v5964 = vadd.f32 0.0, %v5963
        %v5965 = vpop.f32.mrf.mxu0
        %v5966 = vadd.f32 0.0, %v5965
        %5967 = vmatmul.bf16.gmra.mxu0 %v5857
        %v5968 = vpop.f32.mrf.mxu0
        %v5969 = vadd.f32 0.0, %v5968
        %v5970 = vpop.f32.mrf.mxu0
        %v5971 = vadd.f32 0.0, %v5970
        %5972 = vmatmul.bf16.gmra.mxu0 %v5866
        %v5973 = vpop.f32.mrf.mxu0
        %v5974 = vadd.f32 0.0, %v5973
        %v5975 = vpop.f32.mrf.mxu0
        %v5976 = vadd.f32 0.0, %v5975
        %5977 = vdwg.mxu0
        %v5978 = vld [vmem:[#allocation2] sm:$0xff]
        %v5979 = vld [vmem:[#allocation2 + $0x8] sm:$0xff]
        %v5980 = vld [vmem:[#allocation2 + $0x10] sm:$0xff]
        %v5981 = vld [vmem:[#allocation2 + $0x18] sm:$0xff]
        %v5982 = vld [vmem:[#allocation2 + $0x20] sm:$0xff]
        %v5983 = vld [vmem:[#allocation2 + $0x28] sm:$0xff]
        %v5984 = vld [vmem:[#allocation2 + $0x30] sm:$0xff]
        %v5985 = vld [vmem:[#allocation2 + $0x38] sm:$0xff]
        %v5986 = vld [vmem:[#allocation2 + $0x40] sm:$0xff]
        %v5987 = vld [vmem:[#allocation2 + $0x48] sm:$0xff]
        %v5988 = vld [vmem:[#allocation2 + $0x50] sm:$0xff]
        %v5989 = vld [vmem:[#allocation2 + $0x58] sm:$0xff]
        %v5990 = vld [vmem:[#allocation2 + $0x60] sm:$0xff]
        %v5991 = vld [vmem:[#allocation2 + $0x68] sm:$0xff]
        %v5992 = vld [vmem:[#allocation2 + $0x70] sm:$0xff]
        %v5993 = vld [vmem:[#allocation2 + $0x78] sm:$0xff]
        %v5994 = vld [vmem:[#allocation2 + $0x80] sm:$0xff]
        %v5995 = vld [vmem:[#allocation2 + $0x88] sm:$0xff]
        %v5996 = vadd.f32 %v5978, %v5934
        %v5997 = vadd.f32 %v5979, %v5936
        %v5998 = vadd.f32 %v5980, %v5939
        %v5999 = vadd.f32 %v5981, %v5941
        %v6000 = vadd.f32 %v5982, %v5944
        %v6001 = vadd.f32 %v5983, %v5946
        %v6002 = vadd.f32 %v5984, %v5949
        %v6003 = vadd.f32 %v5985, %v5951
        %v6004 = vadd.f32 %v5986, %v5954
        %v6005 = vadd.f32 %v5987, %v5956
        %v6006 = vadd.f32 %v5988, %v5959
        %v6007 = vadd.f32 %v5989, %v5961
        %v6008 = vadd.f32 %v5990, %v5964
        %v6009 = vadd.f32 %v5991, %v5966
        %v6010 = vadd.f32 %v5992, %v5969
        %v6011 = vadd.f32 %v5993, %v5971
        %v6012 = vadd.f32 %v5994, %v5974
        %v6013 = vadd.f32 %v5995, %v5976
        %6014 = vst [vmem:[#allocation2] sm:$0xff] %v5996
        %6015 = vst [vmem:[#allocation2 + $0x8] sm:$0xff] %v5997
        %6016 = vst [vmem:[#allocation2 + $0x10] sm:$0xff] %v5998
        %6017 = vst [vmem:[#allocation2 + $0x18] sm:$0xff] %v5999
        %6018 = vst [vmem:[#allocation2 + $0x20] sm:$0xff] %v6000
        %6019 = vst [vmem:[#allocation2 + $0x28] sm:$0xff] %v6001
        %6020 = vst [vmem:[#allocation2 + $0x30] sm:$0xff] %v6002
        %6021 = vst [vmem:[#allocation2 + $0x38] sm:$0xff] %v6003
        %6022 = vst [vmem:[#allocation2 + $0x40] sm:$0xff] %v6004
        %6023 = vst [vmem:[#allocation2 + $0x48] sm:$0xff] %v6005
        %6024 = vst [vmem:[#allocation2 + $0x50] sm:$0xff] %v6006
        %6025 = vst [vmem:[#allocation2 + $0x58] sm:$0xff] %v6007
        %6026 = vst [vmem:[#allocation2 + $0x60] sm:$0xff] %v6008
        %6027 = vst [vmem:[#allocation2 + $0x68] sm:$0xff] %v6009
        %6028 = vst [vmem:[#allocation2 + $0x70] sm:$0xff] %v6010
        %6029 = vst [vmem:[#allocation2 + $0x78] sm:$0xff] %v6011
        %6030 = vst [vmem:[#allocation2 + $0x80] sm:$0xff] %v6012
        %6031 = vst [vmem:[#allocation2 + $0x88] sm:$0xff] %v6013
        %v6032 = vld [vmem:[#allocation3 + $0x10] sm:$0x8]
        %v6033 = vld [vmem:[#allocation3 + $0x14] sm:$0xf]
        %v6034 = vld [vmem:[#allocation3 + $0x18] sm:$0xf]
        %v6035 = vld [vmem:[#allocation3 + $0x1c] sm:$0xf]
        %v6036 = vld [vmem:[#allocation3 + $0x20] sm:$0xf]
        %v6037 = vld [vmem:[#allocation3 + $0x24] sm:$0xf]
        %v6038 = vld [vmem:[#allocation3 + $0x28] sm:$0xf]
        %v6039 = vld [vmem:[#allocation3 + $0x2c] sm:$0xf]
        %v6040 = vld [vmem:[#allocation3 + $0x30] sm:$0xf]
        %v6041 = vld [vmem:[#allocation3 + $0x34] sm:$0xf]
        %v6042 = vld [vmem:[#allocation3 + $0x38] sm:$0xf]
        %v6043 = vld [vmem:[#allocation3 + $0x3c] sm:$0xf]
        %v6044 = vld [vmem:[#allocation3 + $0x40] sm:$0xf]
        %v6045 = vld [vmem:[#allocation3 + $0x44] sm:$0xf]
        %v6046 = vld [vmem:[#allocation3 + $0x48] sm:$0xf]
        %v6047 = vld [vmem:[#allocation3 + $0x4c] sm:$0xf]
        %v6048 = vld [vmem:[#allocation3 + $0x50] sm:$0xf]
        %v6049 = vld [vmem:[#allocation3 + $0x54] sm:$0xf]
        %v6050 = vld [vmem:[#allocation3 + $0x58] sm:$0x7]
        %s6051 = scalar_lea.vmem [#allocation9], 512
        %v6052 = vld [vmem:[%s6051] sm:$0xf]
        %v6053 = vld [vmem:[%s6051 + $0x4] sm:$0xf]
        %v6054 = vld [vmem:[%s6051 + $0x8] sm:$0xf]
        %v6055 = vld [vmem:[%s6051 + $0xc] sm:$0xf]
        %v6056 = vld [vmem:[%s6051 + $0x10] sm:$0xf]
        %v6057 = vld [vmem:[%s6051 + $0x14] sm:$0xf]
        %v6058 = vld [vmem:[%s6051 + $0x18] sm:$0xf]
        %v6059 = vld [vmem:[%s6051 + $0x1c] sm:$0xf]
        %v6060 = vld [vmem:[%s6051 + $0x20] sm:$0xf]
        %v6061 = vld [vmem:[%s6051 + $0x24] sm:$0xf]
        %v6062 = vld [vmem:[%s6051 + $0x28] sm:$0xf]
        %v6063 = vld [vmem:[%s6051 + $0x2c] sm:$0xf]
        %v6064 = vld [vmem:[%s6051 + $0x30] sm:$0xf]
        %v6065 = vld [vmem:[%s6051 + $0x34] sm:$0xf]
        %v6066 = vld [vmem:[%s6051 + $0x38] sm:$0xf]
        %v6067 = vld [vmem:[%s6051 + $0x3c] sm:$0xf]
        %v6087 = vunpack.c.l.b16 %v6032
        %v6088 = vunpack.c.l.b16 %v6033
        %v6089 = vunpack.c.l.b16 %v6034
        %v6090 = vunpack.c.l.b16 %v6035
        %v6091 = vunpack.c.l.b16 %v6036
        %v6092 = vunpack.c.l.b16 %v6037
        %v6093 = vunpack.c.l.b16 %v6038
        %v6094 = vunpack.c.l.b16 %v6039
        %v6095 = vunpack.c.l.b16 %v6040
        %v6096 = vunpack.c.l.b16 %v6041
        %v6097 = vunpack.c.l.b16 %v6042
        %v6098 = vunpack.c.l.b16 %v6043
        %v6099 = vunpack.c.l.b16 %v6044
        %v6100 = vunpack.c.l.b16 %v6045
        %v6101 = vunpack.c.l.b16 %v6046
        %v6102 = vunpack.c.l.b16 %v6047
        %v6103 = vunpack.c.l.b16 %v6048
        %v6104 = vunpack.c.l.b16 %v6049
        %v6105 = vunpack.c.l.b16 %v6050
        %v6106 = vpack.c.b16 %v6088, %v6087
        %v6107 = vpack.c.b16 %v6090, %v6089
        %v6108 = vpack.c.b16 %v6092, %v6091
        %v6109 = vpack.c.b16 %v6094, %v6093
        %v6110 = vpack.c.b16 %v6096, %v6095
        %v6111 = vpack.c.b16 %v6098, %v6097
        %v6112 = vpack.c.b16 %v6100, %v6099
        %v6113 = vpack.c.b16 %v6102, %v6101
        %v6114 = vpack.c.b16 %v6104, %v6103
        %v6115 = vpack.c.b16 %v6105, %v6105
        %v6116 = vrot.slane %v6106, 3
        %v6117 = vrot.slane %v6107, 3
        %v6118 = vsel %vm3221, %v6116, %v6117
        %v6119 = vrot.slane %v6108, 3
        %v6120 = vsel %vm3221, %v6117, %v6119
        %v6121 = vrot.slane %v6109, 3
        %v6122 = vsel %vm3221, %v6119, %v6121
        %v6123 = vrot.slane %v6110, 3
        %v6124 = vsel %vm3221, %v6121, %v6123
        %v6125 = vrot.slane %v6111, 3
        %v6126 = vsel %vm3221, %v6123, %v6125
        %v6127 = vrot.slane %v6112, 3
        %v6128 = vsel %vm3221, %v6125, %v6127
        %v6129 = vrot.slane %v6113, 3
        %v6130 = vsel %vm3221, %v6127, %v6129
        %v6131 = vrot.slane %v6114, 3
        %v6132 = vsel %vm3221, %v6129, %v6131
        %v6133 = vrot.slane %v6115, 3
        %v6134 = vsel %vm3221, %v6131, %v6133
        %v6160 = vunpack.c.l.b16 %v6052
        %v6161 = vunpack.c.l.b16 %v6053
        %v6162 = vunpack.c.l.b16 %v6054
        %v6163 = vunpack.c.l.b16 %v6055
        %v6164 = vunpack.c.l.b16 %v6056
        %v6165 = vunpack.c.l.b16 %v6057
        %v6166 = vunpack.c.l.b16 %v6058
        %v6167 = vunpack.c.l.b16 %v6059
        %v6168 = vunpack.c.l.b16 %v6060
        %v6169 = vunpack.c.l.b16 %v6061
        %v6170 = vunpack.c.l.b16 %v6062
        %v6171 = vunpack.c.l.b16 %v6063
        %v6172 = vunpack.c.l.b16 %v6064
        %v6173 = vunpack.c.l.b16 %v6065
        %v6174 = vunpack.c.l.b16 %v6066
        %v6175 = vunpack.c.l.b16 %v6067
        %v6176 = vpack.c.b16 %v6161, %v6160
        %v6177 = vpack.c.b16 %v6163, %v6162
        %v6178 = vpack.c.b16 %v6165, %v6164
        %v6179 = vpack.c.b16 %v6167, %v6166
        %v6180 = vpack.c.b16 %v6169, %v6168
        %v6181 = vpack.c.b16 %v6171, %v6170
        %v6182 = vpack.c.b16 %v6173, %v6172
        %v6183 = vpack.c.b16 %v6175, %v6174
        %6192 = vmatpush.bf16.msra.mxu0 %v6183
        %6193 = vmatpush.bf16.msra.mxu0 %v6182
        %6194 = vmatpush.bf16.msra.mxu0 %v6181
        %6195 = vmatpush.bf16.msra.mxu0 %v6180
        %6196 = vmatpush.bf16.msra.mxu0 %v6179
        %6197 = vmatpush.bf16.msra.mxu0 %v6178
        %6198 = vmatpush.bf16.msra.mxu0 %v6177
        %6199 = vmatpush.bf16.msra.mxu0 %v6176
        %6200 = vmatmul.bf16.gmra.mxu0 %v6118
        %v6201 = vpop.f32.mrf.mxu0
        %v6202 = vadd.f32 0.0, %v6201
        %v6203 = vpop.f32.mrf.mxu0
        %v6204 = vadd.f32 0.0, %v6203
        %6205 = vmatmul.bf16.gmra.mxu0 %v6120
        %v6206 = vpop.f32.mrf.mxu0
        %v6207 = vadd.f32 0.0, %v6206
        %v6208 = vpop.f32.mrf.mxu0
        %v6209 = vadd.f32 0.0, %v6208
        %6210 = vmatmul.bf16.gmra.mxu0 %v6122
        %v6211 = vpop.f32.mrf.mxu0
        %v6212 = vadd.f32 0.0, %v6211
        %v6213 = vpop.f32.mrf.mxu0
        %v6214 = vadd.f32 0.0, %v6213
        %6215 = vmatmul.bf16.gmra.mxu0 %v6124
        %v6216 = vpop.f32.mrf.mxu0
        %v6217 = vadd.f32 0.0, %v6216
        %v6218 = vpop.f32.mrf.mxu0
        %v6219 = vadd.f32 0.0, %v6218
        %6220 = vmatmul.bf16.gmra.mxu0 %v6126
        %v6221 = vpop.f32.mrf.mxu0
        %v6222 = vadd.f32 0.0, %v6221
        %v6223 = vpop.f32.mrf.mxu0
        %v6224 = vadd.f32 0.0, %v6223
        %6225 = vmatmul.bf16.gmra.mxu0 %v6128
        %v6226 = vpop.f32.mrf.mxu0
        %v6227 = vadd.f32 0.0, %v6226
        %v6228 = vpop.f32.mrf.mxu0
        %v6229 = vadd.f32 0.0, %v6228
        %6230 = vmatmul.bf16.gmra.mxu0 %v6130
        %v6231 = vpop.f32.mrf.mxu0
        %v6232 = vadd.f32 0.0, %v6231
        %v6233 = vpop.f32.mrf.mxu0
        %v6234 = vadd.f32 0.0, %v6233
        %6235 = vmatmul.bf16.gmra.mxu0 %v6132
        %v6236 = vpop.f32.mrf.mxu0
        %v6237 = vadd.f32 0.0, %v6236
        %v6238 = vpop.f32.mrf.mxu0
        %v6239 = vadd.f32 0.0, %v6238
        %6240 = vmatmul.bf16.gmra.mxu0 %v6134
        %v6241 = vpop.f32.mrf.mxu0
        %v6242 = vadd.f32 0.0, %v6241
        %v6243 = vpop.f32.mrf.mxu0
        %v6244 = vadd.f32 0.0, %v6243
        %6245 = vdwg.mxu0
        %v6246 = vld [vmem:[#allocation2] sm:$0xff]
        %v6247 = vld [vmem:[#allocation2 + $0x8] sm:$0xff]
        %v6248 = vld [vmem:[#allocation2 + $0x10] sm:$0xff]
        %v6249 = vld [vmem:[#allocation2 + $0x18] sm:$0xff]
        %v6250 = vld [vmem:[#allocation2 + $0x20] sm:$0xff]
        %v6251 = vld [vmem:[#allocation2 + $0x28] sm:$0xff]
        %v6252 = vld [vmem:[#allocation2 + $0x30] sm:$0xff]
        %v6253 = vld [vmem:[#allocation2 + $0x38] sm:$0xff]
        %v6254 = vld [vmem:[#allocation2 + $0x40] sm:$0xff]
        %v6255 = vld [vmem:[#allocation2 + $0x48] sm:$0xff]
        %v6256 = vld [vmem:[#allocation2 + $0x50] sm:$0xff]
        %v6257 = vld [vmem:[#allocation2 + $0x58] sm:$0xff]
        %v6258 = vld [vmem:[#allocation2 + $0x60] sm:$0xff]
        %v6259 = vld [vmem:[#allocation2 + $0x68] sm:$0xff]
        %v6260 = vld [vmem:[#allocation2 + $0x70] sm:$0xff]
        %v6261 = vld [vmem:[#allocation2 + $0x78] sm:$0xff]
        %v6262 = vld [vmem:[#allocation2 + $0x80] sm:$0xff]
        %v6263 = vld [vmem:[#allocation2 + $0x88] sm:$0xff]
        %v6264 = vadd.f32 %v6246, %v6202
        %v6265 = vadd.f32 %v6247, %v6204
        %v6266 = vadd.f32 %v6248, %v6207
        %v6267 = vadd.f32 %v6249, %v6209
        %v6268 = vadd.f32 %v6250, %v6212
        %v6269 = vadd.f32 %v6251, %v6214
        %v6270 = vadd.f32 %v6252, %v6217
        %v6271 = vadd.f32 %v6253, %v6219
        %v6272 = vadd.f32 %v6254, %v6222
        %v6273 = vadd.f32 %v6255, %v6224
        %v6274 = vadd.f32 %v6256, %v6227
        %v6275 = vadd.f32 %v6257, %v6229
        %v6276 = vadd.f32 %v6258, %v6232
        %v6277 = vadd.f32 %v6259, %v6234
        %v6278 = vadd.f32 %v6260, %v6237
        %v6279 = vadd.f32 %v6261, %v6239
        %v6280 = vadd.f32 %v6262, %v6242
        %v6281 = vadd.f32 %v6263, %v6244
        %6282 = vst [vmem:[#allocation2] sm:$0xff] %v6264
        %6283 = vst [vmem:[#allocation2 + $0x8] sm:$0xff] %v6265
        %6284 = vst [vmem:[#allocation2 + $0x10] sm:$0xff] %v6266
        %6285 = vst [vmem:[#allocation2 + $0x18] sm:$0xff] %v6267
        %6286 = vst [vmem:[#allocation2 + $0x20] sm:$0xff] %v6268
        %6287 = vst [vmem:[#allocation2 + $0x28] sm:$0xff] %v6269
        %6288 = vst [vmem:[#allocation2 + $0x30] sm:$0xff] %v6270
        %6289 = vst [vmem:[#allocation2 + $0x38] sm:$0xff] %v6271
        %6290 = vst [vmem:[#allocation2 + $0x40] sm:$0xff] %v6272
        %6291 = vst [vmem:[#allocation2 + $0x48] sm:$0xff] %v6273
        %6292 = vst [vmem:[#allocation2 + $0x50] sm:$0xff] %v6274
        %6293 = vst [vmem:[#allocation2 + $0x58] sm:$0xff] %v6275
        %6294 = vst [vmem:[#allocation2 + $0x60] sm:$0xff] %v6276
        %6295 = vst [vmem:[#allocation2 + $0x68] sm:$0xff] %v6277
        %6296 = vst [vmem:[#allocation2 + $0x70] sm:$0xff] %v6278
        %6297 = vst [vmem:[#allocation2 + $0x78] sm:$0xff] %v6279
        %6298 = vst [vmem:[#allocation2 + $0x80] sm:$0xff] %v6280
        %6299 = vst [vmem:[#allocation2 + $0x88] sm:$0xff] %v6281
        %v6300 = vld [vmem:[#allocation2] sm:$0xff]
        %v6301 = vld [vmem:[#allocation2 + $0x8] sm:$0xff]
        %v6302 = vld [vmem:[#allocation2 + $0x10] sm:$0xff]
        %v6303 = vld [vmem:[#allocation2 + $0x18] sm:$0xff]
        %v6304 = vld [vmem:[#allocation2 + $0x20] sm:$0xff]
        %v6305 = vld [vmem:[#allocation2 + $0x28] sm:$0xff]
        %v6306 = vld [vmem:[#allocation2 + $0x30] sm:$0xff]
        %v6307 = vld [vmem:[#allocation2 + $0x38] sm:$0xff]
        %v6308 = vld [vmem:[#allocation2 + $0x40] sm:$0xff]
        %v6309 = vld [vmem:[#allocation2 + $0x48] sm:$0xff]
        %v6310 = vld [vmem:[#allocation2 + $0x50] sm:$0xff]
        %v6311 = vld [vmem:[#allocation2 + $0x58] sm:$0xff]
        %v6312 = vld [vmem:[#allocation2 + $0x60] sm:$0xff]
        %v6313 = vld [vmem:[#allocation2 + $0x68] sm:$0xff]
        %v6314 = vld [vmem:[#allocation2 + $0x70] sm:$0xff]
        %v6315 = vld [vmem:[#allocation2 + $0x78] sm:$0xff]
        %v6316 = vld [vmem:[#allocation2 + $0x80] sm:$0xff]
        %v6317 = vld [vmem:[#allocation2 + $0x88] sm:$0xff]
        %v6318 = vld [vmem:[%s6] sm:$0x1]
        %v6320 = vperm.slane %v6318, 0
        %v6322 = vmul.f32 %v6300, %v6320
        %v6323 = vmul.f32 %v6301, %v6320
        %v6324 = vmul.f32 %v6302, %v6320
        %v6325 = vmul.f32 %v6303, %v6320
        %v6326 = vmul.f32 %v6304, %v6320
        %v6327 = vmul.f32 %v6305, %v6320
        %v6328 = vmul.f32 %v6306, %v6320
        %v6329 = vmul.f32 %v6307, %v6320
        %v6330 = vmul.f32 %v6308, %v6320
        %v6331 = vmul.f32 %v6309, %v6320
        %v6332 = vmul.f32 %v6310, %v6320
        %v6333 = vmul.f32 %v6311, %v6320
        %v6334 = vmul.f32 %v6312, %v6320
        %v6335 = vmul.f32 %v6313, %v6320
        %v6336 = vmul.f32 %v6314, %v6320
        %v6337 = vmul.f32 %v6315, %v6320
        %v6338 = vmul.f32 %v6316, %v6320
        %v6339 = vmul.f32 %v6317, %v6320
        %v6340 = vld [vmem:[%s7] sm:$0x1]
        %v6342 = vperm.slane %v6340, 0
        %v6344 = vadd.f32 %v6322, %v6342
        %v6345 = vadd.f32 %v6323, %v6342
        %v6346 = vadd.f32 %v6324, %v6342
        %v6347 = vadd.f32 %v6325, %v6342
        %v6348 = vadd.f32 %v6326, %v6342
        %v6349 = vadd.f32 %v6327, %v6342
        %v6350 = vadd.f32 %v6328, %v6342
        %v6351 = vadd.f32 %v6329, %v6342
        %v6352 = vadd.f32 %v6330, %v6342
        %v6353 = vadd.f32 %v6331, %v6342
        %v6354 = vadd.f32 %v6332, %v6342
        %v6355 = vadd.f32 %v6333, %v6342
        %v6356 = vadd.f32 %v6334, %v6342
        %v6357 = vadd.f32 %v6335, %v6342
        %v6358 = vadd.f32 %v6336, %v6342
        %v6359 = vadd.f32 %v6337, %v6342
        %v6360 = vadd.f32 %v6338, %v6342
        %v6361 = vadd.f32 %v6339, %v6342
        %v6362 = vmax.f32 %v6344, 0.0
        %v6363 = vmax.f32 %v6345, 0.0
        %v6364 = vmax.f32 %v6346, 0.0
        %v6365 = vmax.f32 %v6347, 0.0
        %v6366 = vmax.f32 %v6348, 0.0
        %v6367 = vmax.f32 %v6349, 0.0
        %v6368 = vmax.f32 %v6350, 0.0
        %v6369 = vmax.f32 %v6351, 0.0
        %v6370 = vmax.f32 %v6352, 0.0
        %v6371 = vmax.f32 %v6353, 0.0
        %v6372 = vmax.f32 %v6354, 0.0
        %v6373 = vmax.f32 %v6355, 0.0
        %v6374 = vmax.f32 %v6356, 0.0
        %v6375 = vmax.f32 %v6357, 0.0
        %v6376 = vmax.f32 %v6358, 0.0
        %v6377 = vmax.f32 %v6359, 0.0
        %v6378 = vmax.f32 %v6360, 0.0
        %v6379 = vmax.f32 %v6361, 0.0
        %6380 = vst [vmem:[%s391] sm:$0xff] %v6362
        %6381 = vst [vmem:[%s391 + $0x8] sm:$0xff] %v6363
        %6382 = vst [vmem:[%s391 + $0x10] sm:$0xff] %v6364
        %6383 = vst [vmem:[%s391 + $0x18] sm:$0xff] %v6365
        %6384 = vst [vmem:[%s391 + $0x20] sm:$0xff] %v6366
        %6385 = vst [vmem:[%s391 + $0x28] sm:$0xff] %v6367
        %6386 = vst [vmem:[%s391 + $0x30] sm:$0xff] %v6368
        %6387 = vst [vmem:[%s391 + $0x38] sm:$0xff] %v6369
        %6388 = vst [vmem:[%s391 + $0x40] sm:$0xff] %v6370
        %6389 = vst [vmem:[%s391 + $0x48] sm:$0xff] %v6371
        %6390 = vst [vmem:[%s391 + $0x50] sm:$0xff] %v6372
        %6391 = vst [vmem:[%s391 + $0x58] sm:$0xff] %v6373
        %6392 = vst [vmem:[%s391 + $0x60] sm:$0xff] %v6374
        %6393 = vst [vmem:[%s391 + $0x68] sm:$0xff] %v6375
        %6394 = vst [vmem:[%s391 + $0x70] sm:$0xff] %v6376
        %6395 = vst [vmem:[%s391 + $0x78] sm:$0xff] %v6377
        %6396 = vst [vmem:[%s391 + $0x80] sm:$0xff] %v6378
        %6397 = vst [vmem:[%s391 + $0x88] sm:$0xff] %v6379
        %s6398 = sand.u32 %s228, 1
        %s6399 = scalar_lea.sflag [#allocation6], %s6398
        %s6400 = sand.u32 %s228, 1
        %s6401 = smul.addr %s6400, 144
        %s6402 = scalar_lea.vmem [#allocation10], %s6401
        // Predicated region
        $region65: #{tpu_custom_call.1} parent=51 // pred_check
          %p6403 = pneg %p238
        $region66: #{tpu_custom_call.1} parent=51 // pred_check_branch
          %6405 = sbr.rel (%p6403) target = $region68
        $region67: #{tpu_custom_call.1} parent=51 // pred_region
          %6407 = vsyncadd %s6399, 0
          %s6408 = smul.addr %s31, 18
          %s6409 = smul.addr %s30, 36
          %s6410 = sadd.s32 %s6408, %s6409
          %s6411 = smul.addr %s6410, 8
          %s6412 = scalar_lea.hbm %s8, %s6411
          %s6413 = sshll.u32 %s6402, 4
          %s6414 = int_to_ptr.vmem [resolvable:$true] %s6413
          %s6415 = sshll.u32 %s6412, 4
          %s6416 = int_to_ptr.hbm [resolvable:$true] %s6415
          %6421 = dma.vmem_to_hbm [thread:$0]  %s6414, 2304, %s6416, %s6399, 128, 128, 8
        $region68: #{tpu_custom_call.1} parent=51 // pred_fallthru
          _
      $region52: #{tpu_custom_call.1} parent=5 // pred_fallthru
        _
      %p6422 = scmp.le.s32.totalorder 2, %s21
      // Predicated region
      $region69: #{tpu_custom_call.1} parent=5 // pred_check
        %p6423 = pneg %p6422
      $region70: #{tpu_custom_call.1} parent=5 // pred_check_branch
        %6425 = sbr.rel (%p6423) target = $region72
      $region71: #{tpu_custom_call.1} parent=5 // pred_region
        %s6426 = ssub.s32 %s21, 2
        // Predicated region
        $region73: #{tpu_custom_call.1} parent=71 // pred_check
          %p6427 = pneg %p244
        $region74: #{tpu_custom_call.1} parent=71 // pred_check_branch
          %6429 = sbr.rel (%p6427) target = $region76
        $region75: #{tpu_custom_call.1} parent=71 // pred_region
          %s6430 = sand.u32 %s229, 1
          %s6431 = scalar_lea.sflag [#allocation6], %s6430
          %s6432 = sand.u32 %s229, 1
          %s6433 = smul.addr %s6432, 144
          %s6434 = scalar_lea.vmem [#allocation10], %s6433
          %6436 = dma.done %s6431, 2304
        $region76: #{tpu_custom_call.1} parent=71 // pred_fallthru
          _
      $region72: #{tpu_custom_call.1} parent=5 // pred_fallthru
        _
    $region6: #{tpu_custom_call.1} parent=1 // loop_footer
      %s25 = sadd.s32 1, %s21
    $region7: #{tpu_custom_call.1} parent=1 // loop_footer_branch
      %20 = sbr.rel target = $region3
    $region8: #{tpu_custom_call.1} parent=1 // loop_exit
      _
    %6437 = vsyncpa [#allocation5], 1
    %s6438 = scalar_lea.sflag [#allocation5], 1
    %6439 = vsyncpa %s6438, 1
    %6440 = vsyncpa [#allocation8], 1
    %6441 = vsyncpa [#allocation6], 1
    %s6442 = scalar_lea.sflag [#allocation6], 1
    %6443 = vsyncpa %s6442, 1

</llo_original>
